<compile_context>
chip_gen: v6e
topology: v6e:2x2x1
jax: 0.10.0
libtpu: 0.0.40
codegen_flags: <defaults>
</compile_context>

<pallas_src>
import math

import jax
import jax.numpy as jnp
import numpy as np
from jax.experimental import pallas as pl
from jax.experimental.pallas import tpu as pltpu


def _round_up(a, m):
    return ((a + m - 1) // m) * m


# ----------------------------------------------------------------------------
# Pallas kernel: full IAF chain for one (D, TB) batch tile.
#   xT_ref : (D, TB)           input tile, batch on the lane axis
#   w1_ref : (L, 2M, D)        fused/transposed layer-1 weights (f32 or bf16)
#   b1_ref : (L, 2M, 1)        biases (always f32)
#   w2_ref : (L, 2M, 2M)       block-diagonal layer-2 weights (transposed)
#   b2_ref : (L, 2M, 1)
#   w3_ref : (L, 2D, 2M)       block-diagonal layer-3 weights (transposed)
#   b3_ref : (L, 2D, 1)
#   zT_out : (D, TB)
#   ldj_out: (1, TB)
# ----------------------------------------------------------------------------
def _iaf_flow_kernel(xT_ref, w1_ref, b1_ref, w2_ref, b2_ref, w3_ref, b3_ref,
                     zT_out, ldj_out):
    L = w1_ref.shape[0]
    D = xT_ref.shape[0]
    wdt = w1_ref.dtype                      # matmul operand dtype (f32 or bf16)

    z = xT_ref[...].astype(jnp.float32)     # (D, TB)
    ldj = jnp.zeros((1, z.shape[1]), jnp.float32)   # (1, TB) row accumulator

    def leaky(v):                           # nn.LeakyReLU, slope 0.01
        return jnp.where(v > 0, v, 0.01 * v)

    # Static unroll over the 2*N_layers IAF blocks (serial dependence, L = 6).
    for l in range(L):
        h = leaky(jnp.dot(w1_ref[l], z.astype(wdt),
                          preferred_element_type=jnp.float32) + b1_ref[l])
        h = leaky(jnp.dot(w2_ref[l], h.astype(wdt),
                          preferred_element_type=jnp.float32) + b2_ref[l])
        o = (jnp.dot(w3_ref[l], h.astype(wdt),
                     preferred_element_type=jnp.float32) + b3_ref[l])
        mu = o[:D, :]
        log_sigma = jnp.clip(o[D:, :], -5.0, 5.0)
        z = jnp.exp(log_sigma) * z + mu
        # Narrow per-block reduce (XLU) instead of a full-width accumulator.
        ldj = ldj + jnp.sum(log_sigma, axis=0, keepdims=True)

    zT_out[...] = z.astype(zT_out.dtype)
    ldj_out[...] = ldj


def flow_iaf_f(x, fused_params, *, block_b=512):
    """Pallas implementation of Flow_IAF.f (batch_norm=False branch).

    x: (B, D) float32
    fused_params: dict from fuse_flow_iaf_params().
    Returns (z, log_det_J) with shapes (B, D) and (B,), float32.
    """
    B, D = x.shape

    # Lane-multiple batch tile; pad batch so the grid divides evenly.
    TB = _round_up(min(int(block_b), _round_up(B, 128)), 128)
    Bp = _round_up(B, TB)

    x32 = jnp.asarray(x, jnp.float32)
    if Bp != B:
        x32 = jnp.pad(x32, ((0, Bp - B), (0, 0)))
    xT = x32.T                               # (D, Bp): batch -> lane axis

    def resident(arr):                       # weights stay in VMEM across steps
        shp = arr.shape
        return pl.BlockSpec(shp, lambda *_: (0,) * len(shp))

    zT, ldj = pl.pallas_call(
        _iaf_flow_kernel,
        out_shape=(
            jax.ShapeDtypeStruct((D, Bp), jnp.float32),
            jax.ShapeDtypeStruct((1, Bp), jnp.float32),
        ),
        grid=(Bp // TB,),
        in_specs=[
            pl.BlockSpec((D, TB), lambda i: (0, i)),
            resident(fused_params["w1"]),
            resident(fused_params["b1"]),
            resident(fused_params["w2"]),
            resident(fused_params["b2"]),
            resident(fused_params["w3"]),
            resident(fused_params["b3"]),
        ],
        out_specs=(
            pl.BlockSpec((D, TB), lambda i: (0, i)),
            pl.BlockSpec((1, TB), lambda i: (0, i)),
        ),
        compiler_params=pltpu.CompilerParams(
            dimension_semantics=("parallel",)),
    )(
        xT,
        fused_params["w1"], fused_params["b1"],
        fused_params["w2"], fused_params["b2"],
        fused_params["w3"], fused_params["b3"],
    )
    return zT[:, :B].T, ldj[0, :B]


# ----------------------------------------------------------------------------
# Deterministic parameter construction (mirrors the PyTorch __init__ shapes).
# ----------------------------------------------------------------------------
def _xavier_normal(key, shape):
    fan_in, fan_out = shape
    std = math.sqrt(2.0 / (fan_in + fan_out))
    return std * jax.random.normal(key, shape, dtype=jnp.float32)


def _bias_uniform(key, out_size):
    stdv = 1.0 / math.sqrt(out_size)
    return jax.random.uniform(key, (out_size,), jnp.float32, -stdv, stdv)


def make_flow_iaf_raw_params(key, in_dim, dim_middle, n_layers=3):
    """Stacked per-block masked weights, mirroring the PyTorch module layout."""
    L = 2 * n_layers
    keys = jax.random.split(key, L * 12)
    kit = iter(keys)

    stacks = {name: [] for name in
              ["wm1", "bm1", "wm2", "bm2", "wm3", "bm3",
               "ws1", "bs1", "ws2", "bs2", "ws3", "bs3"]}
    shapes = [(in_dim, dim_middle), (dim_middle, dim_middle),
              (dim_middle, in_dim)]

    for blk in range(L):
        low = bool(blk % 2)  # Low = i % 2 (even -> triu(1), odd -> tril(-1))
        mask = (lambda w: jnp.tril(w, -1)) if low else (lambda w: jnp.triu(w, 1))
        for net in ("m", "s"):
            for layer_idx, (din, dout) in enumerate(shapes, start=1):
                w = _xavier_normal(next(kit), (din, dout))
                b = _bias_uniform(next(kit), dout)
                # Masking happens at every PyTorch forward call; it is
                # parameter-only glue, so precompute it here.
                stacks[f"w{net}{layer_idx}"].append(mask(w))
                stacks[f"b{net}{layer_idx}"].append(b)

    return {k: jnp.stack(v, axis=0) for k, v in stacks.items()}


def _block_diag(a, b):
    za = jnp.zeros((a.shape[0], b.shape[1]), a.dtype)
    zb = jnp.zeros((b.shape[0], a.shape[1]), b.dtype)
    top = jnp.concatenate([a, za], axis=1)
    bot = jnp.concatenate([zb, b], axis=1)
    return jnp.concatenate([top, bot], axis=0)


def fuse_flow_iaf_params(raw, weight_dtype=jnp.float32):
    """Fuse the mu / log_sigma MLPs into one block-diagonal chain and transpose
    every weight to (out, in) so the kernel computes W @ z with the batch on
    the lane axis.  One-time parameter-only glue.  `weight_dtype=bfloat16`
    selects native-bf16 MXU operands (v6e/v7x); biases stay f32."""
    L = raw["wm1"].shape[0]
    w1, b1, w2, b2, w3, b3 = [], [], [], [], [], []
    for l in range(L):
        w1.append(jnp.concatenate([raw["wm1"][l], raw["ws1"][l]], axis=1).T)
        b1.append(jnp.concatenate([raw["bm1"][l], raw["bs1"][l]])[:, None])
        w2.append(_block_diag(raw["wm2"][l], raw["ws2"][l]).T)
        b2.append(jnp.concatenate([raw["bm2"][l], raw["bs2"][l]])[:, None])
        w3.append(_block_diag(raw["wm3"][l], raw["ws3"][l]).T)
        b3.append(jnp.concatenate([raw["bm3"][l], raw["bs3"][l]])[:, None])
    return {"w1": jnp.stack(w1).astype(weight_dtype), "b1": jnp.stack(b1),
            "w2": jnp.stack(w2).astype(weight_dtype), "b2": jnp.stack(b2),
            "w3": jnp.stack(w3).astype(weight_dtype), "b3": jnp.stack(b3)}


# ----------------------------------------------------------------------------
# Pure-JAX reference of Flow_IAF.f (batch_norm=False, un-fused) for validation.
# `matmul_dtype` mirrors the kernel's matmul-operand dtype so the bf16 path can
# be checked against a matching-precision reference.
# ----------------------------------------------------------------------------
def flow_iaf_f_ref(x, raw, matmul_dtype=jnp.float32):
    L = raw["wm1"].shape[0]
    z = x.astype(jnp.float32)
    ldj = jnp.zeros((x.shape[0],), jnp.float32)

    def leaky(v):
        return jnp.where(v > 0, v, 0.01 * v)

    def mm(a, w):
        return jnp.dot(a.astype(matmul_dtype), w.astype(matmul_dtype),
                       preferred_element_type=jnp.float32)

    for l in range(L):
        def mlp(net, zin):
            h = leaky(mm(zin, raw[f"w{net}1"][l]) + raw[f"b{net}1"][l])
            h = leaky(mm(h, raw[f"w{net}2"][l]) + raw[f"b{net}2"][l])
            return mm(h, raw[f"w{net}3"][l]) + raw[f"b{net}3"][l]

        mu = mlp("m", z)
        log_sigma = jnp.clip(mlp("s", z), -5.0, 5.0)
        z = jnp.exp(log_sigma) * z + mu
        ldj = ldj + jnp.sum(log_sigma, axis=-1)
    return z, ldj


if __name__ == "__main__":
    B = 8          # batch (padded to 128 lanes inside the wrapper)
    D = 16         # in_dim  (flow feature dimension)
    M = 32         # dim_middle
    N_LAYERS = 3   # -> 2*N_layers = 6 IAF blocks

    key = jax.random.PRNGKey(0)
    k_params, k_x = jax.random.split(key)

    raw_params = make_flow_iaf_raw_params(k_params, D, M, N_LAYERS)
    x = jax.random.normal(k_x, (B, D), dtype=jnp.float32)

    # --- f32-weight path: exact check against the pure-JAX reference --------
    fused_f32 = fuse_flow_iaf_params(raw_params, weight_dtype=jnp.float32)
    z32, ldj32 = jax.jit(flow_iaf_f)(x, fused_f32)
    jax.block_until_ready((z32, ldj32))

    z_ref, ldj_ref = flow_iaf_f_ref(x, raw_params)
    np.testing.assert_allclose(np.asarray(z32), np.asarray(z_ref),
                               rtol=1e-4, atol=1e-4)
    np.testing.assert_allclose(np.asarray(ldj32), np.asarray(ldj_ref),
                               rtol=1e-4, atol=1e-4)

    # --- bf16-weight path (v6e/v7x MXU win): check vs matching-precision ref
    fused_bf16 = fuse_flow_iaf_params(raw_params, weight_dtype=jnp.bfloat16)
    zb, ldjb = jax.jit(flow_iaf_f)(x, fused_bf16)
    jax.block_until_ready((zb, ldjb))

    zb_ref, ldjb_ref = flow_iaf_f_ref(x, raw_params, matmul_dtype=jnp.bfloat16)
    np.testing.assert_allclose(np.asarray(zb), np.asarray(zb_ref),
                               rtol=1e-2, atol=1e-2)
    np.testing.assert_allclose(np.asarray(ldjb), np.asarray(ldjb_ref),
                               rtol=1e-2, atol=1e-2)

    print("KERNEL_OK")
</pallas_src>

<mosaic_0001>
module attributes {stable_mosaic.version = 11 : i64} {
  func.func @_iaf_flow_kernel(%arg0: i32, %arg1: memref<16x128xf32, #tpu.memory_space<vmem>>, %arg2: memref<6x64x16xf32, #tpu.memory_space<vmem>>, %arg3: memref<6x64x1xf32, #tpu.memory_space<vmem>>, %arg4: memref<6x64x64xf32, #tpu.memory_space<vmem>>, %arg5: memref<6x64x1xf32, #tpu.memory_space<vmem>>, %arg6: memref<6x32x64xf32, #tpu.memory_space<vmem>>, %arg7: memref<6x32x1xf32, #tpu.memory_space<vmem>>, %arg8: memref<16x128xf32, #tpu.memory_space<vmem>>, %arg9: memref<1x128xf32, #tpu.memory_space<vmem>>) attributes {dimension_semantics = [#tpu.dimension_semantics<parallel>], iteration_bounds = array<i64: 1>, scalar_prefetch = 0 : i64, scratch_operands = 0 : i64, tpu.core_type = #tpu.core_type<tc>, window_params = [{transform_indices = @transform_0, window_bounds = array<i64: 16, 128>}, {pipeline_mode = #tpu.pipeline_mode<synchronous>, transform_indices = @transform_1, window_bounds = array<i64: 6, 64, 16>}, {pipeline_mode = #tpu.pipeline_mode<synchronous>, transform_indices = @transform_2, window_bounds = array<i64: 6, 64, 1>}, {pipeline_mode = #tpu.pipeline_mode<synchronous>, transform_indices = @transform_3, window_bounds = array<i64: 6, 64, 64>}, {pipeline_mode = #tpu.pipeline_mode<synchronous>, transform_indices = @transform_4, window_bounds = array<i64: 6, 64, 1>}, {pipeline_mode = #tpu.pipeline_mode<synchronous>, transform_indices = @transform_5, window_bounds = array<i64: 6, 32, 64>}, {pipeline_mode = #tpu.pipeline_mode<synchronous>, transform_indices = @transform_6, window_bounds = array<i64: 6, 32, 1>}, {transform_indices = @transform_7, window_bounds = array<i64: 16, 128>}, {transform_indices = @transform_8, window_bounds = array<i64: 1, 128>}]} {
    %c0 = arith.constant 0 : index
    %c0_0 = arith.constant 0 : index
    %0 = vector.load %arg1[%c0, %c0_0] : memref<16x128xf32, #tpu.memory_space<vmem>>, vector<16x128xf32>
    %cst = arith.constant 0.000000e+00 : f32
    %1 = vector.broadcast %cst : f32 to vector<1x128xf32>
    %c0_1 = arith.constant 0 : index
    %c0_2 = arith.constant 0 : index
    %c0_3 = arith.constant 0 : index
    %2 = vector.load %arg2[%c0_1, %c0_2, %c0_3] : memref<6x64x16xf32, #tpu.memory_space<vmem>>, vector<1x64x16xf32>
    %3 = vector.shape_cast %2 : vector<1x64x16xf32> to vector<64x16xf32>
    %cst_4 = arith.constant dense<0.000000e+00> : vector<64x128xf32>
    %4 = tpu.matmul %3, %0, %cst_4 {dimension_numbers = #tpu.dot_dimension_numbers<[1], [0], [0], [1], [0, 0, 1, 1], [], []>} : vector<64x16xf32>, vector<16x128xf32>, vector<64x128xf32> -> vector<64x128xf32>
    %c0_5 = arith.constant 0 : index
    %c0_6 = arith.constant 0 : index
    %c0_7 = arith.constant 0 : index
    %5 = vector.load %arg3[%c0_5, %c0_6, %c0_7] : memref<6x64x1xf32, #tpu.memory_space<vmem>>, vector<1x64x1xf32>
    %6 = vector.shape_cast %5 : vector<1x64x1xf32> to vector<64x1xf32>
    %7 = vector.broadcast %6 : vector<64x1xf32> to vector<64x128xf32>
    %8 = arith.addf %4, %7 : vector<64x128xf32>
    %cst_8 = arith.constant 0.000000e+00 : f32
    %9 = vector.broadcast %cst_8 : f32 to vector<64x128xf32>
    %10 = arith.cmpf ogt, %8, %9 : vector<64x128xf32>
    %cst_9 = arith.constant 0.00999999977 : f32
    %11 = vector.broadcast %cst_9 : f32 to vector<64x128xf32>
    %12 = arith.mulf %11, %8 : vector<64x128xf32>
    %13 = arith.select %10, %8, %12 : vector<64x128xi1>, vector<64x128xf32>
    %c0_10 = arith.constant 0 : index
    %c0_11 = arith.constant 0 : index
    %c0_12 = arith.constant 0 : index
    %14 = vector.load %arg4[%c0_10, %c0_11, %c0_12] : memref<6x64x64xf32, #tpu.memory_space<vmem>>, vector<1x64x64xf32>
    %15 = vector.shape_cast %14 : vector<1x64x64xf32> to vector<64x64xf32>
    %cst_13 = arith.constant dense<0.000000e+00> : vector<64x128xf32>
    %16 = tpu.matmul %15, %13, %cst_13 {dimension_numbers = #tpu.dot_dimension_numbers<[1], [0], [0], [1], [0, 0, 1, 1], [], []>} : vector<64x64xf32>, vector<64x128xf32>, vector<64x128xf32> -> vector<64x128xf32>
    %c0_14 = arith.constant 0 : index
    %c0_15 = arith.constant 0 : index
    %c0_16 = arith.constant 0 : index
    %17 = vector.load %arg5[%c0_14, %c0_15, %c0_16] : memref<6x64x1xf32, #tpu.memory_space<vmem>>, vector<1x64x1xf32>
    %18 = vector.shape_cast %17 : vector<1x64x1xf32> to vector<64x1xf32>
    %19 = vector.broadcast %18 : vector<64x1xf32> to vector<64x128xf32>
    %20 = arith.addf %16, %19 : vector<64x128xf32>
    %cst_17 = arith.constant 0.000000e+00 : f32
    %21 = vector.broadcast %cst_17 : f32 to vector<64x128xf32>
    %22 = arith.cmpf ogt, %20, %21 : vector<64x128xf32>
    %cst_18 = arith.constant 0.00999999977 : f32
    %23 = vector.broadcast %cst_18 : f32 to vector<64x128xf32>
    %24 = arith.mulf %23, %20 : vector<64x128xf32>
    %25 = arith.select %22, %20, %24 : vector<64x128xi1>, vector<64x128xf32>
    %c0_19 = arith.constant 0 : index
    %c0_20 = arith.constant 0 : index
    %c0_21 = arith.constant 0 : index
    %26 = vector.load %arg6[%c0_19, %c0_20, %c0_21] : memref<6x32x64xf32, #tpu.memory_space<vmem>>, vector<1x32x64xf32>
    %27 = vector.shape_cast %26 : vector<1x32x64xf32> to vector<32x64xf32>
    %cst_22 = arith.constant dense<0.000000e+00> : vector<32x128xf32>
    %28 = tpu.matmul %27, %25, %cst_22 {dimension_numbers = #tpu.dot_dimension_numbers<[1], [0], [0], [1], [0, 0, 1, 1], [], []>} : vector<32x64xf32>, vector<64x128xf32>, vector<32x128xf32> -> vector<32x128xf32>
    %c0_23 = arith.constant 0 : index
    %c0_24 = arith.constant 0 : index
    %c0_25 = arith.constant 0 : index
    %29 = vector.load %arg7[%c0_23, %c0_24, %c0_25] : memref<6x32x1xf32, #tpu.memory_space<vmem>>, vector<1x32x1xf32>
    %30 = vector.shape_cast %29 : vector<1x32x1xf32> to vector<32x1xf32>
    %31 = vector.broadcast %30 : vector<32x1xf32> to vector<32x128xf32>
    %32 = arith.addf %28, %31 : vector<32x128xf32>
    %33 = vector.extract_strided_slice %32 {offsets = [0, 0], sizes = [16, 128], strides = [1, 1]} : vector<32x128xf32> to vector<16x128xf32>
    %34 = vector.extract_strided_slice %32 {offsets = [16, 0], sizes = [16, 128], strides = [1, 1]} : vector<32x128xf32> to vector<16x128xf32>
    %cst_26 = arith.constant -5.000000e+00 : f32
    %cst_27 = arith.constant 5.000000e+00 : f32
    %35 = vector.broadcast %cst_26 : f32 to vector<16x128xf32>
    %36 = arith.maximumf %35, %34 : vector<16x128xf32>
    %37 = vector.broadcast %cst_27 : f32 to vector<16x128xf32>
    %38 = arith.minimumf %37, %36 : vector<16x128xf32>
    %39 = math.exp %38 : vector<16x128xf32>
    %40 = arith.mulf %39, %0 : vector<16x128xf32>
    %41 = arith.addf %40, %33 : vector<16x128xf32>
    %cst_28 = arith.constant dense<0.000000e+00> : vector<128xf32>
    %42 = vector.multi_reduction <add>, %38, %cst_28 [0] : vector<16x128xf32> to vector<128xf32>
    %43 = vector.shape_cast %42 : vector<128xf32> to vector<1x128xf32>
    %44 = arith.addf %1, %43 : vector<1x128xf32>
    %c1 = arith.constant 1 : index
    %c0_29 = arith.constant 0 : index
    %c0_30 = arith.constant 0 : index
    %45 = vector.load %arg2[%c1, %c0_29, %c0_30] : memref<6x64x16xf32, #tpu.memory_space<vmem>>, vector<1x64x16xf32>
    %46 = vector.shape_cast %45 : vector<1x64x16xf32> to vector<64x16xf32>
    %cst_31 = arith.constant dense<0.000000e+00> : vector<64x128xf32>
    %47 = tpu.matmul %46, %41, %cst_31 {dimension_numbers = #tpu.dot_dimension_numbers<[1], [0], [0], [1], [0, 0, 1, 1], [], []>} : vector<64x16xf32>, vector<16x128xf32>, vector<64x128xf32> -> vector<64x128xf32>
    %c1_32 = arith.constant 1 : index
    %c0_33 = arith.constant 0 : index
    %c0_34 = arith.constant 0 : index
    %48 = vector.load %arg3[%c1_32, %c0_33, %c0_34] : memref<6x64x1xf32, #tpu.memory_space<vmem>>, vector<1x64x1xf32>
    %49 = vector.shape_cast %48 : vector<1x64x1xf32> to vector<64x1xf32>
    %50 = vector.broadcast %49 : vector<64x1xf32> to vector<64x128xf32>
    %51 = arith.addf %47, %50 : vector<64x128xf32>
    %cst_35 = arith.constant 0.000000e+00 : f32
    %52 = vector.broadcast %cst_35 : f32 to vector<64x128xf32>
    %53 = arith.cmpf ogt, %51, %52 : vector<64x128xf32>
    %cst_36 = arith.constant 0.00999999977 : f32
    %54 = vector.broadcast %cst_36 : f32 to vector<64x128xf32>
    %55 = arith.mulf %54, %51 : vector<64x128xf32>
    %56 = arith.select %53, %51, %55 : vector<64x128xi1>, vector<64x128xf32>
    %c1_37 = arith.constant 1 : index
    %c0_38 = arith.constant 0 : index
    %c0_39 = arith.constant 0 : index
    %57 = vector.load %arg4[%c1_37, %c0_38, %c0_39] : memref<6x64x64xf32, #tpu.memory_space<vmem>>, vector<1x64x64xf32>
    %58 = vector.shape_cast %57 : vector<1x64x64xf32> to vector<64x64xf32>
    %cst_40 = arith.constant dense<0.000000e+00> : vector<64x128xf32>
    %59 = tpu.matmul %58, %56, %cst_40 {dimension_numbers = #tpu.dot_dimension_numbers<[1], [0], [0], [1], [0, 0, 1, 1], [], []>} : vector<64x64xf32>, vector<64x128xf32>, vector<64x128xf32> -> vector<64x128xf32>
    %c1_41 = arith.constant 1 : index
    %c0_42 = arith.constant 0 : index
    %c0_43 = arith.constant 0 : index
    %60 = vector.load %arg5[%c1_41, %c0_42, %c0_43] : memref<6x64x1xf32, #tpu.memory_space<vmem>>, vector<1x64x1xf32>
    %61 = vector.shape_cast %60 : vector<1x64x1xf32> to vector<64x1xf32>
    %62 = vector.broadcast %61 : vector<64x1xf32> to vector<64x128xf32>
    %63 = arith.addf %59, %62 : vector<64x128xf32>
    %cst_44 = arith.constant 0.000000e+00 : f32
    %64 = vector.broadcast %cst_44 : f32 to vector<64x128xf32>
    %65 = arith.cmpf ogt, %63, %64 : vector<64x128xf32>
    %cst_45 = arith.constant 0.00999999977 : f32
    %66 = vector.broadcast %cst_45 : f32 to vector<64x128xf32>
    %67 = arith.mulf %66, %63 : vector<64x128xf32>
    %68 = arith.select %65, %63, %67 : vector<64x128xi1>, vector<64x128xf32>
    %c1_46 = arith.constant 1 : index
    %c0_47 = arith.constant 0 : index
    %c0_48 = arith.constant 0 : index
    %69 = vector.load %arg6[%c1_46, %c0_47, %c0_48] : memref<6x32x64xf32, #tpu.memory_space<vmem>>, vector<1x32x64xf32>
    %70 = vector.shape_cast %69 : vector<1x32x64xf32> to vector<32x64xf32>
    %cst_49 = arith.constant dense<0.000000e+00> : vector<32x128xf32>
    %71 = tpu.matmul %70, %68, %cst_49 {dimension_numbers = #tpu.dot_dimension_numbers<[1], [0], [0], [1], [0, 0, 1, 1], [], []>} : vector<32x64xf32>, vector<64x128xf32>, vector<32x128xf32> -> vector<32x128xf32>
    %c1_50 = arith.constant 1 : index
    %c0_51 = arith.constant 0 : index
    %c0_52 = arith.constant 0 : index
    %72 = vector.load %arg7[%c1_50, %c0_51, %c0_52] : memref<6x32x1xf32, #tpu.memory_space<vmem>>, vector<1x32x1xf32>
    %73 = vector.shape_cast %72 : vector<1x32x1xf32> to vector<32x1xf32>
    %74 = vector.broadcast %73 : vector<32x1xf32> to vector<32x128xf32>
    %75 = arith.addf %71, %74 : vector<32x128xf32>
    %76 = vector.extract_strided_slice %75 {offsets = [0, 0], sizes = [16, 128], strides = [1, 1]} : vector<32x128xf32> to vector<16x128xf32>
    %77 = vector.extract_strided_slice %75 {offsets = [16, 0], sizes = [16, 128], strides = [1, 1]} : vector<32x128xf32> to vector<16x128xf32>
    %cst_53 = arith.constant -5.000000e+00 : f32
    %cst_54 = arith.constant 5.000000e+00 : f32
    %78 = vector.broadcast %cst_53 : f32 to vector<16x128xf32>
    %79 = arith.maximumf %78, %77 : vector<16x128xf32>
    %80 = vector.broadcast %cst_54 : f32 to vector<16x128xf32>
    %81 = arith.minimumf %80, %79 : vector<16x128xf32>
    %82 = math.exp %81 : vector<16x128xf32>
    %83 = arith.mulf %82, %41 : vector<16x128xf32>
    %84 = arith.addf %83, %76 : vector<16x128xf32>
    %cst_55 = arith.constant dense<0.000000e+00> : vector<128xf32>
    %85 = vector.multi_reduction <add>, %81, %cst_55 [0] : vector<16x128xf32> to vector<128xf32>
    %86 = vector.shape_cast %85 : vector<128xf32> to vector<1x128xf32>
    %87 = arith.addf %44, %86 : vector<1x128xf32>
    %c2 = arith.constant 2 : index
    %c0_56 = arith.constant 0 : index
    %c0_57 = arith.constant 0 : index
    %88 = vector.load %arg2[%c2, %c0_56, %c0_57] : memref<6x64x16xf32, #tpu.memory_space<vmem>>, vector<1x64x16xf32>
    %89 = vector.shape_cast %88 : vector<1x64x16xf32> to vector<64x16xf32>
    %cst_58 = arith.constant dense<0.000000e+00> : vector<64x128xf32>
    %90 = tpu.matmul %89, %84, %cst_58 {dimension_numbers = #tpu.dot_dimension_numbers<[1], [0], [0], [1], [0, 0, 1, 1], [], []>} : vector<64x16xf32>, vector<16x128xf32>, vector<64x128xf32> -> vector<64x128xf32>
    %c2_59 = arith.constant 2 : index
    %c0_60 = arith.constant 0 : index
    %c0_61 = arith.constant 0 : index
    %91 = vector.load %arg3[%c2_59, %c0_60, %c0_61] : memref<6x64x1xf32, #tpu.memory_space<vmem>>, vector<1x64x1xf32>
    %92 = vector.shape_cast %91 : vector<1x64x1xf32> to vector<64x1xf32>
    %93 = vector.broadcast %92 : vector<64x1xf32> to vector<64x128xf32>
    %94 = arith.addf %90, %93 : vector<64x128xf32>
    %cst_62 = arith.constant 0.000000e+00 : f32
    %95 = vector.broadcast %cst_62 : f32 to vector<64x128xf32>
    %96 = arith.cmpf ogt, %94, %95 : vector<64x128xf32>
    %cst_63 = arith.constant 0.00999999977 : f32
    %97 = vector.broadcast %cst_63 : f32 to vector<64x128xf32>
    %98 = arith.mulf %97, %94 : vector<64x128xf32>
    %99 = arith.select %96, %94, %98 : vector<64x128xi1>, vector<64x128xf32>
    %c2_64 = arith.constant 2 : index
    %c0_65 = arith.constant 0 : index
    %c0_66 = arith.constant 0 : index
    %100 = vector.load %arg4[%c2_64, %c0_65, %c0_66] : memref<6x64x64xf32, #tpu.memory_space<vmem>>, vector<1x64x64xf32>
    %101 = vector.shape_cast %100 : vector<1x64x64xf32> to vector<64x64xf32>
    %cst_67 = arith.constant dense<0.000000e+00> : vector<64x128xf32>
    %102 = tpu.matmul %101, %99, %cst_67 {dimension_numbers = #tpu.dot_dimension_numbers<[1], [0], [0], [1], [0, 0, 1, 1], [], []>} : vector<64x64xf32>, vector<64x128xf32>, vector<64x128xf32> -> vector<64x128xf32>
    %c2_68 = arith.constant 2 : index
    %c0_69 = arith.constant 0 : index
    %c0_70 = arith.constant 0 : index
    %103 = vector.load %arg5[%c2_68, %c0_69, %c0_70] : memref<6x64x1xf32, #tpu.memory_space<vmem>>, vector<1x64x1xf32>
    %104 = vector.shape_cast %103 : vector<1x64x1xf32> to vector<64x1xf32>
    %105 = vector.broadcast %104 : vector<64x1xf32> to vector<64x128xf32>
    %106 = arith.addf %102, %105 : vector<64x128xf32>
    %cst_71 = arith.constant 0.000000e+00 : f32
    %107 = vector.broadcast %cst_71 : f32 to vector<64x128xf32>
    %108 = arith.cmpf ogt, %106, %107 : vector<64x128xf32>
    %cst_72 = arith.constant 0.00999999977 : f32
    %109 = vector.broadcast %cst_72 : f32 to vector<64x128xf32>
    %110 = arith.mulf %109, %106 : vector<64x128xf32>
    %111 = arith.select %108, %106, %110 : vector<64x128xi1>, vector<64x128xf32>
    %c2_73 = arith.constant 2 : index
    %c0_74 = arith.constant 0 : index
    %c0_75 = arith.constant 0 : index
    %112 = vector.load %arg6[%c2_73, %c0_74, %c0_75] : memref<6x32x64xf32, #tpu.memory_space<vmem>>, vector<1x32x64xf32>
    %113 = vector.shape_cast %112 : vector<1x32x64xf32> to vector<32x64xf32>
    %cst_76 = arith.constant dense<0.000000e+00> : vector<32x128xf32>
    %114 = tpu.matmul %113, %111, %cst_76 {dimension_numbers = #tpu.dot_dimension_numbers<[1], [0], [0], [1], [0, 0, 1, 1], [], []>} : vector<32x64xf32>, vector<64x128xf32>, vector<32x128xf32> -> vector<32x128xf32>
    %c2_77 = arith.constant 2 : index
    %c0_78 = arith.constant 0 : index
    %c0_79 = arith.constant 0 : index
    %115 = vector.load %arg7[%c2_77, %c0_78, %c0_79] : memref<6x32x1xf32, #tpu.memory_space<vmem>>, vector<1x32x1xf32>
    %116 = vector.shape_cast %115 : vector<1x32x1xf32> to vector<32x1xf32>
    %117 = vector.broadcast %116 : vector<32x1xf32> to vector<32x128xf32>
    %118 = arith.addf %114, %117 : vector<32x128xf32>
    %119 = vector.extract_strided_slice %118 {offsets = [0, 0], sizes = [16, 128], strides = [1, 1]} : vector<32x128xf32> to vector<16x128xf32>
    %120 = vector.extract_strided_slice %118 {offsets = [16, 0], sizes = [16, 128], strides = [1, 1]} : vector<32x128xf32> to vector<16x128xf32>
    %cst_80 = arith.constant -5.000000e+00 : f32
    %cst_81 = arith.constant 5.000000e+00 : f32
    %121 = vector.broadcast %cst_80 : f32 to vector<16x128xf32>
    %122 = arith.maximumf %121, %120 : vector<16x128xf32>
    %123 = vector.broadcast %cst_81 : f32 to vector<16x128xf32>
    %124 = arith.minimumf %123, %122 : vector<16x128xf32>
    %125 = math.exp %124 : vector<16x128xf32>
    %126 = arith.mulf %125, %84 : vector<16x128xf32>
    %127 = arith.addf %126, %119 : vector<16x128xf32>
    %cst_82 = arith.constant dense<0.000000e+00> : vector<128xf32>
    %128 = vector.multi_reduction <add>, %124, %cst_82 [0] : vector<16x128xf32> to vector<128xf32>
    %129 = vector.shape_cast %128 : vector<128xf32> to vector<1x128xf32>
    %130 = arith.addf %87, %129 : vector<1x128xf32>
    %c3 = arith.constant 3 : index
    %c0_83 = arith.constant 0 : index
    %c0_84 = arith.constant 0 : index
    %131 = vector.load %arg2[%c3, %c0_83, %c0_84] : memref<6x64x16xf32, #tpu.memory_space<vmem>>, vector<1x64x16xf32>
    %132 = vector.shape_cast %131 : vector<1x64x16xf32> to vector<64x16xf32>
    %cst_85 = arith.constant dense<0.000000e+00> : vector<64x128xf32>
    %133 = tpu.matmul %132, %127, %cst_85 {dimension_numbers = #tpu.dot_dimension_numbers<[1], [0], [0], [1], [0, 0, 1, 1], [], []>} : vector<64x16xf32>, vector<16x128xf32>, vector<64x128xf32> -> vector<64x128xf32>
    %c3_86 = arith.constant 3 : index
    %c0_87 = arith.constant 0 : index
    %c0_88 = arith.constant 0 : index
    %134 = vector.load %arg3[%c3_86, %c0_87, %c0_88] : memref<6x64x1xf32, #tpu.memory_space<vmem>>, vector<1x64x1xf32>
    %135 = vector.shape_cast %134 : vector<1x64x1xf32> to vector<64x1xf32>
    %136 = vector.broadcast %135 : vector<64x1xf32> to vector<64x128xf32>
    %137 = arith.addf %133, %136 : vector<64x128xf32>
    %cst_89 = arith.constant 0.000000e+00 : f32
    %138 = vector.broadcast %cst_89 : f32 to vector<64x128xf32>
    %139 = arith.cmpf ogt, %137, %138 : vector<64x128xf32>
    %cst_90 = arith.constant 0.00999999977 : f32
    %140 = vector.broadcast %cst_90 : f32 to vector<64x128xf32>
    %141 = arith.mulf %140, %137 : vector<64x128xf32>
    %142 = arith.select %139, %137, %141 : vector<64x128xi1>, vector<64x128xf32>
    %c3_91 = arith.constant 3 : index
    %c0_92 = arith.constant 0 : index
    %c0_93 = arith.constant 0 : index
    %143 = vector.load %arg4[%c3_91, %c0_92, %c0_93] : memref<6x64x64xf32, #tpu.memory_space<vmem>>, vector<1x64x64xf32>
    %144 = vector.shape_cast %143 : vector<1x64x64xf32> to vector<64x64xf32>
    %cst_94 = arith.constant dense<0.000000e+00> : vector<64x128xf32>
    %145 = tpu.matmul %144, %142, %cst_94 {dimension_numbers = #tpu.dot_dimension_numbers<[1], [0], [0], [1], [0, 0, 1, 1], [], []>} : vector<64x64xf32>, vector<64x128xf32>, vector<64x128xf32> -> vector<64x128xf32>
    %c3_95 = arith.constant 3 : index
    %c0_96 = arith.constant 0 : index
    %c0_97 = arith.constant 0 : index
    %146 = vector.load %arg5[%c3_95, %c0_96, %c0_97] : memref<6x64x1xf32, #tpu.memory_space<vmem>>, vector<1x64x1xf32>
    %147 = vector.shape_cast %146 : vector<1x64x1xf32> to vector<64x1xf32>
    %148 = vector.broadcast %147 : vector<64x1xf32> to vector<64x128xf32>
    %149 = arith.addf %145, %148 : vector<64x128xf32>
    %cst_98 = arith.constant 0.000000e+00 : f32
    %150 = vector.broadcast %cst_98 : f32 to vector<64x128xf32>
    %151 = arith.cmpf ogt, %149, %150 : vector<64x128xf32>
    %cst_99 = arith.constant 0.00999999977 : f32
    %152 = vector.broadcast %cst_99 : f32 to vector<64x128xf32>
    %153 = arith.mulf %152, %149 : vector<64x128xf32>
    %154 = arith.select %151, %149, %153 : vector<64x128xi1>, vector<64x128xf32>
    %c3_100 = arith.constant 3 : index
    %c0_101 = arith.constant 0 : index
    %c0_102 = arith.constant 0 : index
    %155 = vector.load %arg6[%c3_100, %c0_101, %c0_102] : memref<6x32x64xf32, #tpu.memory_space<vmem>>, vector<1x32x64xf32>
    %156 = vector.shape_cast %155 : vector<1x32x64xf32> to vector<32x64xf32>
    %cst_103 = arith.constant dense<0.000000e+00> : vector<32x128xf32>
    %157 = tpu.matmul %156, %154, %cst_103 {dimension_numbers = #tpu.dot_dimension_numbers<[1], [0], [0], [1], [0, 0, 1, 1], [], []>} : vector<32x64xf32>, vector<64x128xf32>, vector<32x128xf32> -> vector<32x128xf32>
    %c3_104 = arith.constant 3 : index
    %c0_105 = arith.constant 0 : index
    %c0_106 = arith.constant 0 : index
    %158 = vector.load %arg7[%c3_104, %c0_105, %c0_106] : memref<6x32x1xf32, #tpu.memory_space<vmem>>, vector<1x32x1xf32>
    %159 = vector.shape_cast %158 : vector<1x32x1xf32> to vector<32x1xf32>
    %160 = vector.broadcast %159 : vector<32x1xf32> to vector<32x128xf32>
    %161 = arith.addf %157, %160 : vector<32x128xf32>
    %162 = vector.extract_strided_slice %161 {offsets = [0, 0], sizes = [16, 128], strides = [1, 1]} : vector<32x128xf32> to vector<16x128xf32>
    %163 = vector.extract_strided_slice %161 {offsets = [16, 0], sizes = [16, 128], strides = [1, 1]} : vector<32x128xf32> to vector<16x128xf32>
    %cst_107 = arith.constant -5.000000e+00 : f32
    %cst_108 = arith.constant 5.000000e+00 : f32
    %164 = vector.broadcast %cst_107 : f32 to vector<16x128xf32>
    %165 = arith.maximumf %164, %163 : vector<16x128xf32>
    %166 = vector.broadcast %cst_108 : f32 to vector<16x128xf32>
    %167 = arith.minimumf %166, %165 : vector<16x128xf32>
    %168 = math.exp %167 : vector<16x128xf32>
    %169 = arith.mulf %168, %127 : vector<16x128xf32>
    %170 = arith.addf %169, %162 : vector<16x128xf32>
    %cst_109 = arith.constant dense<0.000000e+00> : vector<128xf32>
    %171 = vector.multi_reduction <add>, %167, %cst_109 [0] : vector<16x128xf32> to vector<128xf32>
    %172 = vector.shape_cast %171 : vector<128xf32> to vector<1x128xf32>
    %173 = arith.addf %130, %172 : vector<1x128xf32>
    %c4 = arith.constant 4 : index
    %c0_110 = arith.constant 0 : index
    %c0_111 = arith.constant 0 : index
    %174 = vector.load %arg2[%c4, %c0_110, %c0_111] : memref<6x64x16xf32, #tpu.memory_space<vmem>>, vector<1x64x16xf32>
    %175 = vector.shape_cast %174 : vector<1x64x16xf32> to vector<64x16xf32>
    %cst_112 = arith.constant dense<0.000000e+00> : vector<64x128xf32>
    %176 = tpu.matmul %175, %170, %cst_112 {dimension_numbers = #tpu.dot_dimension_numbers<[1], [0], [0], [1], [0, 0, 1, 1], [], []>} : vector<64x16xf32>, vector<16x128xf32>, vector<64x128xf32> -> vector<64x128xf32>
    %c4_113 = arith.constant 4 : index
    %c0_114 = arith.constant 0 : index
    %c0_115 = arith.constant 0 : index
    %177 = vector.load %arg3[%c4_113, %c0_114, %c0_115] : memref<6x64x1xf32, #tpu.memory_space<vmem>>, vector<1x64x1xf32>
    %178 = vector.shape_cast %177 : vector<1x64x1xf32> to vector<64x1xf32>
    %179 = vector.broadcast %178 : vector<64x1xf32> to vector<64x128xf32>
    %180 = arith.addf %176, %179 : vector<64x128xf32>
    %cst_116 = arith.constant 0.000000e+00 : f32
    %181 = vector.broadcast %cst_116 : f32 to vector<64x128xf32>
    %182 = arith.cmpf ogt, %180, %181 : vector<64x128xf32>
    %cst_117 = arith.constant 0.00999999977 : f32
    %183 = vector.broadcast %cst_117 : f32 to vector<64x128xf32>
    %184 = arith.mulf %183, %180 : vector<64x128xf32>
    %185 = arith.select %182, %180, %184 : vector<64x128xi1>, vector<64x128xf32>
    %c4_118 = arith.constant 4 : index
    %c0_119 = arith.constant 0 : index
    %c0_120 = arith.constant 0 : index
    %186 = vector.load %arg4[%c4_118, %c0_119, %c0_120] : memref<6x64x64xf32, #tpu.memory_space<vmem>>, vector<1x64x64xf32>
    %187 = vector.shape_cast %186 : vector<1x64x64xf32> to vector<64x64xf32>
    %cst_121 = arith.constant dense<0.000000e+00> : vector<64x128xf32>
    %188 = tpu.matmul %187, %185, %cst_121 {dimension_numbers = #tpu.dot_dimension_numbers<[1], [0], [0], [1], [0, 0, 1, 1], [], []>} : vector<64x64xf32>, vector<64x128xf32>, vector<64x128xf32> -> vector<64x128xf32>
    %c4_122 = arith.constant 4 : index
    %c0_123 = arith.constant 0 : index
    %c0_124 = arith.constant 0 : index
    %189 = vector.load %arg5[%c4_122, %c0_123, %c0_124] : memref<6x64x1xf32, #tpu.memory_space<vmem>>, vector<1x64x1xf32>
    %190 = vector.shape_cast %189 : vector<1x64x1xf32> to vector<64x1xf32>
    %191 = vector.broadcast %190 : vector<64x1xf32> to vector<64x128xf32>
    %192 = arith.addf %188, %191 : vector<64x128xf32>
    %cst_125 = arith.constant 0.000000e+00 : f32
    %193 = vector.broadcast %cst_125 : f32 to vector<64x128xf32>
    %194 = arith.cmpf ogt, %192, %193 : vector<64x128xf32>
    %cst_126 = arith.constant 0.00999999977 : f32
    %195 = vector.broadcast %cst_126 : f32 to vector<64x128xf32>
    %196 = arith.mulf %195, %192 : vector<64x128xf32>
    %197 = arith.select %194, %192, %196 : vector<64x128xi1>, vector<64x128xf32>
    %c4_127 = arith.constant 4 : index
    %c0_128 = arith.constant 0 : index
    %c0_129 = arith.constant 0 : index
    %198 = vector.load %arg6[%c4_127, %c0_128, %c0_129] : memref<6x32x64xf32, #tpu.memory_space<vmem>>, vector<1x32x64xf32>
    %199 = vector.shape_cast %198 : vector<1x32x64xf32> to vector<32x64xf32>
    %cst_130 = arith.constant dense<0.000000e+00> : vector<32x128xf32>
    %200 = tpu.matmul %199, %197, %cst_130 {dimension_numbers = #tpu.dot_dimension_numbers<[1], [0], [0], [1], [0, 0, 1, 1], [], []>} : vector<32x64xf32>, vector<64x128xf32>, vector<32x128xf32> -> vector<32x128xf32>
    %c4_131 = arith.constant 4 : index
    %c0_132 = arith.constant 0 : index
    %c0_133 = arith.constant 0 : index
    %201 = vector.load %arg7[%c4_131, %c0_132, %c0_133] : memref<6x32x1xf32, #tpu.memory_space<vmem>>, vector<1x32x1xf32>
    %202 = vector.shape_cast %201 : vector<1x32x1xf32> to vector<32x1xf32>
    %203 = vector.broadcast %202 : vector<32x1xf32> to vector<32x128xf32>
    %204 = arith.addf %200, %203 : vector<32x128xf32>
    %205 = vector.extract_strided_slice %204 {offsets = [0, 0], sizes = [16, 128], strides = [1, 1]} : vector<32x128xf32> to vector<16x128xf32>
    %206 = vector.extract_strided_slice %204 {offsets = [16, 0], sizes = [16, 128], strides = [1, 1]} : vector<32x128xf32> to vector<16x128xf32>
    %cst_134 = arith.constant -5.000000e+00 : f32
    %cst_135 = arith.constant 5.000000e+00 : f32
    %207 = vector.broadcast %cst_134 : f32 to vector<16x128xf32>
    %208 = arith.maximumf %207, %206 : vector<16x128xf32>
    %209 = vector.broadcast %cst_135 : f32 to vector<16x128xf32>
    %210 = arith.minimumf %209, %208 : vector<16x128xf32>
    %211 = math.exp %210 : vector<16x128xf32>
    %212 = arith.mulf %211, %170 : vector<16x128xf32>
    %213 = arith.addf %212, %205 : vector<16x128xf32>
    %cst_136 = arith.constant dense<0.000000e+00> : vector<128xf32>
    %214 = vector.multi_reduction <add>, %210, %cst_136 [0] : vector<16x128xf32> to vector<128xf32>
    %215 = vector.shape_cast %214 : vector<128xf32> to vector<1x128xf32>
    %216 = arith.addf %173, %215 : vector<1x128xf32>
    %c5 = arith.constant 5 : index
    %c0_137 = arith.constant 0 : index
    %c0_138 = arith.constant 0 : index
    %217 = vector.load %arg2[%c5, %c0_137, %c0_138] : memref<6x64x16xf32, #tpu.memory_space<vmem>>, vector<1x64x16xf32>
    %218 = vector.shape_cast %217 : vector<1x64x16xf32> to vector<64x16xf32>
    %cst_139 = arith.constant dense<0.000000e+00> : vector<64x128xf32>
    %219 = tpu.matmul %218, %213, %cst_139 {dimension_numbers = #tpu.dot_dimension_numbers<[1], [0], [0], [1], [0, 0, 1, 1], [], []>} : vector<64x16xf32>, vector<16x128xf32>, vector<64x128xf32> -> vector<64x128xf32>
    %c5_140 = arith.constant 5 : index
    %c0_141 = arith.constant 0 : index
    %c0_142 = arith.constant 0 : index
    %220 = vector.load %arg3[%c5_140, %c0_141, %c0_142] : memref<6x64x1xf32, #tpu.memory_space<vmem>>, vector<1x64x1xf32>
    %221 = vector.shape_cast %220 : vector<1x64x1xf32> to vector<64x1xf32>
    %222 = vector.broadcast %221 : vector<64x1xf32> to vector<64x128xf32>
    %223 = arith.addf %219, %222 : vector<64x128xf32>
    %cst_143 = arith.constant 0.000000e+00 : f32
    %224 = vector.broadcast %cst_143 : f32 to vector<64x128xf32>
    %225 = arith.cmpf ogt, %223, %224 : vector<64x128xf32>
    %cst_144 = arith.constant 0.00999999977 : f32
    %226 = vector.broadcast %cst_144 : f32 to vector<64x128xf32>
    %227 = arith.mulf %226, %223 : vector<64x128xf32>
    %228 = arith.select %225, %223, %227 : vector<64x128xi1>, vector<64x128xf32>
    %c5_145 = arith.constant 5 : index
    %c0_146 = arith.constant 0 : index
    %c0_147 = arith.constant 0 : index
    %229 = vector.load %arg4[%c5_145, %c0_146, %c0_147] : memref<6x64x64xf32, #tpu.memory_space<vmem>>, vector<1x64x64xf32>
    %230 = vector.shape_cast %229 : vector<1x64x64xf32> to vector<64x64xf32>
    %cst_148 = arith.constant dense<0.000000e+00> : vector<64x128xf32>
    %231 = tpu.matmul %230, %228, %cst_148 {dimension_numbers = #tpu.dot_dimension_numbers<[1], [0], [0], [1], [0, 0, 1, 1], [], []>} : vector<64x64xf32>, vector<64x128xf32>, vector<64x128xf32> -> vector<64x128xf32>
    %c5_149 = arith.constant 5 : index
    %c0_150 = arith.constant 0 : index
    %c0_151 = arith.constant 0 : index
    %232 = vector.load %arg5[%c5_149, %c0_150, %c0_151] : memref<6x64x1xf32, #tpu.memory_space<vmem>>, vector<1x64x1xf32>
    %233 = vector.shape_cast %232 : vector<1x64x1xf32> to vector<64x1xf32>
    %234 = vector.broadcast %233 : vector<64x1xf32> to vector<64x128xf32>
    %235 = arith.addf %231, %234 : vector<64x128xf32>
    %cst_152 = arith.constant 0.000000e+00 : f32
    %236 = vector.broadcast %cst_152 : f32 to vector<64x128xf32>
    %237 = arith.cmpf ogt, %235, %236 : vector<64x128xf32>
    %cst_153 = arith.constant 0.00999999977 : f32
    %238 = vector.broadcast %cst_153 : f32 to vector<64x128xf32>
    %239 = arith.mulf %238, %235 : vector<64x128xf32>
    %240 = arith.select %237, %235, %239 : vector<64x128xi1>, vector<64x128xf32>
    %c5_154 = arith.constant 5 : index
    %c0_155 = arith.constant 0 : index
    %c0_156 = arith.constant 0 : index
    %241 = vector.load %arg6[%c5_154, %c0_155, %c0_156] : memref<6x32x64xf32, #tpu.memory_space<vmem>>, vector<1x32x64xf32>
    %242 = vector.shape_cast %241 : vector<1x32x64xf32> to vector<32x64xf32>
    %cst_157 = arith.constant dense<0.000000e+00> : vector<32x128xf32>
    %243 = tpu.matmul %242, %240, %cst_157 {dimension_numbers = #tpu.dot_dimension_numbers<[1], [0], [0], [1], [0, 0, 1, 1], [], []>} : vector<32x64xf32>, vector<64x128xf32>, vector<32x128xf32> -> vector<32x128xf32>
    %c5_158 = arith.constant 5 : index
    %c0_159 = arith.constant 0 : index
    %c0_160 = arith.constant 0 : index
    %244 = vector.load %arg7[%c5_158, %c0_159, %c0_160] : memref<6x32x1xf32, #tpu.memory_space<vmem>>, vector<1x32x1xf32>
    %245 = vector.shape_cast %244 : vector<1x32x1xf32> to vector<32x1xf32>
    %246 = vector.broadcast %245 : vector<32x1xf32> to vector<32x128xf32>
    %247 = arith.addf %243, %246 : vector<32x128xf32>
    %248 = vector.extract_strided_slice %247 {offsets = [0, 0], sizes = [16, 128], strides = [1, 1]} : vector<32x128xf32> to vector<16x128xf32>
    %249 = vector.extract_strided_slice %247 {offsets = [16, 0], sizes = [16, 128], strides = [1, 1]} : vector<32x128xf32> to vector<16x128xf32>
    %cst_161 = arith.constant -5.000000e+00 : f32
    %cst_162 = arith.constant 5.000000e+00 : f32
    %250 = vector.broadcast %cst_161 : f32 to vector<16x128xf32>
    %251 = arith.maximumf %250, %249 : vector<16x128xf32>
    %252 = vector.broadcast %cst_162 : f32 to vector<16x128xf32>
    %253 = arith.minimumf %252, %251 : vector<16x128xf32>
    %254 = math.exp %253 : vector<16x128xf32>
    %255 = arith.mulf %254, %213 : vector<16x128xf32>
    %256 = arith.addf %255, %248 : vector<16x128xf32>
    %cst_163 = arith.constant dense<0.000000e+00> : vector<128xf32>
    %257 = vector.multi_reduction <add>, %253, %cst_163 [0] : vector<16x128xf32> to vector<128xf32>
    %258 = vector.shape_cast %257 : vector<128xf32> to vector<1x128xf32>
    %259 = arith.addf %216, %258 : vector<1x128xf32>
    %c0_164 = arith.constant 0 : index
    %c0_165 = arith.constant 0 : index
    %260 = vector.load %arg8[%c0_164, %c0_165] : memref<16x128xf32, #tpu.memory_space<vmem>>, vector<16x128xf32>
    tpu.vector_store %arg8[%c0_164, %c0_165], %256 {strides = array<i32>} : memref<16x128xf32, #tpu.memory_space<vmem>>, vector<16x128xf32>,
    %c0_166 = arith.constant 0 : index
    %c0_167 = arith.constant 0 : index
    %261 = vector.load %arg9[%c0_166, %c0_167] : memref<1x128xf32, #tpu.memory_space<vmem>>, vector<1x128xf32>
    tpu.vector_store %arg9[%c0_166, %c0_167], %259 {strides = array<i32>} : memref<1x128xf32, #tpu.memory_space<vmem>>, vector<1x128xf32>,
    return
  }
  func.func @transform_0(%arg0: i32) -> (i32, i32) {
    %c0_i32 = arith.constant 0 : i32
    %c0_i32_0 = arith.constant 0 : i32
    return %c0_i32, %arg0 : i32, i32
  }
  func.func @transform_1(%arg0: i32) -> (i32, i32, i32) {
    %c0_i32 = arith.constant 0 : i32
    %c0_i32_0 = arith.constant 0 : i32
    %c0_i32_1 = arith.constant 0 : i32
    %c0_i32_2 = arith.constant 0 : i32
    return %c0_i32, %c0_i32_0, %c0_i32_1 : i32, i32, i32
  }
  func.func @transform_2(%arg0: i32) -> (i32, i32, i32) {
    %c0_i32 = arith.constant 0 : i32
    %c0_i32_0 = arith.constant 0 : i32
    %c0_i32_1 = arith.constant 0 : i32
    %c0_i32_2 = arith.constant 0 : i32
    return %c0_i32, %c0_i32_0, %c0_i32_1 : i32, i32, i32
  }
  func.func @transform_3(%arg0: i32) -> (i32, i32, i32) {
    %c0_i32 = arith.constant 0 : i32
    %c0_i32_0 = arith.constant 0 : i32
    %c0_i32_1 = arith.constant 0 : i32
    %c0_i32_2 = arith.constant 0 : i32
    return %c0_i32, %c0_i32_0, %c0_i32_1 : i32, i32, i32
  }
  func.func @transform_4(%arg0: i32) -> (i32, i32, i32) {
    %c0_i32 = arith.constant 0 : i32
    %c0_i32_0 = arith.constant 0 : i32
    %c0_i32_1 = arith.constant 0 : i32
    %c0_i32_2 = arith.constant 0 : i32
    return %c0_i32, %c0_i32_0, %c0_i32_1 : i32, i32, i32
  }
  func.func @transform_5(%arg0: i32) -> (i32, i32, i32) {
    %c0_i32 = arith.constant 0 : i32
    %c0_i32_0 = arith.constant 0 : i32
    %c0_i32_1 = arith.constant 0 : i32
    %c0_i32_2 = arith.constant 0 : i32
    return %c0_i32, %c0_i32_0, %c0_i32_1 : i32, i32, i32
  }
  func.func @transform_6(%arg0: i32) -> (i32, i32, i32) {
    %c0_i32 = arith.constant 0 : i32
    %c0_i32_0 = arith.constant 0 : i32
    %c0_i32_1 = arith.constant 0 : i32
    %c0_i32_2 = arith.constant 0 : i32
    return %c0_i32, %c0_i32_0, %c0_i32_1 : i32, i32, i32
  }
  func.func @transform_7(%arg0: i32) -> (i32, i32) {
    %c0_i32 = arith.constant 0 : i32
    %c0_i32_0 = arith.constant 0 : i32
    return %c0_i32, %arg0 : i32, i32
  }
  func.func @transform_8(%arg0: i32) -> (i32, i32) {
    %c0_i32 = arith.constant 0 : i32
    %c0_i32_0 = arith.constant 0 : i32
    return %c0_i32, %arg0 : i32, i32
  }
}

</mosaic_0001>

<llo_original>
// kernel: flow_iaf_f.1
$region0: #{flow_iaf_f.1}
  #allocation0 [shape = 'u32[]', space=smem, size = 0x4, offset = 0x4, fixed_abs, tag = 'smem constant byte address 0x4 - core index']
  #allocation1 [shape = 'u32[144,128]{1,0:T(1,128)}', space=vmem, size = 0x12000, scoped, tag = 'internal scratch']
  %s0 = inlined_call_operand.vmem [shape: f32[16,128], index: 0, kind: input, shape index: {}]
  %s1 = inlined_call_operand.vmem [shape: f32[6,64,16], index: 1, kind: input, shape index: {}]
  %s2 = inlined_call_operand.vmem [shape: f32[6,64,1], index: 2, kind: input, shape index: {}]
  %s3 = inlined_call_operand.vmem [shape: f32[6,64,64], index: 3, kind: input, shape index: {}]
  %s4 = inlined_call_operand.vmem [shape: f32[6,64,1], index: 4, kind: input, shape index: {}]
  %s5 = inlined_call_operand.vmem [shape: f32[6,32,64], index: 5, kind: input, shape index: {}]
  %s6 = inlined_call_operand.vmem [shape: f32[6,32,1], index: 6, kind: input, shape index: {}]
  %s7 = inlined_call_operand.vmem [shape: f32[16,128], index: 7, kind: output, shape index: {0}]
  %s8 = inlined_call_operand.vmem [shape: f32[1,128], index: 8, kind: output, shape index: {1}]
  %9 = xla_tuple %s7, %s8
  %s10 = sld [smem:[#allocation0]]
  $region46: #{flow_iaf_f.1} parent=0
    _
  %s12 = ssub.s32 1, %s10
  %s13 = scalar_select 0, %s12, %s10
  // Predicated region
  $region2: #{flow_iaf_f.1} parent=0 // pred_check
    _
  $region3: #{flow_iaf_f.1} parent=0 // pred_check_branch
    %15 = sbr.rel (0) target = $region5
  $region4: #{flow_iaf_f.1} parent=0 // pred_region
    _
  $region5: #{flow_iaf_f.1} parent=0 // pred_fallthru
    _
  // Predicated region
  $region6: #{flow_iaf_f.1} parent=0 // pred_check
    _
  $region7: #{flow_iaf_f.1} parent=0 // pred_check_branch
    %17 = sbr.rel (0) target = $region9
  $region8: #{flow_iaf_f.1} parent=0 // pred_region
    _
  $region9: #{flow_iaf_f.1} parent=0 // pred_fallthru
    _
  // Predicated region
  $region10: #{flow_iaf_f.1} parent=0 // pred_check
    _
  $region11: #{flow_iaf_f.1} parent=0 // pred_check_branch
    %19 = sbr.rel (0) target = $region13
  $region12: #{flow_iaf_f.1} parent=0 // pred_region
    _
  $region13: #{flow_iaf_f.1} parent=0 // pred_fallthru
    _
  // Predicated region
  $region14: #{flow_iaf_f.1} parent=0 // pred_check
    _
  $region15: #{flow_iaf_f.1} parent=0 // pred_check_branch
    %21 = sbr.rel (0) target = $region17
  $region16: #{flow_iaf_f.1} parent=0 // pred_region
    _
  $region17: #{flow_iaf_f.1} parent=0 // pred_fallthru
    _
  // Predicated region
  $region18: #{flow_iaf_f.1} parent=0 // pred_check
    _
  $region19: #{flow_iaf_f.1} parent=0 // pred_check_branch
    %23 = sbr.rel (0) target = $region21
  $region20: #{flow_iaf_f.1} parent=0 // pred_region
    _
  $region21: #{flow_iaf_f.1} parent=0 // pred_fallthru
    _
  // Predicated region
  $region22: #{flow_iaf_f.1} parent=0 // pred_check
    _
  $region23: #{flow_iaf_f.1} parent=0 // pred_check_branch
    %25 = sbr.rel (0) target = $region25
  $region24: #{flow_iaf_f.1} parent=0 // pred_region
    _
  $region25: #{flow_iaf_f.1} parent=0 // pred_fallthru
    _
  // Predicated region
  $region26: #{flow_iaf_f.1} parent=0 // pred_check
    _
  $region27: #{flow_iaf_f.1} parent=0 // pred_check_branch
    %27 = sbr.rel (0) target = $region29
  $region28: #{flow_iaf_f.1} parent=0 // pred_region
    _
  $region29: #{flow_iaf_f.1} parent=0 // pred_fallthru
    _
  %v28 = vld [vmem:[%s0] sm:$0xff]
  %v29 = vld [vmem:[%s0 + $0x8] sm:$0xff]
  %v30 = vld [vmem:[%s1] sm:$0xff]
  %v31 = vld [vmem:[%s1 + $0x8] sm:$0xff]
  %v32 = vld [vmem:[%s1 + $0x10] sm:$0xff]
  %v33 = vld [vmem:[%s1 + $0x18] sm:$0xff]
  %v34 = vld [vmem:[%s1 + $0x20] sm:$0xff]
  %v35 = vld [vmem:[%s1 + $0x28] sm:$0xff]
  %v36 = vld [vmem:[%s1 + $0x30] sm:$0xff]
  %v37 = vld [vmem:[%s1 + $0x38] sm:$0xff]
  %v38 = vld [vmem:[%s2] sm:$0xff]
  %v39 = vld [vmem:[%s2 + $0x8] sm:$0xff]
  %v40 = vld [vmem:[%s2 + $0x10] sm:$0xff]
  %v41 = vld [vmem:[%s2 + $0x18] sm:$0xff]
  %v42 = vld [vmem:[%s2 + $0x20] sm:$0xff]
  %v43 = vld [vmem:[%s2 + $0x28] sm:$0xff]
  %v44 = vld [vmem:[%s2 + $0x30] sm:$0xff]
  %v45 = vld [vmem:[%s2 + $0x38] sm:$0xff]
  %47 = vset.pattern.permute.xlu0 0
  %48 = vperm.xlu0 %47, %v38
  %v49 = vpop.permute.xlu0 %48
  %52 = vset.pattern.permute.xlu0 0
  %53 = vperm.xlu0 %52, %v39
  %v54 = vpop.permute.xlu0 %53
  %57 = vset.pattern.permute.xlu0 0
  %58 = vperm.xlu0 %57, %v40
  %v59 = vpop.permute.xlu0 %58
  %62 = vset.pattern.permute.xlu0 0
  %63 = vperm.xlu0 %62, %v41
  %v64 = vpop.permute.xlu0 %63
  %67 = vset.pattern.permute.xlu0 0
  %68 = vperm.xlu0 %67, %v42
  %v69 = vpop.permute.xlu0 %68
  %72 = vset.pattern.permute.xlu0 0
  %73 = vperm.xlu0 %72, %v43
  %v74 = vpop.permute.xlu0 %73
  %77 = vset.pattern.permute.xlu0 0
  %78 = vperm.xlu0 %77, %v44
  %v79 = vpop.permute.xlu0 %78
  %82 = vset.pattern.permute.xlu0 0
  %83 = vperm.xlu0 %82, %v45
  %v84 = vpop.permute.xlu0 %83
  %vm86 = vcmask 130048
  %v88 = vsel %vm86, %v30, 0
  %v91 = vsel %vm86, %v31, 0
  %v94 = vsel %vm86, %v32, 0
  %v97 = vsel %vm86, %v33, 0
  %v100 = vsel %vm86, %v34, 0
  %v103 = vsel %vm86, %v35, 0
  %v106 = vsel %vm86, %v36, 0
  %v109 = vsel %vm86, %v37, 0
  %111 = vmatprep.subr.mxu0 0.0
  %112 = vmatpush1.msra.mxu0 0.0
  %113 = vmatprep.subr.mxu0 0.0
  %114 = vmatpush1.msra.mxu0 0.0
  %115 = vmatprep.subr.mxu0 0.0
  %116 = vmatpush1.msra.mxu0 0.0
  %117 = vmatprep.subr.mxu0 0.0
  %118 = vmatpush1.msra.mxu0 0.0
  %119 = vmatprep.subr.mxu0 0.0
  %120 = vmatpush1.msra.mxu0 0.0
  %121 = vmatprep.subr.mxu0 0.0
  %122 = vmatpush1.msra.mxu0 0.0
  %123 = vmatprep.subr.mxu0 0.0
  %124 = vmatpush1.msra.mxu0 0.0
  %125 = vmatprep.subr.mxu0 0.0
  %126 = vmatpush1.msra.mxu0 0.0
  %127 = vmatprep.subr.mxu0 0.0
  %128 = vmatpush1.msra.mxu0 0.0
  %129 = vmatprep.subr.mxu0 0.0
  %130 = vmatpush1.msra.mxu0 0.0
  %131 = vmatprep.subr.mxu0 0.0
  %132 = vmatpush1.msra.mxu0 0.0
  %133 = vmatprep.subr.mxu0 0.0
  %134 = vmatpush1.msra.mxu0 0.0
  %135 = vmatprep.subr.mxu0 0.0
  %136 = vmatpush1.msra.mxu0 0.0
  %137 = vmatprep.subr.mxu0 0.0
  %138 = vmatpush1.msra.mxu0 0.0
  %139 = vmatprep.subr.mxu0 0.0
  %140 = vmatpush1.msra.mxu0 %v29
  %141 = vmatprep.subr.mxu0 0.0
  %142 = vmatpush1.msra.mxu0 %v28
  %143 = vmatprep.subr.mxu0 0.0
  %144 = vmatpush2.msra.mxu0 0.0
  %145 = vmatprep.subr.mxu0 0.0
  %146 = vmatpush2.msra.mxu0 0.0
  %147 = vmatprep.subr.mxu0 0.0
  %148 = vmatpush2.msra.mxu0 0.0
  %149 = vmatprep.subr.mxu0 0.0
  %150 = vmatpush2.msra.mxu0 0.0
  %151 = vmatprep.subr.mxu0 0.0
  %152 = vmatpush2.msra.mxu0 0.0
  %153 = vmatprep.subr.mxu0 0.0
  %154 = vmatpush2.msra.mxu0 0.0
  %155 = vmatprep.subr.mxu0 0.0
  %156 = vmatpush2.msra.mxu0 0.0
  %157 = vmatprep.subr.mxu0 0.0
  %158 = vmatpush2.msra.mxu0 0.0
  %159 = vmatprep.subr.mxu0 0.0
  %160 = vmatpush2.msra.mxu0 0.0
  %161 = vmatprep.subr.mxu0 0.0
  %162 = vmatpush2.msra.mxu0 0.0
  %163 = vmatprep.subr.mxu0 0.0
  %164 = vmatpush2.msra.mxu0 0.0
  %165 = vmatprep.subr.mxu0 0.0
  %166 = vmatpush2.msra.mxu0 0.0
  %167 = vmatprep.subr.mxu0 0.0
  %168 = vmatpush2.msra.mxu0 0.0
  %169 = vmatprep.subr.mxu0 0.0
  %170 = vmatpush2.msra.mxu0 0.0
  %171 = vmatprep.subr.mxu0 0.0
  %172 = vmatpush2.msra.mxu0 0.0
  %173 = vmatprep.subr.mxu0 0.0
  %174 = vmatpush2.msra.mxu0 0.0
  %175 = vmatprep.mubr.f32.mxu0 0.0
  %176 = vmatmul.mubr.f32.gmra.mxu0 %v88
  %v177 = vpop.f32.mrf.mxu0
  %v178 = vadd.f32 %v49, %v177
  %v179 = vpop.f32.mrf.mxu0
  %180 = vmatprep.mubr.f32.mxu0 0.0
  %181 = vmatmul.mubr.f32.gmra.mxu0 %v91
  %v182 = vpop.f32.mrf.mxu0
  %v183 = vadd.f32 %v54, %v182
  %v184 = vpop.f32.mrf.mxu0
  %185 = vmatprep.mubr.f32.mxu0 0.0
  %186 = vmatmul.mubr.f32.gmra.mxu0 %v94
  %v187 = vpop.f32.mrf.mxu0
  %v188 = vadd.f32 %v59, %v187
  %v189 = vpop.f32.mrf.mxu0
  %190 = vmatprep.mubr.f32.mxu0 0.0
  %191 = vmatmul.mubr.f32.gmra.mxu0 %v97
  %v192 = vpop.f32.mrf.mxu0
  %v193 = vadd.f32 %v64, %v192
  %v194 = vpop.f32.mrf.mxu0
  %195 = vmatprep.mubr.f32.mxu0 0.0
  %196 = vmatmul.mubr.f32.gmra.mxu0 %v100
  %v197 = vpop.f32.mrf.mxu0
  %v198 = vadd.f32 %v69, %v197
  %v199 = vpop.f32.mrf.mxu0
  %200 = vmatprep.mubr.f32.mxu0 0.0
  %201 = vmatmul.mubr.f32.gmra.mxu0 %v103
  %v202 = vpop.f32.mrf.mxu0
  %v203 = vadd.f32 %v74, %v202
  %v204 = vpop.f32.mrf.mxu0
  %205 = vmatprep.mubr.f32.mxu0 0.0
  %206 = vmatmul.mubr.f32.gmra.mxu0 %v106
  %v207 = vpop.f32.mrf.mxu0
  %v208 = vadd.f32 %v79, %v207
  %v209 = vpop.f32.mrf.mxu0
  %210 = vmatprep.mubr.f32.mxu0 0.0
  %211 = vmatmul.mubr.f32.gmra.mxu0 %v109
  %v212 = vpop.f32.mrf.mxu0
  %v213 = vadd.f32 %v84, %v212
  %v214 = vpop.f32.mrf.mxu0
  %215 = vdwg.mxu0
  %vm216 = vcmp.gt.f32.partialorder %v178, 0.0
  %vm217 = vcmp.gt.f32.partialorder %v183, 0.0
  %vm218 = vcmp.gt.f32.partialorder %v188, 0.0
  %vm219 = vcmp.gt.f32.partialorder %v193, 0.0
  %vm220 = vcmp.gt.f32.partialorder %v198, 0.0
  %vm221 = vcmp.gt.f32.partialorder %v203, 0.0
  %vm222 = vcmp.gt.f32.partialorder %v208, 0.0
  %vm223 = vcmp.gt.f32.partialorder %v213, 0.0
  %v224 = vmul.f32 %v178, 0.01
  %v225 = vmul.f32 %v183, 0.01
  %v226 = vmul.f32 %v188, 0.01
  %v227 = vmul.f32 %v193, 0.01
  %v228 = vmul.f32 %v198, 0.01
  %v229 = vmul.f32 %v203, 0.01
  %v230 = vmul.f32 %v208, 0.01
  %v231 = vmul.f32 %v213, 0.01
  %v232 = vsel %vm216, %v178, %v224
  %v233 = vsel %vm217, %v183, %v225
  %v234 = vsel %vm218, %v188, %v226
  %v235 = vsel %vm219, %v193, %v227
  %v236 = vsel %vm220, %v198, %v228
  %v237 = vsel %vm221, %v203, %v229
  %v238 = vsel %vm222, %v208, %v230
  %v239 = vsel %vm223, %v213, %v231
  %v240 = vld [vmem:[%s3] sm:$0xff]
  %v241 = vld [vmem:[%s3 + $0x8] sm:$0xff]
  %v242 = vld [vmem:[%s3 + $0x10] sm:$0xff]
  %v243 = vld [vmem:[%s3 + $0x18] sm:$0xff]
  %v244 = vld [vmem:[%s3 + $0x20] sm:$0xff]
  %v245 = vld [vmem:[%s3 + $0x28] sm:$0xff]
  %v246 = vld [vmem:[%s3 + $0x30] sm:$0xff]
  %v247 = vld [vmem:[%s3 + $0x38] sm:$0xff]
  %v248 = vld [vmem:[%s4] sm:$0xff]
  %v249 = vld [vmem:[%s4 + $0x8] sm:$0xff]
  %v250 = vld [vmem:[%s4 + $0x10] sm:$0xff]
  %v251 = vld [vmem:[%s4 + $0x18] sm:$0xff]
  %v252 = vld [vmem:[%s4 + $0x20] sm:$0xff]
  %v253 = vld [vmem:[%s4 + $0x28] sm:$0xff]
  %v254 = vld [vmem:[%s4 + $0x30] sm:$0xff]
  %v255 = vld [vmem:[%s4 + $0x38] sm:$0xff]
  %257 = vset.pattern.permute.xlu0 0
  %258 = vperm.xlu0 %257, %v248
  %v259 = vpop.permute.xlu0 %258
  %262 = vset.pattern.permute.xlu0 0
  %263 = vperm.xlu0 %262, %v249
  %v264 = vpop.permute.xlu0 %263
  %267 = vset.pattern.permute.xlu0 0
  %268 = vperm.xlu0 %267, %v250
  %v269 = vpop.permute.xlu0 %268
  %272 = vset.pattern.permute.xlu0 0
  %273 = vperm.xlu0 %272, %v251
  %v274 = vpop.permute.xlu0 %273
  %277 = vset.pattern.permute.xlu0 0
  %278 = vperm.xlu0 %277, %v252
  %v279 = vpop.permute.xlu0 %278
  %282 = vset.pattern.permute.xlu0 0
  %283 = vperm.xlu0 %282, %v253
  %v284 = vpop.permute.xlu0 %283
  %287 = vset.pattern.permute.xlu0 0
  %288 = vperm.xlu0 %287, %v254
  %v289 = vpop.permute.xlu0 %288
  %292 = vset.pattern.permute.xlu0 0
  %293 = vperm.xlu0 %292, %v255
  %v294 = vpop.permute.xlu0 %293
  %vm296 = vcmask 523264
  %v298 = vsel %vm296, %v240, 0
  %v301 = vsel %vm296, %v241, 0
  %v304 = vsel %vm296, %v242, 0
  %v307 = vsel %vm296, %v243, 0
  %v310 = vsel %vm296, %v244, 0
  %v313 = vsel %vm296, %v245, 0
  %v316 = vsel %vm296, %v246, 0
  %v319 = vsel %vm296, %v247, 0
  %321 = vmatprep.subr.mxu0 0.0
  %322 = vmatpush1.msra.mxu0 0.0
  %323 = vmatprep.subr.mxu0 0.0
  %324 = vmatpush1.msra.mxu0 0.0
  %325 = vmatprep.subr.mxu0 0.0
  %326 = vmatpush1.msra.mxu0 0.0
  %327 = vmatprep.subr.mxu0 0.0
  %328 = vmatpush1.msra.mxu0 0.0
  %329 = vmatprep.subr.mxu0 0.0
  %330 = vmatpush1.msra.mxu0 0.0
  %331 = vmatprep.subr.mxu0 0.0
  %332 = vmatpush1.msra.mxu0 0.0
  %333 = vmatprep.subr.mxu0 0.0
  %334 = vmatpush1.msra.mxu0 0.0
  %335 = vmatprep.subr.mxu0 0.0
  %336 = vmatpush1.msra.mxu0 0.0
  %337 = vmatprep.subr.mxu0 0.0
  %338 = vmatpush1.msra.mxu0 %v239
  %339 = vmatprep.subr.mxu0 0.0
  %340 = vmatpush1.msra.mxu0 %v238
  %341 = vmatprep.subr.mxu0 0.0
  %342 = vmatpush1.msra.mxu0 %v237
  %343 = vmatprep.subr.mxu0 0.0
  %344 = vmatpush1.msra.mxu0 %v236
  %345 = vmatprep.subr.mxu0 0.0
  %346 = vmatpush1.msra.mxu0 %v235
  %347 = vmatprep.subr.mxu0 0.0
  %348 = vmatpush1.msra.mxu0 %v234
  %349 = vmatprep.subr.mxu0 0.0
  %350 = vmatpush1.msra.mxu0 %v233
  %351 = vmatprep.subr.mxu0 0.0
  %352 = vmatpush1.msra.mxu0 %v232
  %353 = vmatprep.subr.mxu0 0.0
  %354 = vmatpush2.msra.mxu0 0.0
  %355 = vmatprep.subr.mxu0 0.0
  %356 = vmatpush2.msra.mxu0 0.0
  %357 = vmatprep.subr.mxu0 0.0
  %358 = vmatpush2.msra.mxu0 0.0
  %359 = vmatprep.subr.mxu0 0.0
  %360 = vmatpush2.msra.mxu0 0.0
  %361 = vmatprep.subr.mxu0 0.0
  %362 = vmatpush2.msra.mxu0 0.0
  %363 = vmatprep.subr.mxu0 0.0
  %364 = vmatpush2.msra.mxu0 0.0
  %365 = vmatprep.subr.mxu0 0.0
  %366 = vmatpush2.msra.mxu0 0.0
  %367 = vmatprep.subr.mxu0 0.0
  %368 = vmatpush2.msra.mxu0 0.0
  %369 = vmatprep.subr.mxu0 0.0
  %370 = vmatpush2.msra.mxu0 0.0
  %371 = vmatprep.subr.mxu0 0.0
  %372 = vmatpush2.msra.mxu0 0.0
  %373 = vmatprep.subr.mxu0 0.0
  %374 = vmatpush2.msra.mxu0 0.0
  %375 = vmatprep.subr.mxu0 0.0
  %376 = vmatpush2.msra.mxu0 0.0
  %377 = vmatprep.subr.mxu0 0.0
  %378 = vmatpush2.msra.mxu0 0.0
  %379 = vmatprep.subr.mxu0 0.0
  %380 = vmatpush2.msra.mxu0 0.0
  %381 = vmatprep.subr.mxu0 0.0
  %382 = vmatpush2.msra.mxu0 0.0
  %383 = vmatprep.subr.mxu0 0.0
  %384 = vmatpush2.msra.mxu0 0.0
  %385 = vmatprep.mubr.f32.mxu0 0.0
  %386 = vmatmul.mubr.f32.gmra.mxu0 %v298
  %v387 = vpop.f32.mrf.mxu0
  %v388 = vadd.f32 %v259, %v387
  %v389 = vpop.f32.mrf.mxu0
  %390 = vmatprep.mubr.f32.mxu0 0.0
  %391 = vmatmul.mubr.f32.gmra.mxu0 %v301
  %v392 = vpop.f32.mrf.mxu0
  %v393 = vadd.f32 %v264, %v392
  %v394 = vpop.f32.mrf.mxu0
  %395 = vmatprep.mubr.f32.mxu0 0.0
  %396 = vmatmul.mubr.f32.gmra.mxu0 %v304
  %v397 = vpop.f32.mrf.mxu0
  %v398 = vadd.f32 %v269, %v397
  %v399 = vpop.f32.mrf.mxu0
  %400 = vmatprep.mubr.f32.mxu0 0.0
  %401 = vmatmul.mubr.f32.gmra.mxu0 %v307
  %v402 = vpop.f32.mrf.mxu0
  %v403 = vadd.f32 %v274, %v402
  %v404 = vpop.f32.mrf.mxu0
  %405 = vmatprep.mubr.f32.mxu0 0.0
  %406 = vmatmul.mubr.f32.gmra.mxu0 %v310
  %v407 = vpop.f32.mrf.mxu0
  %v408 = vadd.f32 %v279, %v407
  %v409 = vpop.f32.mrf.mxu0
  %410 = vmatprep.mubr.f32.mxu0 0.0
  %411 = vmatmul.mubr.f32.gmra.mxu0 %v313
  %v412 = vpop.f32.mrf.mxu0
  %v413 = vadd.f32 %v284, %v412
  %v414 = vpop.f32.mrf.mxu0
  %415 = vmatprep.mubr.f32.mxu0 0.0
  %416 = vmatmul.mubr.f32.gmra.mxu0 %v316
  %v417 = vpop.f32.mrf.mxu0
  %v418 = vadd.f32 %v289, %v417
  %v419 = vpop.f32.mrf.mxu0
  %420 = vmatprep.mubr.f32.mxu0 0.0
  %421 = vmatmul.mubr.f32.gmra.mxu0 %v319
  %v422 = vpop.f32.mrf.mxu0
  %v423 = vadd.f32 %v294, %v422
  %v424 = vpop.f32.mrf.mxu0
  %425 = vdwg.mxu0
  %vm426 = vcmp.gt.f32.partialorder %v388, 0.0
  %vm427 = vcmp.gt.f32.partialorder %v393, 0.0
  %vm428 = vcmp.gt.f32.partialorder %v398, 0.0
  %vm429 = vcmp.gt.f32.partialorder %v403, 0.0
  %vm430 = vcmp.gt.f32.partialorder %v408, 0.0
  %vm431 = vcmp.gt.f32.partialorder %v413, 0.0
  %vm432 = vcmp.gt.f32.partialorder %v418, 0.0
  %vm433 = vcmp.gt.f32.partialorder %v423, 0.0
  %v434 = vmul.f32 %v388, 0.01
  %v435 = vmul.f32 %v393, 0.01
  %v436 = vmul.f32 %v398, 0.01
  %v437 = vmul.f32 %v403, 0.01
  %v438 = vmul.f32 %v408, 0.01
  %v439 = vmul.f32 %v413, 0.01
  %v440 = vmul.f32 %v418, 0.01
  %v441 = vmul.f32 %v423, 0.01
  %v442 = vsel %vm426, %v388, %v434
  %v443 = vsel %vm427, %v393, %v435
  %v444 = vsel %vm428, %v398, %v436
  %v445 = vsel %vm429, %v403, %v437
  %v446 = vsel %vm430, %v408, %v438
  %v447 = vsel %vm431, %v413, %v439
  %v448 = vsel %vm432, %v418, %v440
  %v449 = vsel %vm433, %v423, %v441
  %v450 = vld [vmem:[%s5] sm:$0xff]
  %v451 = vld [vmem:[%s5 + $0x8] sm:$0xff]
  %v452 = vld [vmem:[%s5 + $0x10] sm:$0xff]
  %v453 = vld [vmem:[%s5 + $0x18] sm:$0xff]
  %v454 = vld [vmem:[%s6] sm:$0xff]
  %v455 = vld [vmem:[%s6 + $0x8] sm:$0xff]
  %v456 = vld [vmem:[%s6 + $0x10] sm:$0xff]
  %v457 = vld [vmem:[%s6 + $0x18] sm:$0xff]
  %459 = vset.pattern.permute.xlu0 0
  %460 = vperm.xlu0 %459, %v454
  %v461 = vpop.permute.xlu0 %460
  %464 = vset.pattern.permute.xlu0 0
  %465 = vperm.xlu0 %464, %v455
  %v466 = vpop.permute.xlu0 %465
  %469 = vset.pattern.permute.xlu0 0
  %470 = vperm.xlu0 %469, %v456
  %v471 = vpop.permute.xlu0 %470
  %474 = vset.pattern.permute.xlu0 0
  %475 = vperm.xlu0 %474, %v457
  %v476 = vpop.permute.xlu0 %475
  %v479 = vsel %vm296, %v450, 0
  %v482 = vsel %vm296, %v451, 0
  %v485 = vsel %vm296, %v452, 0
  %v488 = vsel %vm296, %v453, 0
  %490 = vmatprep.subr.mxu0 0.0
  %491 = vmatpush1.msra.mxu0 0.0
  %492 = vmatprep.subr.mxu0 0.0
  %493 = vmatpush1.msra.mxu0 0.0
  %494 = vmatprep.subr.mxu0 0.0
  %495 = vmatpush1.msra.mxu0 0.0
  %496 = vmatprep.subr.mxu0 0.0
  %497 = vmatpush1.msra.mxu0 0.0
  %498 = vmatprep.subr.mxu0 0.0
  %499 = vmatpush1.msra.mxu0 0.0
  %500 = vmatprep.subr.mxu0 0.0
  %501 = vmatpush1.msra.mxu0 0.0
  %502 = vmatprep.subr.mxu0 0.0
  %503 = vmatpush1.msra.mxu0 0.0
  %504 = vmatprep.subr.mxu0 0.0
  %505 = vmatpush1.msra.mxu0 0.0
  %506 = vmatprep.subr.mxu0 0.0
  %507 = vmatpush1.msra.mxu0 %v449
  %508 = vmatprep.subr.mxu0 0.0
  %509 = vmatpush1.msra.mxu0 %v448
  %510 = vmatprep.subr.mxu0 0.0
  %511 = vmatpush1.msra.mxu0 %v447
  %512 = vmatprep.subr.mxu0 0.0
  %513 = vmatpush1.msra.mxu0 %v446
  %514 = vmatprep.subr.mxu0 0.0
  %515 = vmatpush1.msra.mxu0 %v445
  %516 = vmatprep.subr.mxu0 0.0
  %517 = vmatpush1.msra.mxu0 %v444
  %518 = vmatprep.subr.mxu0 0.0
  %519 = vmatpush1.msra.mxu0 %v443
  %520 = vmatprep.subr.mxu0 0.0
  %521 = vmatpush1.msra.mxu0 %v442
  %522 = vmatprep.subr.mxu0 0.0
  %523 = vmatpush2.msra.mxu0 0.0
  %524 = vmatprep.subr.mxu0 0.0
  %525 = vmatpush2.msra.mxu0 0.0
  %526 = vmatprep.subr.mxu0 0.0
  %527 = vmatpush2.msra.mxu0 0.0
  %528 = vmatprep.subr.mxu0 0.0
  %529 = vmatpush2.msra.mxu0 0.0
  %530 = vmatprep.subr.mxu0 0.0
  %531 = vmatpush2.msra.mxu0 0.0
  %532 = vmatprep.subr.mxu0 0.0
  %533 = vmatpush2.msra.mxu0 0.0
  %534 = vmatprep.subr.mxu0 0.0
  %535 = vmatpush2.msra.mxu0 0.0
  %536 = vmatprep.subr.mxu0 0.0
  %537 = vmatpush2.msra.mxu0 0.0
  %538 = vmatprep.subr.mxu0 0.0
  %539 = vmatpush2.msra.mxu0 0.0
  %540 = vmatprep.subr.mxu0 0.0
  %541 = vmatpush2.msra.mxu0 0.0
  %542 = vmatprep.subr.mxu0 0.0
  %543 = vmatpush2.msra.mxu0 0.0
  %544 = vmatprep.subr.mxu0 0.0
  %545 = vmatpush2.msra.mxu0 0.0
  %546 = vmatprep.subr.mxu0 0.0
  %547 = vmatpush2.msra.mxu0 0.0
  %548 = vmatprep.subr.mxu0 0.0
  %549 = vmatpush2.msra.mxu0 0.0
  %550 = vmatprep.subr.mxu0 0.0
  %551 = vmatpush2.msra.mxu0 0.0
  %552 = vmatprep.subr.mxu0 0.0
  %553 = vmatpush2.msra.mxu0 0.0
  %554 = vmatprep.mubr.f32.mxu0 0.0
  %555 = vmatmul.mubr.f32.gmra.mxu0 %v479
  %v556 = vpop.f32.mrf.mxu0
  %v557 = vadd.f32 %v461, %v556
  %v558 = vpop.f32.mrf.mxu0
  %559 = vmatprep.mubr.f32.mxu0 0.0
  %560 = vmatmul.mubr.f32.gmra.mxu0 %v482
  %v561 = vpop.f32.mrf.mxu0
  %v562 = vadd.f32 %v466, %v561
  %v563 = vpop.f32.mrf.mxu0
  %564 = vmatprep.mubr.f32.mxu0 0.0
  %565 = vmatmul.mubr.f32.gmra.mxu0 %v485
  %v566 = vpop.f32.mrf.mxu0
  %v567 = vadd.f32 %v471, %v566
  %v568 = vpop.f32.mrf.mxu0
  %569 = vmatprep.mubr.f32.mxu0 0.0
  %570 = vmatmul.mubr.f32.gmra.mxu0 %v488
  %v571 = vpop.f32.mrf.mxu0
  %v572 = vadd.f32 %v476, %v571
  %v573 = vpop.f32.mrf.mxu0
  %574 = vdwg.mxu0
  %v575 = vmax.f32 %v567, -5.0
  %v576 = vmax.f32 %v572, -5.0
  %v577 = vmin.f32 %v575, 5.0
  %v578 = vmin.f32 %v576, 5.0
  %v579 = vmul.f32 %v577, 1.442695
  %v580 = vpow.pop %v579
  %v581 = vmul.f32 %v578, 1.442695
  %v582 = vpow.pop %v581
  %v583 = vmul.f32 %v580, %v28
  %v584 = vmul.f32 %v582, %v29
  %v585 = vadd.f32 %v583, %v557
  %v586 = vadd.f32 %v584, %v562
  %v587 = vadd.f32 %v577, %v578
  %v588 = vrot.slane %v587, 4
  %v589 = vadd.f32 %v587, %v588
  %v590 = vrot.slane %v589, 2
  %v591 = vadd.f32 %v589, %v590
  %v592 = vrot.slane %v591, 1
  %v593 = vadd.f32 %v591, %v592
  %v594 = vadd.f32 %v593, 0.0
  %s595 = scalar_lea.vmem %s1, 64
  %v596 = vld [vmem:[%s595] sm:$0xff]
  %v597 = vld [vmem:[%s595 + $0x8] sm:$0xff]
  %v598 = vld [vmem:[%s595 + $0x10] sm:$0xff]
  %v599 = vld [vmem:[%s595 + $0x18] sm:$0xff]
  %v600 = vld [vmem:[%s595 + $0x20] sm:$0xff]
  %v601 = vld [vmem:[%s595 + $0x28] sm:$0xff]
  %v602 = vld [vmem:[%s595 + $0x30] sm:$0xff]
  %v603 = vld [vmem:[%s595 + $0x38] sm:$0xff]
  %s604 = scalar_lea.vmem %s2, 64
  %v605 = vld [vmem:[%s604] sm:$0xff]
  %v606 = vld [vmem:[%s604 + $0x8] sm:$0xff]
  %v607 = vld [vmem:[%s604 + $0x10] sm:$0xff]
  %v608 = vld [vmem:[%s604 + $0x18] sm:$0xff]
  %v609 = vld [vmem:[%s604 + $0x20] sm:$0xff]
  %v610 = vld [vmem:[%s604 + $0x28] sm:$0xff]
  %v611 = vld [vmem:[%s604 + $0x30] sm:$0xff]
  %v612 = vld [vmem:[%s604 + $0x38] sm:$0xff]
  %614 = vset.pattern.permute.xlu0 0
  %615 = vperm.xlu0 %614, %v605
  %v616 = vpop.permute.xlu0 %615
  %619 = vset.pattern.permute.xlu0 0
  %620 = vperm.xlu0 %619, %v606
  %v621 = vpop.permute.xlu0 %620
  %624 = vset.pattern.permute.xlu0 0
  %625 = vperm.xlu0 %624, %v607
  %v626 = vpop.permute.xlu0 %625
  %629 = vset.pattern.permute.xlu0 0
  %630 = vperm.xlu0 %629, %v608
  %v631 = vpop.permute.xlu0 %630
  %634 = vset.pattern.permute.xlu0 0
  %635 = vperm.xlu0 %634, %v609
  %v636 = vpop.permute.xlu0 %635
  %639 = vset.pattern.permute.xlu0 0
  %640 = vperm.xlu0 %639, %v610
  %v641 = vpop.permute.xlu0 %640
  %644 = vset.pattern.permute.xlu0 0
  %645 = vperm.xlu0 %644, %v611
  %v646 = vpop.permute.xlu0 %645
  %649 = vset.pattern.permute.xlu0 0
  %650 = vperm.xlu0 %649, %v612
  %v651 = vpop.permute.xlu0 %650
  %v654 = vsel %vm86, %v596, 0
  %v657 = vsel %vm86, %v597, 0
  %v660 = vsel %vm86, %v598, 0
  %v663 = vsel %vm86, %v599, 0
  %v666 = vsel %vm86, %v600, 0
  %v669 = vsel %vm86, %v601, 0
  %v672 = vsel %vm86, %v602, 0
  %v675 = vsel %vm86, %v603, 0
  %677 = vmatprep.subr.mxu0 0.0
  %678 = vmatpush1.msra.mxu0 0.0
  %679 = vmatprep.subr.mxu0 0.0
  %680 = vmatpush1.msra.mxu0 0.0
  %681 = vmatprep.subr.mxu0 0.0
  %682 = vmatpush1.msra.mxu0 0.0
  %683 = vmatprep.subr.mxu0 0.0
  %684 = vmatpush1.msra.mxu0 0.0
  %685 = vmatprep.subr.mxu0 0.0
  %686 = vmatpush1.msra.mxu0 0.0
  %687 = vmatprep.subr.mxu0 0.0
  %688 = vmatpush1.msra.mxu0 0.0
  %689 = vmatprep.subr.mxu0 0.0
  %690 = vmatpush1.msra.mxu0 0.0
  %691 = vmatprep.subr.mxu0 0.0
  %692 = vmatpush1.msra.mxu0 0.0
  %693 = vmatprep.subr.mxu0 0.0
  %694 = vmatpush1.msra.mxu0 0.0
  %695 = vmatprep.subr.mxu0 0.0
  %696 = vmatpush1.msra.mxu0 0.0
  %697 = vmatprep.subr.mxu0 0.0
  %698 = vmatpush1.msra.mxu0 0.0
  %699 = vmatprep.subr.mxu0 0.0
  %700 = vmatpush1.msra.mxu0 0.0
  %701 = vmatprep.subr.mxu0 0.0
  %702 = vmatpush1.msra.mxu0 0.0
  %703 = vmatprep.subr.mxu0 0.0
  %704 = vmatpush1.msra.mxu0 0.0
  %705 = vmatprep.subr.mxu0 0.0
  %706 = vmatpush1.msra.mxu0 %v586
  %707 = vmatprep.subr.mxu0 0.0
  %708 = vmatpush1.msra.mxu0 %v585
  %709 = vmatprep.subr.mxu0 0.0
  %710 = vmatpush2.msra.mxu0 0.0
  %711 = vmatprep.subr.mxu0 0.0
  %712 = vmatpush2.msra.mxu0 0.0
  %713 = vmatprep.subr.mxu0 0.0
  %714 = vmatpush2.msra.mxu0 0.0
  %715 = vmatprep.subr.mxu0 0.0
  %716 = vmatpush2.msra.mxu0 0.0
  %717 = vmatprep.subr.mxu0 0.0
  %718 = vmatpush2.msra.mxu0 0.0
  %719 = vmatprep.subr.mxu0 0.0
  %720 = vmatpush2.msra.mxu0 0.0
  %721 = vmatprep.subr.mxu0 0.0
  %722 = vmatpush2.msra.mxu0 0.0
  %723 = vmatprep.subr.mxu0 0.0
  %724 = vmatpush2.msra.mxu0 0.0
  %725 = vmatprep.subr.mxu0 0.0
  %726 = vmatpush2.msra.mxu0 0.0
  %727 = vmatprep.subr.mxu0 0.0
  %728 = vmatpush2.msra.mxu0 0.0
  %729 = vmatprep.subr.mxu0 0.0
  %730 = vmatpush2.msra.mxu0 0.0
  %731 = vmatprep.subr.mxu0 0.0
  %732 = vmatpush2.msra.mxu0 0.0
  %733 = vmatprep.subr.mxu0 0.0
  %734 = vmatpush2.msra.mxu0 0.0
  %735 = vmatprep.subr.mxu0 0.0
  %736 = vmatpush2.msra.mxu0 0.0
  %737 = vmatprep.subr.mxu0 0.0
  %738 = vmatpush2.msra.mxu0 0.0
  %739 = vmatprep.subr.mxu0 0.0
  %740 = vmatpush2.msra.mxu0 0.0
  %741 = vmatprep.mubr.f32.mxu0 0.0
  %742 = vmatmul.mubr.f32.gmra.mxu0 %v654
  %v743 = vpop.f32.mrf.mxu0
  %v744 = vadd.f32 %v616, %v743
  %v745 = vpop.f32.mrf.mxu0
  %746 = vmatprep.mubr.f32.mxu0 0.0
  %747 = vmatmul.mubr.f32.gmra.mxu0 %v657
  %v748 = vpop.f32.mrf.mxu0
  %v749 = vadd.f32 %v621, %v748
  %v750 = vpop.f32.mrf.mxu0
  %751 = vmatprep.mubr.f32.mxu0 0.0
  %752 = vmatmul.mubr.f32.gmra.mxu0 %v660
  %v753 = vpop.f32.mrf.mxu0
  %v754 = vadd.f32 %v626, %v753
  %v755 = vpop.f32.mrf.mxu0
  %756 = vmatprep.mubr.f32.mxu0 0.0
  %757 = vmatmul.mubr.f32.gmra.mxu0 %v663
  %v758 = vpop.f32.mrf.mxu0
  %v759 = vadd.f32 %v631, %v758
  %v760 = vpop.f32.mrf.mxu0
  %761 = vmatprep.mubr.f32.mxu0 0.0
  %762 = vmatmul.mubr.f32.gmra.mxu0 %v666
  %v763 = vpop.f32.mrf.mxu0
  %v764 = vadd.f32 %v636, %v763
  %v765 = vpop.f32.mrf.mxu0
  %766 = vmatprep.mubr.f32.mxu0 0.0
  %767 = vmatmul.mubr.f32.gmra.mxu0 %v669
  %v768 = vpop.f32.mrf.mxu0
  %v769 = vadd.f32 %v641, %v768
  %v770 = vpop.f32.mrf.mxu0
  %771 = vmatprep.mubr.f32.mxu0 0.0
  %772 = vmatmul.mubr.f32.gmra.mxu0 %v672
  %v773 = vpop.f32.mrf.mxu0
  %v774 = vadd.f32 %v646, %v773
  %v775 = vpop.f32.mrf.mxu0
  %776 = vmatprep.mubr.f32.mxu0 0.0
  %777 = vmatmul.mubr.f32.gmra.mxu0 %v675
  %v778 = vpop.f32.mrf.mxu0
  %v779 = vadd.f32 %v651, %v778
  %v780 = vpop.f32.mrf.mxu0
  %781 = vdwg.mxu0
  %vm782 = vcmp.gt.f32.partialorder %v744, 0.0
  %vm783 = vcmp.gt.f32.partialorder %v749, 0.0
  %vm784 = vcmp.gt.f32.partialorder %v754, 0.0
  %vm785 = vcmp.gt.f32.partialorder %v759, 0.0
  %vm786 = vcmp.gt.f32.partialorder %v764, 0.0
  %vm787 = vcmp.gt.f32.partialorder %v769, 0.0
  %vm788 = vcmp.gt.f32.partialorder %v774, 0.0
  %vm789 = vcmp.gt.f32.partialorder %v779, 0.0
  %v790 = vmul.f32 %v744, 0.01
  %v791 = vmul.f32 %v749, 0.01
  %v792 = vmul.f32 %v754, 0.01
  %v793 = vmul.f32 %v759, 0.01
  %v794 = vmul.f32 %v764, 0.01
  %v795 = vmul.f32 %v769, 0.01
  %v796 = vmul.f32 %v774, 0.01
  %v797 = vmul.f32 %v779, 0.01
  %v798 = vsel %vm782, %v744, %v790
  %v799 = vsel %vm783, %v749, %v791
  %v800 = vsel %vm784, %v754, %v792
  %v801 = vsel %vm785, %v759, %v793
  %v802 = vsel %vm786, %v764, %v794
  %v803 = vsel %vm787, %v769, %v795
  %v804 = vsel %vm788, %v774, %v796
  %v805 = vsel %vm789, %v779, %v797
  %s806 = scalar_lea.vmem %s3, 64
  %v807 = vld [vmem:[%s806] sm:$0xff]
  %v808 = vld [vmem:[%s806 + $0x8] sm:$0xff]
  %v809 = vld [vmem:[%s806 + $0x10] sm:$0xff]
  %v810 = vld [vmem:[%s806 + $0x18] sm:$0xff]
  %v811 = vld [vmem:[%s806 + $0x20] sm:$0xff]
  %v812 = vld [vmem:[%s806 + $0x28] sm:$0xff]
  %v813 = vld [vmem:[%s806 + $0x30] sm:$0xff]
  %v814 = vld [vmem:[%s806 + $0x38] sm:$0xff]
  %s815 = scalar_lea.vmem %s4, 64
  %v816 = vld [vmem:[%s815] sm:$0xff]
  %v817 = vld [vmem:[%s815 + $0x8] sm:$0xff]
  %v818 = vld [vmem:[%s815 + $0x10] sm:$0xff]
  %v819 = vld [vmem:[%s815 + $0x18] sm:$0xff]
  %v820 = vld [vmem:[%s815 + $0x20] sm:$0xff]
  %v821 = vld [vmem:[%s815 + $0x28] sm:$0xff]
  %v822 = vld [vmem:[%s815 + $0x30] sm:$0xff]
  %v823 = vld [vmem:[%s815 + $0x38] sm:$0xff]
  %825 = vset.pattern.permute.xlu0 0
  %826 = vperm.xlu0 %825, %v816
  %v827 = vpop.permute.xlu0 %826
  %830 = vset.pattern.permute.xlu0 0
  %831 = vperm.xlu0 %830, %v817
  %v832 = vpop.permute.xlu0 %831
  %835 = vset.pattern.permute.xlu0 0
  %836 = vperm.xlu0 %835, %v818
  %v837 = vpop.permute.xlu0 %836
  %840 = vset.pattern.permute.xlu0 0
  %841 = vperm.xlu0 %840, %v819
  %v842 = vpop.permute.xlu0 %841
  %845 = vset.pattern.permute.xlu0 0
  %846 = vperm.xlu0 %845, %v820
  %v847 = vpop.permute.xlu0 %846
  %850 = vset.pattern.permute.xlu0 0
  %851 = vperm.xlu0 %850, %v821
  %v852 = vpop.permute.xlu0 %851
  %855 = vset.pattern.permute.xlu0 0
  %856 = vperm.xlu0 %855, %v822
  %v857 = vpop.permute.xlu0 %856
  %860 = vset.pattern.permute.xlu0 0
  %861 = vperm.xlu0 %860, %v823
  %v862 = vpop.permute.xlu0 %861
  %v865 = vsel %vm296, %v807, 0
  %v868 = vsel %vm296, %v808, 0
  %v871 = vsel %vm296, %v809, 0
  %v874 = vsel %vm296, %v810, 0
  %v877 = vsel %vm296, %v811, 0
  %v880 = vsel %vm296, %v812, 0
  %v883 = vsel %vm296, %v813, 0
  %v886 = vsel %vm296, %v814, 0
  %888 = vmatprep.subr.mxu0 0.0
  %889 = vmatpush1.msra.mxu0 0.0
  %890 = vmatprep.subr.mxu0 0.0
  %891 = vmatpush1.msra.mxu0 0.0
  %892 = vmatprep.subr.mxu0 0.0
  %893 = vmatpush1.msra.mxu0 0.0
  %894 = vmatprep.subr.mxu0 0.0
  %895 = vmatpush1.msra.mxu0 0.0
  %896 = vmatprep.subr.mxu0 0.0
  %897 = vmatpush1.msra.mxu0 0.0
  %898 = vmatprep.subr.mxu0 0.0
  %899 = vmatpush1.msra.mxu0 0.0
  %900 = vmatprep.subr.mxu0 0.0
  %901 = vmatpush1.msra.mxu0 0.0
  %902 = vmatprep.subr.mxu0 0.0
  %903 = vmatpush1.msra.mxu0 0.0
  %904 = vmatprep.subr.mxu0 0.0
  %905 = vmatpush1.msra.mxu0 %v805
  %906 = vmatprep.subr.mxu0 0.0
  %907 = vmatpush1.msra.mxu0 %v804
  %908 = vmatprep.subr.mxu0 0.0
  %909 = vmatpush1.msra.mxu0 %v803
  %910 = vmatprep.subr.mxu0 0.0
  %911 = vmatpush1.msra.mxu0 %v802
  %912 = vmatprep.subr.mxu0 0.0
  %913 = vmatpush1.msra.mxu0 %v801
  %914 = vmatprep.subr.mxu0 0.0
  %915 = vmatpush1.msra.mxu0 %v800
  %916 = vmatprep.subr.mxu0 0.0
  %917 = vmatpush1.msra.mxu0 %v799
  %918 = vmatprep.subr.mxu0 0.0
  %919 = vmatpush1.msra.mxu0 %v798
  %920 = vmatprep.subr.mxu0 0.0
  %921 = vmatpush2.msra.mxu0 0.0
  %922 = vmatprep.subr.mxu0 0.0
  %923 = vmatpush2.msra.mxu0 0.0
  %924 = vmatprep.subr.mxu0 0.0
  %925 = vmatpush2.msra.mxu0 0.0
  %926 = vmatprep.subr.mxu0 0.0
  %927 = vmatpush2.msra.mxu0 0.0
  %928 = vmatprep.subr.mxu0 0.0
  %929 = vmatpush2.msra.mxu0 0.0
  %930 = vmatprep.subr.mxu0 0.0
  %931 = vmatpush2.msra.mxu0 0.0
  %932 = vmatprep.subr.mxu0 0.0
  %933 = vmatpush2.msra.mxu0 0.0
  %934 = vmatprep.subr.mxu0 0.0
  %935 = vmatpush2.msra.mxu0 0.0
  %936 = vmatprep.subr.mxu0 0.0
  %937 = vmatpush2.msra.mxu0 0.0
  %938 = vmatprep.subr.mxu0 0.0
  %939 = vmatpush2.msra.mxu0 0.0
  %940 = vmatprep.subr.mxu0 0.0
  %941 = vmatpush2.msra.mxu0 0.0
  %942 = vmatprep.subr.mxu0 0.0
  %943 = vmatpush2.msra.mxu0 0.0
  %944 = vmatprep.subr.mxu0 0.0
  %945 = vmatpush2.msra.mxu0 0.0
  %946 = vmatprep.subr.mxu0 0.0
  %947 = vmatpush2.msra.mxu0 0.0
  %948 = vmatprep.subr.mxu0 0.0
  %949 = vmatpush2.msra.mxu0 0.0
  %950 = vmatprep.subr.mxu0 0.0
  %951 = vmatpush2.msra.mxu0 0.0
  %952 = vmatprep.mubr.f32.mxu0 0.0
  %953 = vmatmul.mubr.f32.gmra.mxu0 %v865
  %v954 = vpop.f32.mrf.mxu0
  %v955 = vadd.f32 %v827, %v954
  %v956 = vpop.f32.mrf.mxu0
  %957 = vmatprep.mubr.f32.mxu0 0.0
  %958 = vmatmul.mubr.f32.gmra.mxu0 %v868
  %v959 = vpop.f32.mrf.mxu0
  %v960 = vadd.f32 %v832, %v959
  %v961 = vpop.f32.mrf.mxu0
  %962 = vmatprep.mubr.f32.mxu0 0.0
  %963 = vmatmul.mubr.f32.gmra.mxu0 %v871
  %v964 = vpop.f32.mrf.mxu0
  %v965 = vadd.f32 %v837, %v964
  %v966 = vpop.f32.mrf.mxu0
  %967 = vmatprep.mubr.f32.mxu0 0.0
  %968 = vmatmul.mubr.f32.gmra.mxu0 %v874
  %v969 = vpop.f32.mrf.mxu0
  %v970 = vadd.f32 %v842, %v969
  %v971 = vpop.f32.mrf.mxu0
  %972 = vmatprep.mubr.f32.mxu0 0.0
  %973 = vmatmul.mubr.f32.gmra.mxu0 %v877
  %v974 = vpop.f32.mrf.mxu0
  %v975 = vadd.f32 %v847, %v974
  %v976 = vpop.f32.mrf.mxu0
  %977 = vmatprep.mubr.f32.mxu0 0.0
  %978 = vmatmul.mubr.f32.gmra.mxu0 %v880
  %v979 = vpop.f32.mrf.mxu0
  %v980 = vadd.f32 %v852, %v979
  %v981 = vpop.f32.mrf.mxu0
  %982 = vmatprep.mubr.f32.mxu0 0.0
  %983 = vmatmul.mubr.f32.gmra.mxu0 %v883
  %v984 = vpop.f32.mrf.mxu0
  %v985 = vadd.f32 %v857, %v984
  %v986 = vpop.f32.mrf.mxu0
  %987 = vmatprep.mubr.f32.mxu0 0.0
  %988 = vmatmul.mubr.f32.gmra.mxu0 %v886
  %v989 = vpop.f32.mrf.mxu0
  %v990 = vadd.f32 %v862, %v989
  %v991 = vpop.f32.mrf.mxu0
  %992 = vdwg.mxu0
  %vm993 = vcmp.gt.f32.partialorder %v955, 0.0
  %vm994 = vcmp.gt.f32.partialorder %v960, 0.0
  %vm995 = vcmp.gt.f32.partialorder %v965, 0.0
  %vm996 = vcmp.gt.f32.partialorder %v970, 0.0
  %vm997 = vcmp.gt.f32.partialorder %v975, 0.0
  %vm998 = vcmp.gt.f32.partialorder %v980, 0.0
  %vm999 = vcmp.gt.f32.partialorder %v985, 0.0
  %vm1000 = vcmp.gt.f32.partialorder %v990, 0.0
  %v1001 = vmul.f32 %v955, 0.01
  %v1002 = vmul.f32 %v960, 0.01
  %v1003 = vmul.f32 %v965, 0.01
  %v1004 = vmul.f32 %v970, 0.01
  %v1005 = vmul.f32 %v975, 0.01
  %v1006 = vmul.f32 %v980, 0.01
  %v1007 = vmul.f32 %v985, 0.01
  %v1008 = vmul.f32 %v990, 0.01
  %v1009 = vsel %vm993, %v955, %v1001
  %v1010 = vsel %vm994, %v960, %v1002
  %v1011 = vsel %vm995, %v965, %v1003
  %v1012 = vsel %vm996, %v970, %v1004
  %v1013 = vsel %vm997, %v975, %v1005
  %v1014 = vsel %vm998, %v980, %v1006
  %v1015 = vsel %vm999, %v985, %v1007
  %v1016 = vsel %vm1000, %v990, %v1008
  %s1017 = scalar_lea.vmem %s5, 32
  %v1018 = vld [vmem:[%s1017] sm:$0xff]
  %v1019 = vld [vmem:[%s1017 + $0x8] sm:$0xff]
  %v1020 = vld [vmem:[%s1017 + $0x10] sm:$0xff]
  %v1021 = vld [vmem:[%s1017 + $0x18] sm:$0xff]
  %s1022 = scalar_lea.vmem %s6, 32
  %v1023 = vld [vmem:[%s1022] sm:$0xff]
  %v1024 = vld [vmem:[%s1022 + $0x8] sm:$0xff]
  %v1025 = vld [vmem:[%s1022 + $0x10] sm:$0xff]
  %v1026 = vld [vmem:[%s1022 + $0x18] sm:$0xff]
  %1028 = vset.pattern.permute.xlu0 0
  %1029 = vperm.xlu0 %1028, %v1023
  %v1030 = vpop.permute.xlu0 %1029
  %1033 = vset.pattern.permute.xlu0 0
  %1034 = vperm.xlu0 %1033, %v1024
  %v1035 = vpop.permute.xlu0 %1034
  %1038 = vset.pattern.permute.xlu0 0
  %1039 = vperm.xlu0 %1038, %v1025
  %v1040 = vpop.permute.xlu0 %1039
  %1043 = vset.pattern.permute.xlu0 0
  %1044 = vperm.xlu0 %1043, %v1026
  %v1045 = vpop.permute.xlu0 %1044
  %v1048 = vsel %vm296, %v1018, 0
  %v1051 = vsel %vm296, %v1019, 0
  %v1054 = vsel %vm296, %v1020, 0
  %v1057 = vsel %vm296, %v1021, 0
  %1059 = vmatprep.subr.mxu0 0.0
  %1060 = vmatpush1.msra.mxu0 0.0
  %1061 = vmatprep.subr.mxu0 0.0
  %1062 = vmatpush1.msra.mxu0 0.0
  %1063 = vmatprep.subr.mxu0 0.0
  %1064 = vmatpush1.msra.mxu0 0.0
  %1065 = vmatprep.subr.mxu0 0.0
  %1066 = vmatpush1.msra.mxu0 0.0
  %1067 = vmatprep.subr.mxu0 0.0
  %1068 = vmatpush1.msra.mxu0 0.0
  %1069 = vmatprep.subr.mxu0 0.0
  %1070 = vmatpush1.msra.mxu0 0.0
  %1071 = vmatprep.subr.mxu0 0.0
  %1072 = vmatpush1.msra.mxu0 0.0
  %1073 = vmatprep.subr.mxu0 0.0
  %1074 = vmatpush1.msra.mxu0 0.0
  %1075 = vmatprep.subr.mxu0 0.0
  %1076 = vmatpush1.msra.mxu0 %v1016
  %1077 = vmatprep.subr.mxu0 0.0
  %1078 = vmatpush1.msra.mxu0 %v1015
  %1079 = vmatprep.subr.mxu0 0.0
  %1080 = vmatpush1.msra.mxu0 %v1014
  %1081 = vmatprep.subr.mxu0 0.0
  %1082 = vmatpush1.msra.mxu0 %v1013
  %1083 = vmatprep.subr.mxu0 0.0
  %1084 = vmatpush1.msra.mxu0 %v1012
  %1085 = vmatprep.subr.mxu0 0.0
  %1086 = vmatpush1.msra.mxu0 %v1011
  %1087 = vmatprep.subr.mxu0 0.0
  %1088 = vmatpush1.msra.mxu0 %v1010
  %1089 = vmatprep.subr.mxu0 0.0
  %1090 = vmatpush1.msra.mxu0 %v1009
  %1091 = vmatprep.subr.mxu0 0.0
  %1092 = vmatpush2.msra.mxu0 0.0
  %1093 = vmatprep.subr.mxu0 0.0
  %1094 = vmatpush2.msra.mxu0 0.0
  %1095 = vmatprep.subr.mxu0 0.0
  %1096 = vmatpush2.msra.mxu0 0.0
  %1097 = vmatprep.subr.mxu0 0.0
  %1098 = vmatpush2.msra.mxu0 0.0
  %1099 = vmatprep.subr.mxu0 0.0
  %1100 = vmatpush2.msra.mxu0 0.0
  %1101 = vmatprep.subr.mxu0 0.0
  %1102 = vmatpush2.msra.mxu0 0.0
  %1103 = vmatprep.subr.mxu0 0.0
  %1104 = vmatpush2.msra.mxu0 0.0
  %1105 = vmatprep.subr.mxu0 0.0
  %1106 = vmatpush2.msra.mxu0 0.0
  %1107 = vmatprep.subr.mxu0 0.0
  %1108 = vmatpush2.msra.mxu0 0.0
  %1109 = vmatprep.subr.mxu0 0.0
  %1110 = vmatpush2.msra.mxu0 0.0
  %1111 = vmatprep.subr.mxu0 0.0
  %1112 = vmatpush2.msra.mxu0 0.0
  %1113 = vmatprep.subr.mxu0 0.0
  %1114 = vmatpush2.msra.mxu0 0.0
  %1115 = vmatprep.subr.mxu0 0.0
  %1116 = vmatpush2.msra.mxu0 0.0
  %1117 = vmatprep.subr.mxu0 0.0
  %1118 = vmatpush2.msra.mxu0 0.0
  %1119 = vmatprep.subr.mxu0 0.0
  %1120 = vmatpush2.msra.mxu0 0.0
  %1121 = vmatprep.subr.mxu0 0.0
  %1122 = vmatpush2.msra.mxu0 0.0
  %1123 = vmatprep.mubr.f32.mxu0 0.0
  %1124 = vmatmul.mubr.f32.gmra.mxu0 %v1048
  %v1125 = vpop.f32.mrf.mxu0
  %v1126 = vadd.f32 %v1030, %v1125
  %v1127 = vpop.f32.mrf.mxu0
  %1128 = vmatprep.mubr.f32.mxu0 0.0
  %1129 = vmatmul.mubr.f32.gmra.mxu0 %v1051
  %v1130 = vpop.f32.mrf.mxu0
  %v1131 = vadd.f32 %v1035, %v1130
  %v1132 = vpop.f32.mrf.mxu0
  %1133 = vmatprep.mubr.f32.mxu0 0.0
  %1134 = vmatmul.mubr.f32.gmra.mxu0 %v1054
  %v1135 = vpop.f32.mrf.mxu0
  %v1136 = vadd.f32 %v1040, %v1135
  %v1137 = vpop.f32.mrf.mxu0
  %1138 = vmatprep.mubr.f32.mxu0 0.0
  %1139 = vmatmul.mubr.f32.gmra.mxu0 %v1057
  %v1140 = vpop.f32.mrf.mxu0
  %v1141 = vadd.f32 %v1045, %v1140
  %v1142 = vpop.f32.mrf.mxu0
  %1143 = vdwg.mxu0
  %v1144 = vmax.f32 %v1136, -5.0
  %v1145 = vmax.f32 %v1141, -5.0
  %v1146 = vmin.f32 %v1144, 5.0
  %v1147 = vmin.f32 %v1145, 5.0
  %v1148 = vmul.f32 %v1146, 1.442695
  %v1149 = vpow.pop %v1148
  %v1150 = vmul.f32 %v1147, 1.442695
  %v1151 = vpow.pop %v1150
  %v1152 = vmul.f32 %v1149, %v585
  %v1153 = vmul.f32 %v1151, %v586
  %v1154 = vadd.f32 %v1152, %v1126
  %v1155 = vadd.f32 %v1153, %v1131
  %v1156 = vadd.f32 %v1146, %v1147
  %v1157 = vrot.slane %v1156, 4
  %v1158 = vadd.f32 %v1156, %v1157
  %v1159 = vrot.slane %v1158, 2
  %v1160 = vadd.f32 %v1158, %v1159
  %v1161 = vrot.slane %v1160, 1
  %v1162 = vadd.f32 %v1160, %v1161
  %v1163 = vadd.f32 %v594, %v1162
  %s1164 = scalar_lea.vmem %s1, 128
  %v1165 = vld [vmem:[%s1164] sm:$0xff]
  %v1166 = vld [vmem:[%s1164 + $0x8] sm:$0xff]
  %v1167 = vld [vmem:[%s1164 + $0x10] sm:$0xff]
  %v1168 = vld [vmem:[%s1164 + $0x18] sm:$0xff]
  %v1169 = vld [vmem:[%s1164 + $0x20] sm:$0xff]
  %v1170 = vld [vmem:[%s1164 + $0x28] sm:$0xff]
  %v1171 = vld [vmem:[%s1164 + $0x30] sm:$0xff]
  %v1172 = vld [vmem:[%s1164 + $0x38] sm:$0xff]
  %s1173 = scalar_lea.vmem %s2, 128
  %v1174 = vld [vmem:[%s1173] sm:$0xff]
  %v1175 = vld [vmem:[%s1173 + $0x8] sm:$0xff]
  %v1176 = vld [vmem:[%s1173 + $0x10] sm:$0xff]
  %v1177 = vld [vmem:[%s1173 + $0x18] sm:$0xff]
  %v1178 = vld [vmem:[%s1173 + $0x20] sm:$0xff]
  %v1179 = vld [vmem:[%s1173 + $0x28] sm:$0xff]
  %v1180 = vld [vmem:[%s1173 + $0x30] sm:$0xff]
  %v1181 = vld [vmem:[%s1173 + $0x38] sm:$0xff]
  %1183 = vset.pattern.permute.xlu0 0
  %1184 = vperm.xlu0 %1183, %v1174
  %v1185 = vpop.permute.xlu0 %1184
  %1188 = vset.pattern.permute.xlu0 0
  %1189 = vperm.xlu0 %1188, %v1175
  %v1190 = vpop.permute.xlu0 %1189
  %1193 = vset.pattern.permute.xlu0 0
  %1194 = vperm.xlu0 %1193, %v1176
  %v1195 = vpop.permute.xlu0 %1194
  %1198 = vset.pattern.permute.xlu0 0
  %1199 = vperm.xlu0 %1198, %v1177
  %v1200 = vpop.permute.xlu0 %1199
  %1203 = vset.pattern.permute.xlu0 0
  %1204 = vperm.xlu0 %1203, %v1178
  %v1205 = vpop.permute.xlu0 %1204
  %1208 = vset.pattern.permute.xlu0 0
  %1209 = vperm.xlu0 %1208, %v1179
  %v1210 = vpop.permute.xlu0 %1209
  %1213 = vset.pattern.permute.xlu0 0
  %1214 = vperm.xlu0 %1213, %v1180
  %v1215 = vpop.permute.xlu0 %1214
  %1218 = vset.pattern.permute.xlu0 0
  %1219 = vperm.xlu0 %1218, %v1181
  %v1220 = vpop.permute.xlu0 %1219
  %v1223 = vsel %vm86, %v1165, 0
  %v1226 = vsel %vm86, %v1166, 0
  %v1229 = vsel %vm86, %v1167, 0
  %v1232 = vsel %vm86, %v1168, 0
  %v1235 = vsel %vm86, %v1169, 0
  %v1238 = vsel %vm86, %v1170, 0
  %v1241 = vsel %vm86, %v1171, 0
  %v1244 = vsel %vm86, %v1172, 0
  %1246 = vmatprep.subr.mxu0 0.0
  %1247 = vmatpush1.msra.mxu0 0.0
  %1248 = vmatprep.subr.mxu0 0.0
  %1249 = vmatpush1.msra.mxu0 0.0
  %1250 = vmatprep.subr.mxu0 0.0
  %1251 = vmatpush1.msra.mxu0 0.0
  %1252 = vmatprep.subr.mxu0 0.0
  %1253 = vmatpush1.msra.mxu0 0.0
  %1254 = vmatprep.subr.mxu0 0.0
  %1255 = vmatpush1.msra.mxu0 0.0
  %1256 = vmatprep.subr.mxu0 0.0
  %1257 = vmatpush1.msra.mxu0 0.0
  %1258 = vmatprep.subr.mxu0 0.0
  %1259 = vmatpush1.msra.mxu0 0.0
  %1260 = vmatprep.subr.mxu0 0.0
  %1261 = vmatpush1.msra.mxu0 0.0
  %1262 = vmatprep.subr.mxu0 0.0
  %1263 = vmatpush1.msra.mxu0 0.0
  %1264 = vmatprep.subr.mxu0 0.0
  %1265 = vmatpush1.msra.mxu0 0.0
  %1266 = vmatprep.subr.mxu0 0.0
  %1267 = vmatpush1.msra.mxu0 0.0
  %1268 = vmatprep.subr.mxu0 0.0
  %1269 = vmatpush1.msra.mxu0 0.0
  %1270 = vmatprep.subr.mxu0 0.0
  %1271 = vmatpush1.msra.mxu0 0.0
  %1272 = vmatprep.subr.mxu0 0.0
  %1273 = vmatpush1.msra.mxu0 0.0
  %1274 = vmatprep.subr.mxu0 0.0
  %1275 = vmatpush1.msra.mxu0 %v1155
  %1276 = vmatprep.subr.mxu0 0.0
  %1277 = vmatpush1.msra.mxu0 %v1154
  %1278 = vmatprep.subr.mxu0 0.0
  %1279 = vmatpush2.msra.mxu0 0.0
  %1280 = vmatprep.subr.mxu0 0.0
  %1281 = vmatpush2.msra.mxu0 0.0
  %1282 = vmatprep.subr.mxu0 0.0
  %1283 = vmatpush2.msra.mxu0 0.0
  %1284 = vmatprep.subr.mxu0 0.0
  %1285 = vmatpush2.msra.mxu0 0.0
  %1286 = vmatprep.subr.mxu0 0.0
  %1287 = vmatpush2.msra.mxu0 0.0
  %1288 = vmatprep.subr.mxu0 0.0
  %1289 = vmatpush2.msra.mxu0 0.0
  %1290 = vmatprep.subr.mxu0 0.0
  %1291 = vmatpush2.msra.mxu0 0.0
  %1292 = vmatprep.subr.mxu0 0.0
  %1293 = vmatpush2.msra.mxu0 0.0
  %1294 = vmatprep.subr.mxu0 0.0
  %1295 = vmatpush2.msra.mxu0 0.0
  %1296 = vmatprep.subr.mxu0 0.0
  %1297 = vmatpush2.msra.mxu0 0.0
  %1298 = vmatprep.subr.mxu0 0.0
  %1299 = vmatpush2.msra.mxu0 0.0
  %1300 = vmatprep.subr.mxu0 0.0
  %1301 = vmatpush2.msra.mxu0 0.0
  %1302 = vmatprep.subr.mxu0 0.0
  %1303 = vmatpush2.msra.mxu0 0.0
  %1304 = vmatprep.subr.mxu0 0.0
  %1305 = vmatpush2.msra.mxu0 0.0
  %1306 = vmatprep.subr.mxu0 0.0
  %1307 = vmatpush2.msra.mxu0 0.0
  %1308 = vmatprep.subr.mxu0 0.0
  %1309 = vmatpush2.msra.mxu0 0.0
  %1310 = vmatprep.mubr.f32.mxu0 0.0
  %1311 = vmatmul.mubr.f32.gmra.mxu0 %v1223
  %v1312 = vpop.f32.mrf.mxu0
  %v1313 = vadd.f32 %v1185, %v1312
  %v1314 = vpop.f32.mrf.mxu0
  %1315 = vmatprep.mubr.f32.mxu0 0.0
  %1316 = vmatmul.mubr.f32.gmra.mxu0 %v1226
  %v1317 = vpop.f32.mrf.mxu0
  %v1318 = vadd.f32 %v1190, %v1317
  %v1319 = vpop.f32.mrf.mxu0
  %1320 = vmatprep.mubr.f32.mxu0 0.0
  %1321 = vmatmul.mubr.f32.gmra.mxu0 %v1229
  %v1322 = vpop.f32.mrf.mxu0
  %v1323 = vadd.f32 %v1195, %v1322
  %v1324 = vpop.f32.mrf.mxu0
  %1325 = vmatprep.mubr.f32.mxu0 0.0
  %1326 = vmatmul.mubr.f32.gmra.mxu0 %v1232
  %v1327 = vpop.f32.mrf.mxu0
  %v1328 = vadd.f32 %v1200, %v1327
  %v1329 = vpop.f32.mrf.mxu0
  %1330 = vmatprep.mubr.f32.mxu0 0.0
  %1331 = vmatmul.mubr.f32.gmra.mxu0 %v1235
  %v1332 = vpop.f32.mrf.mxu0
  %v1333 = vadd.f32 %v1205, %v1332
  %v1334 = vpop.f32.mrf.mxu0
  %1335 = vmatprep.mubr.f32.mxu0 0.0
  %1336 = vmatmul.mubr.f32.gmra.mxu0 %v1238
  %v1337 = vpop.f32.mrf.mxu0
  %v1338 = vadd.f32 %v1210, %v1337
  %v1339 = vpop.f32.mrf.mxu0
  %1340 = vmatprep.mubr.f32.mxu0 0.0
  %1341 = vmatmul.mubr.f32.gmra.mxu0 %v1241
  %v1342 = vpop.f32.mrf.mxu0
  %v1343 = vadd.f32 %v1215, %v1342
  %v1344 = vpop.f32.mrf.mxu0
  %1345 = vmatprep.mubr.f32.mxu0 0.0
  %1346 = vmatmul.mubr.f32.gmra.mxu0 %v1244
  %v1347 = vpop.f32.mrf.mxu0
  %v1348 = vadd.f32 %v1220, %v1347
  %v1349 = vpop.f32.mrf.mxu0
  %1350 = vdwg.mxu0
  %vm1351 = vcmp.gt.f32.partialorder %v1313, 0.0
  %vm1352 = vcmp.gt.f32.partialorder %v1318, 0.0
  %vm1353 = vcmp.gt.f32.partialorder %v1323, 0.0
  %vm1354 = vcmp.gt.f32.partialorder %v1328, 0.0
  %vm1355 = vcmp.gt.f32.partialorder %v1333, 0.0
  %vm1356 = vcmp.gt.f32.partialorder %v1338, 0.0
  %vm1357 = vcmp.gt.f32.partialorder %v1343, 0.0
  %vm1358 = vcmp.gt.f32.partialorder %v1348, 0.0
  %v1359 = vmul.f32 %v1313, 0.01
  %v1360 = vmul.f32 %v1318, 0.01
  %v1361 = vmul.f32 %v1323, 0.01
  %v1362 = vmul.f32 %v1328, 0.01
  %v1363 = vmul.f32 %v1333, 0.01
  %v1364 = vmul.f32 %v1338, 0.01
  %v1365 = vmul.f32 %v1343, 0.01
  %v1366 = vmul.f32 %v1348, 0.01
  %v1367 = vsel %vm1351, %v1313, %v1359
  %v1368 = vsel %vm1352, %v1318, %v1360
  %v1369 = vsel %vm1353, %v1323, %v1361
  %v1370 = vsel %vm1354, %v1328, %v1362
  %v1371 = vsel %vm1355, %v1333, %v1363
  %v1372 = vsel %vm1356, %v1338, %v1364
  %v1373 = vsel %vm1357, %v1343, %v1365
  %v1374 = vsel %vm1358, %v1348, %v1366
  %s1375 = scalar_lea.vmem %s3, 128
  %v1376 = vld [vmem:[%s1375] sm:$0xff]
  %v1377 = vld [vmem:[%s1375 + $0x8] sm:$0xff]
  %v1378 = vld [vmem:[%s1375 + $0x10] sm:$0xff]
  %v1379 = vld [vmem:[%s1375 + $0x18] sm:$0xff]
  %v1380 = vld [vmem:[%s1375 + $0x20] sm:$0xff]
  %v1381 = vld [vmem:[%s1375 + $0x28] sm:$0xff]
  %v1382 = vld [vmem:[%s1375 + $0x30] sm:$0xff]
  %v1383 = vld [vmem:[%s1375 + $0x38] sm:$0xff]
  %s1384 = scalar_lea.vmem %s4, 128
  %v1385 = vld [vmem:[%s1384] sm:$0xff]
  %v1386 = vld [vmem:[%s1384 + $0x8] sm:$0xff]
  %v1387 = vld [vmem:[%s1384 + $0x10] sm:$0xff]
  %v1388 = vld [vmem:[%s1384 + $0x18] sm:$0xff]
  %v1389 = vld [vmem:[%s1384 + $0x20] sm:$0xff]
  %v1390 = vld [vmem:[%s1384 + $0x28] sm:$0xff]
  %v1391 = vld [vmem:[%s1384 + $0x30] sm:$0xff]
  %v1392 = vld [vmem:[%s1384 + $0x38] sm:$0xff]
  %1394 = vset.pattern.permute.xlu0 0
  %1395 = vperm.xlu0 %1394, %v1385
  %v1396 = vpop.permute.xlu0 %1395
  %1399 = vset.pattern.permute.xlu0 0
  %1400 = vperm.xlu0 %1399, %v1386
  %v1401 = vpop.permute.xlu0 %1400
  %1404 = vset.pattern.permute.xlu0 0
  %1405 = vperm.xlu0 %1404, %v1387
  %v1406 = vpop.permute.xlu0 %1405
  %1409 = vset.pattern.permute.xlu0 0
  %1410 = vperm.xlu0 %1409, %v1388
  %v1411 = vpop.permute.xlu0 %1410
  %1414 = vset.pattern.permute.xlu0 0
  %1415 = vperm.xlu0 %1414, %v1389
  %v1416 = vpop.permute.xlu0 %1415
  %1419 = vset.pattern.permute.xlu0 0
  %1420 = vperm.xlu0 %1419, %v1390
  %v1421 = vpop.permute.xlu0 %1420
  %1424 = vset.pattern.permute.xlu0 0
  %1425 = vperm.xlu0 %1424, %v1391
  %v1426 = vpop.permute.xlu0 %1425
  %1429 = vset.pattern.permute.xlu0 0
  %1430 = vperm.xlu0 %1429, %v1392
  %v1431 = vpop.permute.xlu0 %1430
  %v1434 = vsel %vm296, %v1376, 0
  %v1437 = vsel %vm296, %v1377, 0
  %v1440 = vsel %vm296, %v1378, 0
  %v1443 = vsel %vm296, %v1379, 0
  %v1446 = vsel %vm296, %v1380, 0
  %v1449 = vsel %vm296, %v1381, 0
  %v1452 = vsel %vm296, %v1382, 0
  %v1455 = vsel %vm296, %v1383, 0
  %1457 = vmatprep.subr.mxu0 0.0
  %1458 = vmatpush1.msra.mxu0 0.0
  %1459 = vmatprep.subr.mxu0 0.0
  %1460 = vmatpush1.msra.mxu0 0.0
  %1461 = vmatprep.subr.mxu0 0.0
  %1462 = vmatpush1.msra.mxu0 0.0
  %1463 = vmatprep.subr.mxu0 0.0
  %1464 = vmatpush1.msra.mxu0 0.0
  %1465 = vmatprep.subr.mxu0 0.0
  %1466 = vmatpush1.msra.mxu0 0.0
  %1467 = vmatprep.subr.mxu0 0.0
  %1468 = vmatpush1.msra.mxu0 0.0
  %1469 = vmatprep.subr.mxu0 0.0
  %1470 = vmatpush1.msra.mxu0 0.0
  %1471 = vmatprep.subr.mxu0 0.0
  %1472 = vmatpush1.msra.mxu0 0.0
  %1473 = vmatprep.subr.mxu0 0.0
  %1474 = vmatpush1.msra.mxu0 %v1374
  %1475 = vmatprep.subr.mxu0 0.0
  %1476 = vmatpush1.msra.mxu0 %v1373
  %1477 = vmatprep.subr.mxu0 0.0
  %1478 = vmatpush1.msra.mxu0 %v1372
  %1479 = vmatprep.subr.mxu0 0.0
  %1480 = vmatpush1.msra.mxu0 %v1371
  %1481 = vmatprep.subr.mxu0 0.0
  %1482 = vmatpush1.msra.mxu0 %v1370
  %1483 = vmatprep.subr.mxu0 0.0
  %1484 = vmatpush1.msra.mxu0 %v1369
  %1485 = vmatprep.subr.mxu0 0.0
  %1486 = vmatpush1.msra.mxu0 %v1368
  %1487 = vmatprep.subr.mxu0 0.0
  %1488 = vmatpush1.msra.mxu0 %v1367
  %1489 = vmatprep.subr.mxu0 0.0
  %1490 = vmatpush2.msra.mxu0 0.0
  %1491 = vmatprep.subr.mxu0 0.0
  %1492 = vmatpush2.msra.mxu0 0.0
  %1493 = vmatprep.subr.mxu0 0.0
  %1494 = vmatpush2.msra.mxu0 0.0
  %1495 = vmatprep.subr.mxu0 0.0
  %1496 = vmatpush2.msra.mxu0 0.0
  %1497 = vmatprep.subr.mxu0 0.0
  %1498 = vmatpush2.msra.mxu0 0.0
  %1499 = vmatprep.subr.mxu0 0.0
  %1500 = vmatpush2.msra.mxu0 0.0
  %1501 = vmatprep.subr.mxu0 0.0
  %1502 = vmatpush2.msra.mxu0 0.0
  %1503 = vmatprep.subr.mxu0 0.0
  %1504 = vmatpush2.msra.mxu0 0.0
  %1505 = vmatprep.subr.mxu0 0.0
  %1506 = vmatpush2.msra.mxu0 0.0
  %1507 = vmatprep.subr.mxu0 0.0
  %1508 = vmatpush2.msra.mxu0 0.0
  %1509 = vmatprep.subr.mxu0 0.0
  %1510 = vmatpush2.msra.mxu0 0.0
  %1511 = vmatprep.subr.mxu0 0.0
  %1512 = vmatpush2.msra.mxu0 0.0
  %1513 = vmatprep.subr.mxu0 0.0
  %1514 = vmatpush2.msra.mxu0 0.0
  %1515 = vmatprep.subr.mxu0 0.0
  %1516 = vmatpush2.msra.mxu0 0.0
  %1517 = vmatprep.subr.mxu0 0.0
  %1518 = vmatpush2.msra.mxu0 0.0
  %1519 = vmatprep.subr.mxu0 0.0
  %1520 = vmatpush2.msra.mxu0 0.0
  %1521 = vmatprep.mubr.f32.mxu0 0.0
  %1522 = vmatmul.mubr.f32.gmra.mxu0 %v1434
  %v1523 = vpop.f32.mrf.mxu0
  %v1524 = vadd.f32 %v1396, %v1523
  %v1525 = vpop.f32.mrf.mxu0
  %1526 = vmatprep.mubr.f32.mxu0 0.0
  %1527 = vmatmul.mubr.f32.gmra.mxu0 %v1437
  %v1528 = vpop.f32.mrf.mxu0
  %v1529 = vadd.f32 %v1401, %v1528
  %v1530 = vpop.f32.mrf.mxu0
  %1531 = vmatprep.mubr.f32.mxu0 0.0
  %1532 = vmatmul.mubr.f32.gmra.mxu0 %v1440
  %v1533 = vpop.f32.mrf.mxu0
  %v1534 = vadd.f32 %v1406, %v1533
  %v1535 = vpop.f32.mrf.mxu0
  %1536 = vmatprep.mubr.f32.mxu0 0.0
  %1537 = vmatmul.mubr.f32.gmra.mxu0 %v1443
  %v1538 = vpop.f32.mrf.mxu0
  %v1539 = vadd.f32 %v1411, %v1538
  %v1540 = vpop.f32.mrf.mxu0
  %1541 = vmatprep.mubr.f32.mxu0 0.0
  %1542 = vmatmul.mubr.f32.gmra.mxu0 %v1446
  %v1543 = vpop.f32.mrf.mxu0
  %v1544 = vadd.f32 %v1416, %v1543
  %v1545 = vpop.f32.mrf.mxu0
  %1546 = vmatprep.mubr.f32.mxu0 0.0
  %1547 = vmatmul.mubr.f32.gmra.mxu0 %v1449
  %v1548 = vpop.f32.mrf.mxu0
  %v1549 = vadd.f32 %v1421, %v1548
  %v1550 = vpop.f32.mrf.mxu0
  %1551 = vmatprep.mubr.f32.mxu0 0.0
  %1552 = vmatmul.mubr.f32.gmra.mxu0 %v1452
  %v1553 = vpop.f32.mrf.mxu0
  %v1554 = vadd.f32 %v1426, %v1553
  %v1555 = vpop.f32.mrf.mxu0
  %1556 = vmatprep.mubr.f32.mxu0 0.0
  %1557 = vmatmul.mubr.f32.gmra.mxu0 %v1455
  %v1558 = vpop.f32.mrf.mxu0
  %v1559 = vadd.f32 %v1431, %v1558
  %v1560 = vpop.f32.mrf.mxu0
  %1561 = vdwg.mxu0
  %vm1562 = vcmp.gt.f32.partialorder %v1524, 0.0
  %vm1563 = vcmp.gt.f32.partialorder %v1529, 0.0
  %vm1564 = vcmp.gt.f32.partialorder %v1534, 0.0
  %vm1565 = vcmp.gt.f32.partialorder %v1539, 0.0
  %vm1566 = vcmp.gt.f32.partialorder %v1544, 0.0
  %vm1567 = vcmp.gt.f32.partialorder %v1549, 0.0
  %vm1568 = vcmp.gt.f32.partialorder %v1554, 0.0
  %vm1569 = vcmp.gt.f32.partialorder %v1559, 0.0
  %v1570 = vmul.f32 %v1524, 0.01
  %v1571 = vmul.f32 %v1529, 0.01
  %v1572 = vmul.f32 %v1534, 0.01
  %v1573 = vmul.f32 %v1539, 0.01
  %v1574 = vmul.f32 %v1544, 0.01
  %v1575 = vmul.f32 %v1549, 0.01
  %v1576 = vmul.f32 %v1554, 0.01
  %v1577 = vmul.f32 %v1559, 0.01
  %v1578 = vsel %vm1562, %v1524, %v1570
  %v1579 = vsel %vm1563, %v1529, %v1571
  %v1580 = vsel %vm1564, %v1534, %v1572
  %v1581 = vsel %vm1565, %v1539, %v1573
  %v1582 = vsel %vm1566, %v1544, %v1574
  %v1583 = vsel %vm1567, %v1549, %v1575
  %v1584 = vsel %vm1568, %v1554, %v1576
  %v1585 = vsel %vm1569, %v1559, %v1577
  %s1586 = scalar_lea.vmem %s5, 64
  %v1587 = vld [vmem:[%s1586] sm:$0xff]
  %v1588 = vld [vmem:[%s1586 + $0x8] sm:$0xff]
  %v1589 = vld [vmem:[%s1586 + $0x10] sm:$0xff]
  %v1590 = vld [vmem:[%s1586 + $0x18] sm:$0xff]
  %s1591 = scalar_lea.vmem %s6, 64
  %v1592 = vld [vmem:[%s1591] sm:$0xff]
  %v1593 = vld [vmem:[%s1591 + $0x8] sm:$0xff]
  %v1594 = vld [vmem:[%s1591 + $0x10] sm:$0xff]
  %v1595 = vld [vmem:[%s1591 + $0x18] sm:$0xff]
  %1597 = vset.pattern.permute.xlu0 0
  %1598 = vperm.xlu0 %1597, %v1592
  %v1599 = vpop.permute.xlu0 %1598
  %1602 = vset.pattern.permute.xlu0 0
  %1603 = vperm.xlu0 %1602, %v1593
  %v1604 = vpop.permute.xlu0 %1603
  %1607 = vset.pattern.permute.xlu0 0
  %1608 = vperm.xlu0 %1607, %v1594
  %v1609 = vpop.permute.xlu0 %1608
  %1612 = vset.pattern.permute.xlu0 0
  %1613 = vperm.xlu0 %1612, %v1595
  %v1614 = vpop.permute.xlu0 %1613
  %v1617 = vsel %vm296, %v1587, 0
  %v1620 = vsel %vm296, %v1588, 0
  %v1623 = vsel %vm296, %v1589, 0
  %v1626 = vsel %vm296, %v1590, 0
  %1628 = vmatprep.subr.mxu0 0.0
  %1629 = vmatpush1.msra.mxu0 0.0
  %1630 = vmatprep.subr.mxu0 0.0
  %1631 = vmatpush1.msra.mxu0 0.0
  %1632 = vmatprep.subr.mxu0 0.0
  %1633 = vmatpush1.msra.mxu0 0.0
  %1634 = vmatprep.subr.mxu0 0.0
  %1635 = vmatpush1.msra.mxu0 0.0
  %1636 = vmatprep.subr.mxu0 0.0
  %1637 = vmatpush1.msra.mxu0 0.0
  %1638 = vmatprep.subr.mxu0 0.0
  %1639 = vmatpush1.msra.mxu0 0.0
  %1640 = vmatprep.subr.mxu0 0.0
  %1641 = vmatpush1.msra.mxu0 0.0
  %1642 = vmatprep.subr.mxu0 0.0
  %1643 = vmatpush1.msra.mxu0 0.0
  %1644 = vmatprep.subr.mxu0 0.0
  %1645 = vmatpush1.msra.mxu0 %v1585
  %1646 = vmatprep.subr.mxu0 0.0
  %1647 = vmatpush1.msra.mxu0 %v1584
  %1648 = vmatprep.subr.mxu0 0.0
  %1649 = vmatpush1.msra.mxu0 %v1583
  %1650 = vmatprep.subr.mxu0 0.0
  %1651 = vmatpush1.msra.mxu0 %v1582
  %1652 = vmatprep.subr.mxu0 0.0
  %1653 = vmatpush1.msra.mxu0 %v1581
  %1654 = vmatprep.subr.mxu0 0.0
  %1655 = vmatpush1.msra.mxu0 %v1580
  %1656 = vmatprep.subr.mxu0 0.0
  %1657 = vmatpush1.msra.mxu0 %v1579
  %1658 = vmatprep.subr.mxu0 0.0
  %1659 = vmatpush1.msra.mxu0 %v1578
  %1660 = vmatprep.subr.mxu0 0.0
  %1661 = vmatpush2.msra.mxu0 0.0
  %1662 = vmatprep.subr.mxu0 0.0
  %1663 = vmatpush2.msra.mxu0 0.0
  %1664 = vmatprep.subr.mxu0 0.0
  %1665 = vmatpush2.msra.mxu0 0.0
  %1666 = vmatprep.subr.mxu0 0.0
  %1667 = vmatpush2.msra.mxu0 0.0
  %1668 = vmatprep.subr.mxu0 0.0
  %1669 = vmatpush2.msra.mxu0 0.0
  %1670 = vmatprep.subr.mxu0 0.0
  %1671 = vmatpush2.msra.mxu0 0.0
  %1672 = vmatprep.subr.mxu0 0.0
  %1673 = vmatpush2.msra.mxu0 0.0
  %1674 = vmatprep.subr.mxu0 0.0
  %1675 = vmatpush2.msra.mxu0 0.0
  %1676 = vmatprep.subr.mxu0 0.0
  %1677 = vmatpush2.msra.mxu0 0.0
  %1678 = vmatprep.subr.mxu0 0.0
  %1679 = vmatpush2.msra.mxu0 0.0
  %1680 = vmatprep.subr.mxu0 0.0
  %1681 = vmatpush2.msra.mxu0 0.0
  %1682 = vmatprep.subr.mxu0 0.0
  %1683 = vmatpush2.msra.mxu0 0.0
  %1684 = vmatprep.subr.mxu0 0.0
  %1685 = vmatpush2.msra.mxu0 0.0
  %1686 = vmatprep.subr.mxu0 0.0
  %1687 = vmatpush2.msra.mxu0 0.0
  %1688 = vmatprep.subr.mxu0 0.0
  %1689 = vmatpush2.msra.mxu0 0.0
  %1690 = vmatprep.subr.mxu0 0.0
  %1691 = vmatpush2.msra.mxu0 0.0
  %1692 = vmatprep.mubr.f32.mxu0 0.0
  %1693 = vmatmul.mubr.f32.gmra.mxu0 %v1617
  %v1694 = vpop.f32.mrf.mxu0
  %v1695 = vadd.f32 %v1599, %v1694
  %v1696 = vpop.f32.mrf.mxu0
  %1697 = vmatprep.mubr.f32.mxu0 0.0
  %1698 = vmatmul.mubr.f32.gmra.mxu0 %v1620
  %v1699 = vpop.f32.mrf.mxu0
  %v1700 = vadd.f32 %v1604, %v1699
  %v1701 = vpop.f32.mrf.mxu0
  %1702 = vmatprep.mubr.f32.mxu0 0.0
  %1703 = vmatmul.mubr.f32.gmra.mxu0 %v1623
  %v1704 = vpop.f32.mrf.mxu0
  %v1705 = vadd.f32 %v1609, %v1704
  %v1706 = vpop.f32.mrf.mxu0
  %1707 = vmatprep.mubr.f32.mxu0 0.0
  %1708 = vmatmul.mubr.f32.gmra.mxu0 %v1626
  %v1709 = vpop.f32.mrf.mxu0
  %v1710 = vadd.f32 %v1614, %v1709
  %v1711 = vpop.f32.mrf.mxu0
  %1712 = vdwg.mxu0
  %v1713 = vmax.f32 %v1705, -5.0
  %v1714 = vmax.f32 %v1710, -5.0
  %v1715 = vmin.f32 %v1713, 5.0
  %v1716 = vmin.f32 %v1714, 5.0
  %v1717 = vmul.f32 %v1715, 1.442695
  %v1718 = vpow.pop %v1717
  %v1719 = vmul.f32 %v1716, 1.442695
  %v1720 = vpow.pop %v1719
  %v1721 = vmul.f32 %v1718, %v1154
  %v1722 = vmul.f32 %v1720, %v1155
  %v1723 = vadd.f32 %v1721, %v1695
  %v1724 = vadd.f32 %v1722, %v1700
  %v1725 = vadd.f32 %v1715, %v1716
  %v1726 = vrot.slane %v1725, 4
  %v1727 = vadd.f32 %v1725, %v1726
  %v1728 = vrot.slane %v1727, 2
  %v1729 = vadd.f32 %v1727, %v1728
  %v1730 = vrot.slane %v1729, 1
  %v1731 = vadd.f32 %v1729, %v1730
  %v1732 = vadd.f32 %v1163, %v1731
  %s1733 = scalar_lea.vmem %s1, 192
  %v1734 = vld [vmem:[%s1733] sm:$0xff]
  %v1735 = vld [vmem:[%s1733 + $0x8] sm:$0xff]
  %v1736 = vld [vmem:[%s1733 + $0x10] sm:$0xff]
  %v1737 = vld [vmem:[%s1733 + $0x18] sm:$0xff]
  %v1738 = vld [vmem:[%s1733 + $0x20] sm:$0xff]
  %v1739 = vld [vmem:[%s1733 + $0x28] sm:$0xff]
  %v1740 = vld [vmem:[%s1733 + $0x30] sm:$0xff]
  %v1741 = vld [vmem:[%s1733 + $0x38] sm:$0xff]
  %s1742 = scalar_lea.vmem %s2, 192
  %v1743 = vld [vmem:[%s1742] sm:$0xff]
  %v1744 = vld [vmem:[%s1742 + $0x8] sm:$0xff]
  %v1745 = vld [vmem:[%s1742 + $0x10] sm:$0xff]
  %v1746 = vld [vmem:[%s1742 + $0x18] sm:$0xff]
  %v1747 = vld [vmem:[%s1742 + $0x20] sm:$0xff]
  %v1748 = vld [vmem:[%s1742 + $0x28] sm:$0xff]
  %v1749 = vld [vmem:[%s1742 + $0x30] sm:$0xff]
  %v1750 = vld [vmem:[%s1742 + $0x38] sm:$0xff]
  %1752 = vset.pattern.permute.xlu0 0
  %1753 = vperm.xlu0 %1752, %v1743
  %v1754 = vpop.permute.xlu0 %1753
  %1757 = vset.pattern.permute.xlu0 0
  %1758 = vperm.xlu0 %1757, %v1744
  %v1759 = vpop.permute.xlu0 %1758
  %1762 = vset.pattern.permute.xlu0 0
  %1763 = vperm.xlu0 %1762, %v1745
  %v1764 = vpop.permute.xlu0 %1763
  %1767 = vset.pattern.permute.xlu0 0
  %1768 = vperm.xlu0 %1767, %v1746
  %v1769 = vpop.permute.xlu0 %1768
  %1772 = vset.pattern.permute.xlu0 0
  %1773 = vperm.xlu0 %1772, %v1747
  %v1774 = vpop.permute.xlu0 %1773
  %1777 = vset.pattern.permute.xlu0 0
  %1778 = vperm.xlu0 %1777, %v1748
  %v1779 = vpop.permute.xlu0 %1778
  %1782 = vset.pattern.permute.xlu0 0
  %1783 = vperm.xlu0 %1782, %v1749
  %v1784 = vpop.permute.xlu0 %1783
  %1787 = vset.pattern.permute.xlu0 0
  %1788 = vperm.xlu0 %1787, %v1750
  %v1789 = vpop.permute.xlu0 %1788
  %v1792 = vsel %vm86, %v1734, 0
  %v1795 = vsel %vm86, %v1735, 0
  %v1798 = vsel %vm86, %v1736, 0
  %v1801 = vsel %vm86, %v1737, 0
  %v1804 = vsel %vm86, %v1738, 0
  %v1807 = vsel %vm86, %v1739, 0
  %v1810 = vsel %vm86, %v1740, 0
  %v1813 = vsel %vm86, %v1741, 0
  %1815 = vmatprep.subr.mxu0 0.0
  %1816 = vmatpush1.msra.mxu0 0.0
  %1817 = vmatprep.subr.mxu0 0.0
  %1818 = vmatpush1.msra.mxu0 0.0
  %1819 = vmatprep.subr.mxu0 0.0
  %1820 = vmatpush1.msra.mxu0 0.0
  %1821 = vmatprep.subr.mxu0 0.0
  %1822 = vmatpush1.msra.mxu0 0.0
  %1823 = vmatprep.subr.mxu0 0.0
  %1824 = vmatpush1.msra.mxu0 0.0
  %1825 = vmatprep.subr.mxu0 0.0
  %1826 = vmatpush1.msra.mxu0 0.0
  %1827 = vmatprep.subr.mxu0 0.0
  %1828 = vmatpush1.msra.mxu0 0.0
  %1829 = vmatprep.subr.mxu0 0.0
  %1830 = vmatpush1.msra.mxu0 0.0
  %1831 = vmatprep.subr.mxu0 0.0
  %1832 = vmatpush1.msra.mxu0 0.0
  %1833 = vmatprep.subr.mxu0 0.0
  %1834 = vmatpush1.msra.mxu0 0.0
  %1835 = vmatprep.subr.mxu0 0.0
  %1836 = vmatpush1.msra.mxu0 0.0
  %1837 = vmatprep.subr.mxu0 0.0
  %1838 = vmatpush1.msra.mxu0 0.0
  %1839 = vmatprep.subr.mxu0 0.0
  %1840 = vmatpush1.msra.mxu0 0.0
  %1841 = vmatprep.subr.mxu0 0.0
  %1842 = vmatpush1.msra.mxu0 0.0
  %1843 = vmatprep.subr.mxu0 0.0
  %1844 = vmatpush1.msra.mxu0 %v1724
  %1845 = vmatprep.subr.mxu0 0.0
  %1846 = vmatpush1.msra.mxu0 %v1723
  %1847 = vmatprep.subr.mxu0 0.0
  %1848 = vmatpush2.msra.mxu0 0.0
  %1849 = vmatprep.subr.mxu0 0.0
  %1850 = vmatpush2.msra.mxu0 0.0
  %1851 = vmatprep.subr.mxu0 0.0
  %1852 = vmatpush2.msra.mxu0 0.0
  %1853 = vmatprep.subr.mxu0 0.0
  %1854 = vmatpush2.msra.mxu0 0.0
  %1855 = vmatprep.subr.mxu0 0.0
  %1856 = vmatpush2.msra.mxu0 0.0
  %1857 = vmatprep.subr.mxu0 0.0
  %1858 = vmatpush2.msra.mxu0 0.0
  %1859 = vmatprep.subr.mxu0 0.0
  %1860 = vmatpush2.msra.mxu0 0.0
  %1861 = vmatprep.subr.mxu0 0.0
  %1862 = vmatpush2.msra.mxu0 0.0
  %1863 = vmatprep.subr.mxu0 0.0
  %1864 = vmatpush2.msra.mxu0 0.0
  %1865 = vmatprep.subr.mxu0 0.0
  %1866 = vmatpush2.msra.mxu0 0.0
  %1867 = vmatprep.subr.mxu0 0.0
  %1868 = vmatpush2.msra.mxu0 0.0
  %1869 = vmatprep.subr.mxu0 0.0
  %1870 = vmatpush2.msra.mxu0 0.0
  %1871 = vmatprep.subr.mxu0 0.0
  %1872 = vmatpush2.msra.mxu0 0.0
  %1873 = vmatprep.subr.mxu0 0.0
  %1874 = vmatpush2.msra.mxu0 0.0
  %1875 = vmatprep.subr.mxu0 0.0
  %1876 = vmatpush2.msra.mxu0 0.0
  %1877 = vmatprep.subr.mxu0 0.0
  %1878 = vmatpush2.msra.mxu0 0.0
  %1879 = vmatprep.mubr.f32.mxu0 0.0
  %1880 = vmatmul.mubr.f32.gmra.mxu0 %v1792
  %v1881 = vpop.f32.mrf.mxu0
  %v1882 = vadd.f32 %v1754, %v1881
  %v1883 = vpop.f32.mrf.mxu0
  %1884 = vmatprep.mubr.f32.mxu0 0.0
  %1885 = vmatmul.mubr.f32.gmra.mxu0 %v1795
  %v1886 = vpop.f32.mrf.mxu0
  %v1887 = vadd.f32 %v1759, %v1886
  %v1888 = vpop.f32.mrf.mxu0
  %1889 = vmatprep.mubr.f32.mxu0 0.0
  %1890 = vmatmul.mubr.f32.gmra.mxu0 %v1798
  %v1891 = vpop.f32.mrf.mxu0
  %v1892 = vadd.f32 %v1764, %v1891
  %v1893 = vpop.f32.mrf.mxu0
  %1894 = vmatprep.mubr.f32.mxu0 0.0
  %1895 = vmatmul.mubr.f32.gmra.mxu0 %v1801
  %v1896 = vpop.f32.mrf.mxu0
  %v1897 = vadd.f32 %v1769, %v1896
  %v1898 = vpop.f32.mrf.mxu0
  %1899 = vmatprep.mubr.f32.mxu0 0.0
  %1900 = vmatmul.mubr.f32.gmra.mxu0 %v1804
  %v1901 = vpop.f32.mrf.mxu0
  %v1902 = vadd.f32 %v1774, %v1901
  %v1903 = vpop.f32.mrf.mxu0
  %1904 = vmatprep.mubr.f32.mxu0 0.0
  %1905 = vmatmul.mubr.f32.gmra.mxu0 %v1807
  %v1906 = vpop.f32.mrf.mxu0
  %v1907 = vadd.f32 %v1779, %v1906
  %v1908 = vpop.f32.mrf.mxu0
  %1909 = vmatprep.mubr.f32.mxu0 0.0
  %1910 = vmatmul.mubr.f32.gmra.mxu0 %v1810
  %v1911 = vpop.f32.mrf.mxu0
  %v1912 = vadd.f32 %v1784, %v1911
  %v1913 = vpop.f32.mrf.mxu0
  %1914 = vmatprep.mubr.f32.mxu0 0.0
  %1915 = vmatmul.mubr.f32.gmra.mxu0 %v1813
  %v1916 = vpop.f32.mrf.mxu0
  %v1917 = vadd.f32 %v1789, %v1916
  %v1918 = vpop.f32.mrf.mxu0
  %1919 = vdwg.mxu0
  %vm1920 = vcmp.gt.f32.partialorder %v1882, 0.0
  %vm1921 = vcmp.gt.f32.partialorder %v1887, 0.0
  %vm1922 = vcmp.gt.f32.partialorder %v1892, 0.0
  %vm1923 = vcmp.gt.f32.partialorder %v1897, 0.0
  %vm1924 = vcmp.gt.f32.partialorder %v1902, 0.0
  %vm1925 = vcmp.gt.f32.partialorder %v1907, 0.0
  %vm1926 = vcmp.gt.f32.partialorder %v1912, 0.0
  %vm1927 = vcmp.gt.f32.partialorder %v1917, 0.0
  %v1928 = vmul.f32 %v1882, 0.01
  %v1929 = vmul.f32 %v1887, 0.01
  %v1930 = vmul.f32 %v1892, 0.01
  %v1931 = vmul.f32 %v1897, 0.01
  %v1932 = vmul.f32 %v1902, 0.01
  %v1933 = vmul.f32 %v1907, 0.01
  %v1934 = vmul.f32 %v1912, 0.01
  %v1935 = vmul.f32 %v1917, 0.01
  %v1936 = vsel %vm1920, %v1882, %v1928
  %v1937 = vsel %vm1921, %v1887, %v1929
  %v1938 = vsel %vm1922, %v1892, %v1930
  %v1939 = vsel %vm1923, %v1897, %v1931
  %v1940 = vsel %vm1924, %v1902, %v1932
  %v1941 = vsel %vm1925, %v1907, %v1933
  %v1942 = vsel %vm1926, %v1912, %v1934
  %v1943 = vsel %vm1927, %v1917, %v1935
  %s1944 = scalar_lea.vmem %s3, 192
  %v1945 = vld [vmem:[%s1944] sm:$0xff]
  %v1946 = vld [vmem:[%s1944 + $0x8] sm:$0xff]
  %v1947 = vld [vmem:[%s1944 + $0x10] sm:$0xff]
  %v1948 = vld [vmem:[%s1944 + $0x18] sm:$0xff]
  %v1949 = vld [vmem:[%s1944 + $0x20] sm:$0xff]
  %v1950 = vld [vmem:[%s1944 + $0x28] sm:$0xff]
  %v1951 = vld [vmem:[%s1944 + $0x30] sm:$0xff]
  %v1952 = vld [vmem:[%s1944 + $0x38] sm:$0xff]
  %s1953 = scalar_lea.vmem %s4, 192
  %v1954 = vld [vmem:[%s1953] sm:$0xff]
  %v1955 = vld [vmem:[%s1953 + $0x8] sm:$0xff]
  %v1956 = vld [vmem:[%s1953 + $0x10] sm:$0xff]
  %v1957 = vld [vmem:[%s1953 + $0x18] sm:$0xff]
  %v1958 = vld [vmem:[%s1953 + $0x20] sm:$0xff]
  %v1959 = vld [vmem:[%s1953 + $0x28] sm:$0xff]
  %v1960 = vld [vmem:[%s1953 + $0x30] sm:$0xff]
  %v1961 = vld [vmem:[%s1953 + $0x38] sm:$0xff]
  %1963 = vset.pattern.permute.xlu0 0
  %1964 = vperm.xlu0 %1963, %v1954
  %v1965 = vpop.permute.xlu0 %1964
  %1968 = vset.pattern.permute.xlu0 0
  %1969 = vperm.xlu0 %1968, %v1955
  %v1970 = vpop.permute.xlu0 %1969
  %1973 = vset.pattern.permute.xlu0 0
  %1974 = vperm.xlu0 %1973, %v1956
  %v1975 = vpop.permute.xlu0 %1974
  %1978 = vset.pattern.permute.xlu0 0
  %1979 = vperm.xlu0 %1978, %v1957
  %v1980 = vpop.permute.xlu0 %1979
  %1983 = vset.pattern.permute.xlu0 0
  %1984 = vperm.xlu0 %1983, %v1958
  %v1985 = vpop.permute.xlu0 %1984
  %1988 = vset.pattern.permute.xlu0 0
  %1989 = vperm.xlu0 %1988, %v1959
  %v1990 = vpop.permute.xlu0 %1989
  %1993 = vset.pattern.permute.xlu0 0
  %1994 = vperm.xlu0 %1993, %v1960
  %v1995 = vpop.permute.xlu0 %1994
  %1998 = vset.pattern.permute.xlu0 0
  %1999 = vperm.xlu0 %1998, %v1961
  %v2000 = vpop.permute.xlu0 %1999
  %v2003 = vsel %vm296, %v1945, 0
  %v2006 = vsel %vm296, %v1946, 0
  %v2009 = vsel %vm296, %v1947, 0
  %v2012 = vsel %vm296, %v1948, 0
  %v2015 = vsel %vm296, %v1949, 0
  %v2018 = vsel %vm296, %v1950, 0
  %v2021 = vsel %vm296, %v1951, 0
  %v2024 = vsel %vm296, %v1952, 0
  %2026 = vmatprep.subr.mxu0 0.0
  %2027 = vmatpush1.msra.mxu0 0.0
  %2028 = vmatprep.subr.mxu0 0.0
  %2029 = vmatpush1.msra.mxu0 0.0
  %2030 = vmatprep.subr.mxu0 0.0
  %2031 = vmatpush1.msra.mxu0 0.0
  %2032 = vmatprep.subr.mxu0 0.0
  %2033 = vmatpush1.msra.mxu0 0.0
  %2034 = vmatprep.subr.mxu0 0.0
  %2035 = vmatpush1.msra.mxu0 0.0
  %2036 = vmatprep.subr.mxu0 0.0
  %2037 = vmatpush1.msra.mxu0 0.0
  %2038 = vmatprep.subr.mxu0 0.0
  %2039 = vmatpush1.msra.mxu0 0.0
  %2040 = vmatprep.subr.mxu0 0.0
  %2041 = vmatpush1.msra.mxu0 0.0
  %2042 = vmatprep.subr.mxu0 0.0
  %2043 = vmatpush1.msra.mxu0 %v1943
  %2044 = vmatprep.subr.mxu0 0.0
  %2045 = vmatpush1.msra.mxu0 %v1942
  %2046 = vmatprep.subr.mxu0 0.0
  %2047 = vmatpush1.msra.mxu0 %v1941
  %2048 = vmatprep.subr.mxu0 0.0
  %2049 = vmatpush1.msra.mxu0 %v1940
  %2050 = vmatprep.subr.mxu0 0.0
  %2051 = vmatpush1.msra.mxu0 %v1939
  %2052 = vmatprep.subr.mxu0 0.0
  %2053 = vmatpush1.msra.mxu0 %v1938
  %2054 = vmatprep.subr.mxu0 0.0
  %2055 = vmatpush1.msra.mxu0 %v1937
  %2056 = vmatprep.subr.mxu0 0.0
  %2057 = vmatpush1.msra.mxu0 %v1936
  %2058 = vmatprep.subr.mxu0 0.0
  %2059 = vmatpush2.msra.mxu0 0.0
  %2060 = vmatprep.subr.mxu0 0.0
  %2061 = vmatpush2.msra.mxu0 0.0
  %2062 = vmatprep.subr.mxu0 0.0
  %2063 = vmatpush2.msra.mxu0 0.0
  %2064 = vmatprep.subr.mxu0 0.0
  %2065 = vmatpush2.msra.mxu0 0.0
  %2066 = vmatprep.subr.mxu0 0.0
  %2067 = vmatpush2.msra.mxu0 0.0
  %2068 = vmatprep.subr.mxu0 0.0
  %2069 = vmatpush2.msra.mxu0 0.0
  %2070 = vmatprep.subr.mxu0 0.0
  %2071 = vmatpush2.msra.mxu0 0.0
  %2072 = vmatprep.subr.mxu0 0.0
  %2073 = vmatpush2.msra.mxu0 0.0
  %2074 = vmatprep.subr.mxu0 0.0
  %2075 = vmatpush2.msra.mxu0 0.0
  %2076 = vmatprep.subr.mxu0 0.0
  %2077 = vmatpush2.msra.mxu0 0.0
  %2078 = vmatprep.subr.mxu0 0.0
  %2079 = vmatpush2.msra.mxu0 0.0
  %2080 = vmatprep.subr.mxu0 0.0
  %2081 = vmatpush2.msra.mxu0 0.0
  %2082 = vmatprep.subr.mxu0 0.0
  %2083 = vmatpush2.msra.mxu0 0.0
  %2084 = vmatprep.subr.mxu0 0.0
  %2085 = vmatpush2.msra.mxu0 0.0
  %2086 = vmatprep.subr.mxu0 0.0
  %2087 = vmatpush2.msra.mxu0 0.0
  %2088 = vmatprep.subr.mxu0 0.0
  %2089 = vmatpush2.msra.mxu0 0.0
  %2090 = vmatprep.mubr.f32.mxu0 0.0
  %2091 = vmatmul.mubr.f32.gmra.mxu0 %v2003
  %v2092 = vpop.f32.mrf.mxu0
  %v2093 = vadd.f32 %v1965, %v2092
  %v2094 = vpop.f32.mrf.mxu0
  %2095 = vmatprep.mubr.f32.mxu0 0.0
  %2096 = vmatmul.mubr.f32.gmra.mxu0 %v2006
  %v2097 = vpop.f32.mrf.mxu0
  %v2098 = vadd.f32 %v1970, %v2097
  %v2099 = vpop.f32.mrf.mxu0
  %2100 = vmatprep.mubr.f32.mxu0 0.0
  %2101 = vmatmul.mubr.f32.gmra.mxu0 %v2009
  %v2102 = vpop.f32.mrf.mxu0
  %v2103 = vadd.f32 %v1975, %v2102
  %v2104 = vpop.f32.mrf.mxu0
  %2105 = vmatprep.mubr.f32.mxu0 0.0
  %2106 = vmatmul.mubr.f32.gmra.mxu0 %v2012
  %v2107 = vpop.f32.mrf.mxu0
  %v2108 = vadd.f32 %v1980, %v2107
  %v2109 = vpop.f32.mrf.mxu0
  %2110 = vmatprep.mubr.f32.mxu0 0.0
  %2111 = vmatmul.mubr.f32.gmra.mxu0 %v2015
  %v2112 = vpop.f32.mrf.mxu0
  %v2113 = vadd.f32 %v1985, %v2112
  %v2114 = vpop.f32.mrf.mxu0
  %2115 = vmatprep.mubr.f32.mxu0 0.0
  %2116 = vmatmul.mubr.f32.gmra.mxu0 %v2018
  %v2117 = vpop.f32.mrf.mxu0
  %v2118 = vadd.f32 %v1990, %v2117
  %v2119 = vpop.f32.mrf.mxu0
  %2120 = vmatprep.mubr.f32.mxu0 0.0
  %2121 = vmatmul.mubr.f32.gmra.mxu0 %v2021
  %v2122 = vpop.f32.mrf.mxu0
  %v2123 = vadd.f32 %v1995, %v2122
  %v2124 = vpop.f32.mrf.mxu0
  %2125 = vmatprep.mubr.f32.mxu0 0.0
  %2126 = vmatmul.mubr.f32.gmra.mxu0 %v2024
  %v2127 = vpop.f32.mrf.mxu0
  %v2128 = vadd.f32 %v2000, %v2127
  %v2129 = vpop.f32.mrf.mxu0
  %2130 = vdwg.mxu0
  %vm2131 = vcmp.gt.f32.partialorder %v2093, 0.0
  %vm2132 = vcmp.gt.f32.partialorder %v2098, 0.0
  %vm2133 = vcmp.gt.f32.partialorder %v2103, 0.0
  %vm2134 = vcmp.gt.f32.partialorder %v2108, 0.0
  %vm2135 = vcmp.gt.f32.partialorder %v2113, 0.0
  %vm2136 = vcmp.gt.f32.partialorder %v2118, 0.0
  %vm2137 = vcmp.gt.f32.partialorder %v2123, 0.0
  %vm2138 = vcmp.gt.f32.partialorder %v2128, 0.0
  %v2139 = vmul.f32 %v2093, 0.01
  %v2140 = vmul.f32 %v2098, 0.01
  %v2141 = vmul.f32 %v2103, 0.01
  %v2142 = vmul.f32 %v2108, 0.01
  %v2143 = vmul.f32 %v2113, 0.01
  %v2144 = vmul.f32 %v2118, 0.01
  %v2145 = vmul.f32 %v2123, 0.01
  %v2146 = vmul.f32 %v2128, 0.01
  %v2147 = vsel %vm2131, %v2093, %v2139
  %v2148 = vsel %vm2132, %v2098, %v2140
  %v2149 = vsel %vm2133, %v2103, %v2141
  %v2150 = vsel %vm2134, %v2108, %v2142
  %v2151 = vsel %vm2135, %v2113, %v2143
  %v2152 = vsel %vm2136, %v2118, %v2144
  %v2153 = vsel %vm2137, %v2123, %v2145
  %v2154 = vsel %vm2138, %v2128, %v2146
  %s2155 = scalar_lea.vmem %s5, 96
  %v2156 = vld [vmem:[%s2155] sm:$0xff]
  %v2157 = vld [vmem:[%s2155 + $0x8] sm:$0xff]
  %v2158 = vld [vmem:[%s2155 + $0x10] sm:$0xff]
  %v2159 = vld [vmem:[%s2155 + $0x18] sm:$0xff]
  %s2160 = scalar_lea.vmem %s6, 96
  %v2161 = vld [vmem:[%s2160] sm:$0xff]
  %v2162 = vld [vmem:[%s2160 + $0x8] sm:$0xff]
  %v2163 = vld [vmem:[%s2160 + $0x10] sm:$0xff]
  %v2164 = vld [vmem:[%s2160 + $0x18] sm:$0xff]
  %2166 = vset.pattern.permute.xlu0 0
  %2167 = vperm.xlu0 %2166, %v2161
  %v2168 = vpop.permute.xlu0 %2167
  %2171 = vset.pattern.permute.xlu0 0
  %2172 = vperm.xlu0 %2171, %v2162
  %v2173 = vpop.permute.xlu0 %2172
  %2176 = vset.pattern.permute.xlu0 0
  %2177 = vperm.xlu0 %2176, %v2163
  %v2178 = vpop.permute.xlu0 %2177
  %2181 = vset.pattern.permute.xlu0 0
  %2182 = vperm.xlu0 %2181, %v2164
  %v2183 = vpop.permute.xlu0 %2182
  %v2186 = vsel %vm296, %v2156, 0
  %v2189 = vsel %vm296, %v2157, 0
  %v2192 = vsel %vm296, %v2158, 0
  %v2195 = vsel %vm296, %v2159, 0
  %2197 = vmatprep.subr.mxu0 0.0
  %2198 = vmatpush1.msra.mxu0 0.0
  %2199 = vmatprep.subr.mxu0 0.0
  %2200 = vmatpush1.msra.mxu0 0.0
  %2201 = vmatprep.subr.mxu0 0.0
  %2202 = vmatpush1.msra.mxu0 0.0
  %2203 = vmatprep.subr.mxu0 0.0
  %2204 = vmatpush1.msra.mxu0 0.0
  %2205 = vmatprep.subr.mxu0 0.0
  %2206 = vmatpush1.msra.mxu0 0.0
  %2207 = vmatprep.subr.mxu0 0.0
  %2208 = vmatpush1.msra.mxu0 0.0
  %2209 = vmatprep.subr.mxu0 0.0
  %2210 = vmatpush1.msra.mxu0 0.0
  %2211 = vmatprep.subr.mxu0 0.0
  %2212 = vmatpush1.msra.mxu0 0.0
  %2213 = vmatprep.subr.mxu0 0.0
  %2214 = vmatpush1.msra.mxu0 %v2154
  %2215 = vmatprep.subr.mxu0 0.0
  %2216 = vmatpush1.msra.mxu0 %v2153
  %2217 = vmatprep.subr.mxu0 0.0
  %2218 = vmatpush1.msra.mxu0 %v2152
  %2219 = vmatprep.subr.mxu0 0.0
  %2220 = vmatpush1.msra.mxu0 %v2151
  %2221 = vmatprep.subr.mxu0 0.0
  %2222 = vmatpush1.msra.mxu0 %v2150
  %2223 = vmatprep.subr.mxu0 0.0
  %2224 = vmatpush1.msra.mxu0 %v2149
  %2225 = vmatprep.subr.mxu0 0.0
  %2226 = vmatpush1.msra.mxu0 %v2148
  %2227 = vmatprep.subr.mxu0 0.0
  %2228 = vmatpush1.msra.mxu0 %v2147
  %2229 = vmatprep.subr.mxu0 0.0
  %2230 = vmatpush2.msra.mxu0 0.0
  %2231 = vmatprep.subr.mxu0 0.0
  %2232 = vmatpush2.msra.mxu0 0.0
  %2233 = vmatprep.subr.mxu0 0.0
  %2234 = vmatpush2.msra.mxu0 0.0
  %2235 = vmatprep.subr.mxu0 0.0
  %2236 = vmatpush2.msra.mxu0 0.0
  %2237 = vmatprep.subr.mxu0 0.0
  %2238 = vmatpush2.msra.mxu0 0.0
  %2239 = vmatprep.subr.mxu0 0.0
  %2240 = vmatpush2.msra.mxu0 0.0
  %2241 = vmatprep.subr.mxu0 0.0
  %2242 = vmatpush2.msra.mxu0 0.0
  %2243 = vmatprep.subr.mxu0 0.0
  %2244 = vmatpush2.msra.mxu0 0.0
  %2245 = vmatprep.subr.mxu0 0.0
  %2246 = vmatpush2.msra.mxu0 0.0
  %2247 = vmatprep.subr.mxu0 0.0
  %2248 = vmatpush2.msra.mxu0 0.0
  %2249 = vmatprep.subr.mxu0 0.0
  %2250 = vmatpush2.msra.mxu0 0.0
  %2251 = vmatprep.subr.mxu0 0.0
  %2252 = vmatpush2.msra.mxu0 0.0
  %2253 = vmatprep.subr.mxu0 0.0
  %2254 = vmatpush2.msra.mxu0 0.0
  %2255 = vmatprep.subr.mxu0 0.0
  %2256 = vmatpush2.msra.mxu0 0.0
  %2257 = vmatprep.subr.mxu0 0.0
  %2258 = vmatpush2.msra.mxu0 0.0
  %2259 = vmatprep.subr.mxu0 0.0
  %2260 = vmatpush2.msra.mxu0 0.0
  %2261 = vmatprep.mubr.f32.mxu0 0.0
  %2262 = vmatmul.mubr.f32.gmra.mxu0 %v2186
  %v2263 = vpop.f32.mrf.mxu0
  %v2264 = vadd.f32 %v2168, %v2263
  %v2265 = vpop.f32.mrf.mxu0
  %2266 = vmatprep.mubr.f32.mxu0 0.0
  %2267 = vmatmul.mubr.f32.gmra.mxu0 %v2189
  %v2268 = vpop.f32.mrf.mxu0
  %v2269 = vadd.f32 %v2173, %v2268
  %v2270 = vpop.f32.mrf.mxu0
  %2271 = vmatprep.mubr.f32.mxu0 0.0
  %2272 = vmatmul.mubr.f32.gmra.mxu0 %v2192
  %v2273 = vpop.f32.mrf.mxu0
  %v2274 = vadd.f32 %v2178, %v2273
  %v2275 = vpop.f32.mrf.mxu0
  %2276 = vmatprep.mubr.f32.mxu0 0.0
  %2277 = vmatmul.mubr.f32.gmra.mxu0 %v2195
  %v2278 = vpop.f32.mrf.mxu0
  %v2279 = vadd.f32 %v2183, %v2278
  %v2280 = vpop.f32.mrf.mxu0
  %2281 = vdwg.mxu0
  %v2282 = vmax.f32 %v2274, -5.0
  %v2283 = vmax.f32 %v2279, -5.0
  %v2284 = vmin.f32 %v2282, 5.0
  %v2285 = vmin.f32 %v2283, 5.0
  %v2286 = vmul.f32 %v2284, 1.442695
  %v2287 = vpow.pop %v2286
  %v2288 = vmul.f32 %v2285, 1.442695
  %v2289 = vpow.pop %v2288
  %v2290 = vmul.f32 %v2287, %v1723
  %v2291 = vmul.f32 %v2289, %v1724
  %v2292 = vadd.f32 %v2290, %v2264
  %v2293 = vadd.f32 %v2291, %v2269
  %v2294 = vadd.f32 %v2284, %v2285
  %v2295 = vrot.slane %v2294, 4
  %v2296 = vadd.f32 %v2294, %v2295
  %v2297 = vrot.slane %v2296, 2
  %v2298 = vadd.f32 %v2296, %v2297
  %v2299 = vrot.slane %v2298, 1
  %v2300 = vadd.f32 %v2298, %v2299
  %v2301 = vadd.f32 %v1732, %v2300
  %s2302 = scalar_lea.vmem %s1, 256
  %v2303 = vld [vmem:[%s2302] sm:$0xff]
  %v2304 = vld [vmem:[%s2302 + $0x8] sm:$0xff]
  %v2305 = vld [vmem:[%s2302 + $0x10] sm:$0xff]
  %v2306 = vld [vmem:[%s2302 + $0x18] sm:$0xff]
  %v2307 = vld [vmem:[%s2302 + $0x20] sm:$0xff]
  %v2308 = vld [vmem:[%s2302 + $0x28] sm:$0xff]
  %v2309 = vld [vmem:[%s2302 + $0x30] sm:$0xff]
  %v2310 = vld [vmem:[%s2302 + $0x38] sm:$0xff]
  %s2311 = scalar_lea.vmem %s2, 256
  %v2312 = vld [vmem:[%s2311] sm:$0xff]
  %v2313 = vld [vmem:[%s2311 + $0x8] sm:$0xff]
  %v2314 = vld [vmem:[%s2311 + $0x10] sm:$0xff]
  %v2315 = vld [vmem:[%s2311 + $0x18] sm:$0xff]
  %v2316 = vld [vmem:[%s2311 + $0x20] sm:$0xff]
  %v2317 = vld [vmem:[%s2311 + $0x28] sm:$0xff]
  %v2318 = vld [vmem:[%s2311 + $0x30] sm:$0xff]
  %v2319 = vld [vmem:[%s2311 + $0x38] sm:$0xff]
  %2321 = vset.pattern.permute.xlu0 0
  %2322 = vperm.xlu0 %2321, %v2312
  %v2323 = vpop.permute.xlu0 %2322
  %2326 = vset.pattern.permute.xlu0 0
  %2327 = vperm.xlu0 %2326, %v2313
  %v2328 = vpop.permute.xlu0 %2327
  %2331 = vset.pattern.permute.xlu0 0
  %2332 = vperm.xlu0 %2331, %v2314
  %v2333 = vpop.permute.xlu0 %2332
  %2336 = vset.pattern.permute.xlu0 0
  %2337 = vperm.xlu0 %2336, %v2315
  %v2338 = vpop.permute.xlu0 %2337
  %2341 = vset.pattern.permute.xlu0 0
  %2342 = vperm.xlu0 %2341, %v2316
  %v2343 = vpop.permute.xlu0 %2342
  %2346 = vset.pattern.permute.xlu0 0
  %2347 = vperm.xlu0 %2346, %v2317
  %v2348 = vpop.permute.xlu0 %2347
  %2351 = vset.pattern.permute.xlu0 0
  %2352 = vperm.xlu0 %2351, %v2318
  %v2353 = vpop.permute.xlu0 %2352
  %2356 = vset.pattern.permute.xlu0 0
  %2357 = vperm.xlu0 %2356, %v2319
  %v2358 = vpop.permute.xlu0 %2357
  %v2361 = vsel %vm86, %v2303, 0
  %v2364 = vsel %vm86, %v2304, 0
  %v2367 = vsel %vm86, %v2305, 0
  %v2370 = vsel %vm86, %v2306, 0
  %v2373 = vsel %vm86, %v2307, 0
  %v2376 = vsel %vm86, %v2308, 0
  %v2379 = vsel %vm86, %v2309, 0
  %v2382 = vsel %vm86, %v2310, 0
  %2384 = vmatprep.subr.mxu0 0.0
  %2385 = vmatpush1.msra.mxu0 0.0
  %2386 = vmatprep.subr.mxu0 0.0
  %2387 = vmatpush1.msra.mxu0 0.0
  %2388 = vmatprep.subr.mxu0 0.0
  %2389 = vmatpush1.msra.mxu0 0.0
  %2390 = vmatprep.subr.mxu0 0.0
  %2391 = vmatpush1.msra.mxu0 0.0
  %2392 = vmatprep.subr.mxu0 0.0
  %2393 = vmatpush1.msra.mxu0 0.0
  %2394 = vmatprep.subr.mxu0 0.0
  %2395 = vmatpush1.msra.mxu0 0.0
  %2396 = vmatprep.subr.mxu0 0.0
  %2397 = vmatpush1.msra.mxu0 0.0
  %2398 = vmatprep.subr.mxu0 0.0
  %2399 = vmatpush1.msra.mxu0 0.0
  %2400 = vmatprep.subr.mxu0 0.0
  %2401 = vmatpush1.msra.mxu0 0.0
  %2402 = vmatprep.subr.mxu0 0.0
  %2403 = vmatpush1.msra.mxu0 0.0
  %2404 = vmatprep.subr.mxu0 0.0
  %2405 = vmatpush1.msra.mxu0 0.0
  %2406 = vmatprep.subr.mxu0 0.0
  %2407 = vmatpush1.msra.mxu0 0.0
  %2408 = vmatprep.subr.mxu0 0.0
  %2409 = vmatpush1.msra.mxu0 0.0
  %2410 = vmatprep.subr.mxu0 0.0
  %2411 = vmatpush1.msra.mxu0 0.0
  %2412 = vmatprep.subr.mxu0 0.0
  %2413 = vmatpush1.msra.mxu0 %v2293
  %2414 = vmatprep.subr.mxu0 0.0
  %2415 = vmatpush1.msra.mxu0 %v2292
  %2416 = vmatprep.subr.mxu0 0.0
  %2417 = vmatpush2.msra.mxu0 0.0
  %2418 = vmatprep.subr.mxu0 0.0
  %2419 = vmatpush2.msra.mxu0 0.0
  %2420 = vmatprep.subr.mxu0 0.0
  %2421 = vmatpush2.msra.mxu0 0.0
  %2422 = vmatprep.subr.mxu0 0.0
  %2423 = vmatpush2.msra.mxu0 0.0
  %2424 = vmatprep.subr.mxu0 0.0
  %2425 = vmatpush2.msra.mxu0 0.0
  %2426 = vmatprep.subr.mxu0 0.0
  %2427 = vmatpush2.msra.mxu0 0.0
  %2428 = vmatprep.subr.mxu0 0.0
  %2429 = vmatpush2.msra.mxu0 0.0
  %2430 = vmatprep.subr.mxu0 0.0
  %2431 = vmatpush2.msra.mxu0 0.0
  %2432 = vmatprep.subr.mxu0 0.0
  %2433 = vmatpush2.msra.mxu0 0.0
  %2434 = vmatprep.subr.mxu0 0.0
  %2435 = vmatpush2.msra.mxu0 0.0
  %2436 = vmatprep.subr.mxu0 0.0
  %2437 = vmatpush2.msra.mxu0 0.0
  %2438 = vmatprep.subr.mxu0 0.0
  %2439 = vmatpush2.msra.mxu0 0.0
  %2440 = vmatprep.subr.mxu0 0.0
  %2441 = vmatpush2.msra.mxu0 0.0
  %2442 = vmatprep.subr.mxu0 0.0
  %2443 = vmatpush2.msra.mxu0 0.0
  %2444 = vmatprep.subr.mxu0 0.0
  %2445 = vmatpush2.msra.mxu0 0.0
  %2446 = vmatprep.subr.mxu0 0.0
  %2447 = vmatpush2.msra.mxu0 0.0
  %2448 = vmatprep.mubr.f32.mxu0 0.0
  %2449 = vmatmul.mubr.f32.gmra.mxu0 %v2361
  %v2450 = vpop.f32.mrf.mxu0
  %v2451 = vadd.f32 %v2323, %v2450
  %v2452 = vpop.f32.mrf.mxu0
  %2453 = vmatprep.mubr.f32.mxu0 0.0
  %2454 = vmatmul.mubr.f32.gmra.mxu0 %v2364
  %v2455 = vpop.f32.mrf.mxu0
  %v2456 = vadd.f32 %v2328, %v2455
  %v2457 = vpop.f32.mrf.mxu0
  %2458 = vmatprep.mubr.f32.mxu0 0.0
  %2459 = vmatmul.mubr.f32.gmra.mxu0 %v2367
  %v2460 = vpop.f32.mrf.mxu0
  %v2461 = vadd.f32 %v2333, %v2460
  %v2462 = vpop.f32.mrf.mxu0
  %2463 = vmatprep.mubr.f32.mxu0 0.0
  %2464 = vmatmul.mubr.f32.gmra.mxu0 %v2370
  %v2465 = vpop.f32.mrf.mxu0
  %v2466 = vadd.f32 %v2338, %v2465
  %v2467 = vpop.f32.mrf.mxu0
  %2468 = vmatprep.mubr.f32.mxu0 0.0
  %2469 = vmatmul.mubr.f32.gmra.mxu0 %v2373
  %v2470 = vpop.f32.mrf.mxu0
  %v2471 = vadd.f32 %v2343, %v2470
  %v2472 = vpop.f32.mrf.mxu0
  %2473 = vmatprep.mubr.f32.mxu0 0.0
  %2474 = vmatmul.mubr.f32.gmra.mxu0 %v2376
  %v2475 = vpop.f32.mrf.mxu0
  %v2476 = vadd.f32 %v2348, %v2475
  %v2477 = vpop.f32.mrf.mxu0
  %2478 = vmatprep.mubr.f32.mxu0 0.0
  %2479 = vmatmul.mubr.f32.gmra.mxu0 %v2379
  %v2480 = vpop.f32.mrf.mxu0
  %v2481 = vadd.f32 %v2353, %v2480
  %v2482 = vpop.f32.mrf.mxu0
  %2483 = vmatprep.mubr.f32.mxu0 0.0
  %2484 = vmatmul.mubr.f32.gmra.mxu0 %v2382
  %v2485 = vpop.f32.mrf.mxu0
  %v2486 = vadd.f32 %v2358, %v2485
  %v2487 = vpop.f32.mrf.mxu0
  %2488 = vdwg.mxu0
  %vm2489 = vcmp.gt.f32.partialorder %v2451, 0.0
  %vm2490 = vcmp.gt.f32.partialorder %v2456, 0.0
  %vm2491 = vcmp.gt.f32.partialorder %v2461, 0.0
  %vm2492 = vcmp.gt.f32.partialorder %v2466, 0.0
  %vm2493 = vcmp.gt.f32.partialorder %v2471, 0.0
  %vm2494 = vcmp.gt.f32.partialorder %v2476, 0.0
  %vm2495 = vcmp.gt.f32.partialorder %v2481, 0.0
  %vm2496 = vcmp.gt.f32.partialorder %v2486, 0.0
  %v2497 = vmul.f32 %v2451, 0.01
  %v2498 = vmul.f32 %v2456, 0.01
  %v2499 = vmul.f32 %v2461, 0.01
  %v2500 = vmul.f32 %v2466, 0.01
  %v2501 = vmul.f32 %v2471, 0.01
  %v2502 = vmul.f32 %v2476, 0.01
  %v2503 = vmul.f32 %v2481, 0.01
  %v2504 = vmul.f32 %v2486, 0.01
  %v2505 = vsel %vm2489, %v2451, %v2497
  %v2506 = vsel %vm2490, %v2456, %v2498
  %v2507 = vsel %vm2491, %v2461, %v2499
  %v2508 = vsel %vm2492, %v2466, %v2500
  %v2509 = vsel %vm2493, %v2471, %v2501
  %v2510 = vsel %vm2494, %v2476, %v2502
  %v2511 = vsel %vm2495, %v2481, %v2503
  %v2512 = vsel %vm2496, %v2486, %v2504
  %s2513 = scalar_lea.vmem %s3, 256
  %v2514 = vld [vmem:[%s2513] sm:$0xff]
  %v2515 = vld [vmem:[%s2513 + $0x8] sm:$0xff]
  %v2516 = vld [vmem:[%s2513 + $0x10] sm:$0xff]
  %v2517 = vld [vmem:[%s2513 + $0x18] sm:$0xff]
  %v2518 = vld [vmem:[%s2513 + $0x20] sm:$0xff]
  %v2519 = vld [vmem:[%s2513 + $0x28] sm:$0xff]
  %v2520 = vld [vmem:[%s2513 + $0x30] sm:$0xff]
  %v2521 = vld [vmem:[%s2513 + $0x38] sm:$0xff]
  %s2522 = scalar_lea.vmem %s4, 256
  %v2523 = vld [vmem:[%s2522] sm:$0xff]
  %v2524 = vld [vmem:[%s2522 + $0x8] sm:$0xff]
  %v2525 = vld [vmem:[%s2522 + $0x10] sm:$0xff]
  %v2526 = vld [vmem:[%s2522 + $0x18] sm:$0xff]
  %v2527 = vld [vmem:[%s2522 + $0x20] sm:$0xff]
  %v2528 = vld [vmem:[%s2522 + $0x28] sm:$0xff]
  %v2529 = vld [vmem:[%s2522 + $0x30] sm:$0xff]
  %v2530 = vld [vmem:[%s2522 + $0x38] sm:$0xff]
  %2532 = vset.pattern.permute.xlu0 0
  %2533 = vperm.xlu0 %2532, %v2523
  %v2534 = vpop.permute.xlu0 %2533
  %2537 = vset.pattern.permute.xlu0 0
  %2538 = vperm.xlu0 %2537, %v2524
  %v2539 = vpop.permute.xlu0 %2538
  %2542 = vset.pattern.permute.xlu0 0
  %2543 = vperm.xlu0 %2542, %v2525
  %v2544 = vpop.permute.xlu0 %2543
  %2547 = vset.pattern.permute.xlu0 0
  %2548 = vperm.xlu0 %2547, %v2526
  %v2549 = vpop.permute.xlu0 %2548
  %2552 = vset.pattern.permute.xlu0 0
  %2553 = vperm.xlu0 %2552, %v2527
  %v2554 = vpop.permute.xlu0 %2553
  %2557 = vset.pattern.permute.xlu0 0
  %2558 = vperm.xlu0 %2557, %v2528
  %v2559 = vpop.permute.xlu0 %2558
  %2562 = vset.pattern.permute.xlu0 0
  %2563 = vperm.xlu0 %2562, %v2529
  %v2564 = vpop.permute.xlu0 %2563
  %2567 = vset.pattern.permute.xlu0 0
  %2568 = vperm.xlu0 %2567, %v2530
  %v2569 = vpop.permute.xlu0 %2568
  %v2572 = vsel %vm296, %v2514, 0
  %v2575 = vsel %vm296, %v2515, 0
  %v2578 = vsel %vm296, %v2516, 0
  %v2581 = vsel %vm296, %v2517, 0
  %v2584 = vsel %vm296, %v2518, 0
  %v2587 = vsel %vm296, %v2519, 0
  %v2590 = vsel %vm296, %v2520, 0
  %v2593 = vsel %vm296, %v2521, 0
  %2595 = vmatprep.subr.mxu0 0.0
  %2596 = vmatpush1.msra.mxu0 0.0
  %2597 = vmatprep.subr.mxu0 0.0
  %2598 = vmatpush1.msra.mxu0 0.0
  %2599 = vmatprep.subr.mxu0 0.0
  %2600 = vmatpush1.msra.mxu0 0.0
  %2601 = vmatprep.subr.mxu0 0.0
  %2602 = vmatpush1.msra.mxu0 0.0
  %2603 = vmatprep.subr.mxu0 0.0
  %2604 = vmatpush1.msra.mxu0 0.0
  %2605 = vmatprep.subr.mxu0 0.0
  %2606 = vmatpush1.msra.mxu0 0.0
  %2607 = vmatprep.subr.mxu0 0.0
  %2608 = vmatpush1.msra.mxu0 0.0
  %2609 = vmatprep.subr.mxu0 0.0
  %2610 = vmatpush1.msra.mxu0 0.0
  %2611 = vmatprep.subr.mxu0 0.0
  %2612 = vmatpush1.msra.mxu0 %v2512
  %2613 = vmatprep.subr.mxu0 0.0
  %2614 = vmatpush1.msra.mxu0 %v2511
  %2615 = vmatprep.subr.mxu0 0.0
  %2616 = vmatpush1.msra.mxu0 %v2510
  %2617 = vmatprep.subr.mxu0 0.0
  %2618 = vmatpush1.msra.mxu0 %v2509
  %2619 = vmatprep.subr.mxu0 0.0
  %2620 = vmatpush1.msra.mxu0 %v2508
  %2621 = vmatprep.subr.mxu0 0.0
  %2622 = vmatpush1.msra.mxu0 %v2507
  %2623 = vmatprep.subr.mxu0 0.0
  %2624 = vmatpush1.msra.mxu0 %v2506
  %2625 = vmatprep.subr.mxu0 0.0
  %2626 = vmatpush1.msra.mxu0 %v2505
  %2627 = vmatprep.subr.mxu0 0.0
  %2628 = vmatpush2.msra.mxu0 0.0
  %2629 = vmatprep.subr.mxu0 0.0
  %2630 = vmatpush2.msra.mxu0 0.0
  %2631 = vmatprep.subr.mxu0 0.0
  %2632 = vmatpush2.msra.mxu0 0.0
  %2633 = vmatprep.subr.mxu0 0.0
  %2634 = vmatpush2.msra.mxu0 0.0
  %2635 = vmatprep.subr.mxu0 0.0
  %2636 = vmatpush2.msra.mxu0 0.0
  %2637 = vmatprep.subr.mxu0 0.0
  %2638 = vmatpush2.msra.mxu0 0.0
  %2639 = vmatprep.subr.mxu0 0.0
  %2640 = vmatpush2.msra.mxu0 0.0
  %2641 = vmatprep.subr.mxu0 0.0
  %2642 = vmatpush2.msra.mxu0 0.0
  %2643 = vmatprep.subr.mxu0 0.0
  %2644 = vmatpush2.msra.mxu0 0.0
  %2645 = vmatprep.subr.mxu0 0.0
  %2646 = vmatpush2.msra.mxu0 0.0
  %2647 = vmatprep.subr.mxu0 0.0
  %2648 = vmatpush2.msra.mxu0 0.0
  %2649 = vmatprep.subr.mxu0 0.0
  %2650 = vmatpush2.msra.mxu0 0.0
  %2651 = vmatprep.subr.mxu0 0.0
  %2652 = vmatpush2.msra.mxu0 0.0
  %2653 = vmatprep.subr.mxu0 0.0
  %2654 = vmatpush2.msra.mxu0 0.0
  %2655 = vmatprep.subr.mxu0 0.0
  %2656 = vmatpush2.msra.mxu0 0.0
  %2657 = vmatprep.subr.mxu0 0.0
  %2658 = vmatpush2.msra.mxu0 0.0
  %2659 = vmatprep.mubr.f32.mxu0 0.0
  %2660 = vmatmul.mubr.f32.gmra.mxu0 %v2572
  %v2661 = vpop.f32.mrf.mxu0
  %v2662 = vadd.f32 %v2534, %v2661
  %v2663 = vpop.f32.mrf.mxu0
  %2664 = vmatprep.mubr.f32.mxu0 0.0
  %2665 = vmatmul.mubr.f32.gmra.mxu0 %v2575
  %v2666 = vpop.f32.mrf.mxu0
  %v2667 = vadd.f32 %v2539, %v2666
  %v2668 = vpop.f32.mrf.mxu0
  %2669 = vmatprep.mubr.f32.mxu0 0.0
  %2670 = vmatmul.mubr.f32.gmra.mxu0 %v2578
  %v2671 = vpop.f32.mrf.mxu0
  %v2672 = vadd.f32 %v2544, %v2671
  %v2673 = vpop.f32.mrf.mxu0
  %2674 = vmatprep.mubr.f32.mxu0 0.0
  %2675 = vmatmul.mubr.f32.gmra.mxu0 %v2581
  %v2676 = vpop.f32.mrf.mxu0
  %v2677 = vadd.f32 %v2549, %v2676
  %v2678 = vpop.f32.mrf.mxu0
  %2679 = vmatprep.mubr.f32.mxu0 0.0
  %2680 = vmatmul.mubr.f32.gmra.mxu0 %v2584
  %v2681 = vpop.f32.mrf.mxu0
  %v2682 = vadd.f32 %v2554, %v2681
  %v2683 = vpop.f32.mrf.mxu0
  %2684 = vmatprep.mubr.f32.mxu0 0.0
  %2685 = vmatmul.mubr.f32.gmra.mxu0 %v2587
  %v2686 = vpop.f32.mrf.mxu0
  %v2687 = vadd.f32 %v2559, %v2686
  %v2688 = vpop.f32.mrf.mxu0
  %2689 = vmatprep.mubr.f32.mxu0 0.0
  %2690 = vmatmul.mubr.f32.gmra.mxu0 %v2590
  %v2691 = vpop.f32.mrf.mxu0
  %v2692 = vadd.f32 %v2564, %v2691
  %v2693 = vpop.f32.mrf.mxu0
  %2694 = vmatprep.mubr.f32.mxu0 0.0
  %2695 = vmatmul.mubr.f32.gmra.mxu0 %v2593
  %v2696 = vpop.f32.mrf.mxu0
  %v2697 = vadd.f32 %v2569, %v2696
  %v2698 = vpop.f32.mrf.mxu0
  %2699 = vdwg.mxu0
  %vm2700 = vcmp.gt.f32.partialorder %v2662, 0.0
  %vm2701 = vcmp.gt.f32.partialorder %v2667, 0.0
  %vm2702 = vcmp.gt.f32.partialorder %v2672, 0.0
  %vm2703 = vcmp.gt.f32.partialorder %v2677, 0.0
  %vm2704 = vcmp.gt.f32.partialorder %v2682, 0.0
  %vm2705 = vcmp.gt.f32.partialorder %v2687, 0.0
  %vm2706 = vcmp.gt.f32.partialorder %v2692, 0.0
  %vm2707 = vcmp.gt.f32.partialorder %v2697, 0.0
  %v2708 = vmul.f32 %v2662, 0.01
  %v2709 = vmul.f32 %v2667, 0.01
  %v2710 = vmul.f32 %v2672, 0.01
  %v2711 = vmul.f32 %v2677, 0.01
  %v2712 = vmul.f32 %v2682, 0.01
  %v2713 = vmul.f32 %v2687, 0.01
  %v2714 = vmul.f32 %v2692, 0.01
  %v2715 = vmul.f32 %v2697, 0.01
  %v2716 = vsel %vm2700, %v2662, %v2708
  %v2717 = vsel %vm2701, %v2667, %v2709
  %v2718 = vsel %vm2702, %v2672, %v2710
  %v2719 = vsel %vm2703, %v2677, %v2711
  %v2720 = vsel %vm2704, %v2682, %v2712
  %v2721 = vsel %vm2705, %v2687, %v2713
  %v2722 = vsel %vm2706, %v2692, %v2714
  %v2723 = vsel %vm2707, %v2697, %v2715
  %s2724 = scalar_lea.vmem %s5, 128
  %v2725 = vld [vmem:[%s2724] sm:$0xff]
  %v2726 = vld [vmem:[%s2724 + $0x8] sm:$0xff]
  %v2727 = vld [vmem:[%s2724 + $0x10] sm:$0xff]
  %v2728 = vld [vmem:[%s2724 + $0x18] sm:$0xff]
  %s2729 = scalar_lea.vmem %s6, 128
  %v2730 = vld [vmem:[%s2729] sm:$0xff]
  %v2731 = vld [vmem:[%s2729 + $0x8] sm:$0xff]
  %v2732 = vld [vmem:[%s2729 + $0x10] sm:$0xff]
  %v2733 = vld [vmem:[%s2729 + $0x18] sm:$0xff]
  %2735 = vset.pattern.permute.xlu0 0
  %2736 = vperm.xlu0 %2735, %v2730
  %v2737 = vpop.permute.xlu0 %2736
  %2740 = vset.pattern.permute.xlu0 0
  %2741 = vperm.xlu0 %2740, %v2731
  %v2742 = vpop.permute.xlu0 %2741
  %2745 = vset.pattern.permute.xlu0 0
  %2746 = vperm.xlu0 %2745, %v2732
  %v2747 = vpop.permute.xlu0 %2746
  %2750 = vset.pattern.permute.xlu0 0
  %2751 = vperm.xlu0 %2750, %v2733
  %v2752 = vpop.permute.xlu0 %2751
  %v2755 = vsel %vm296, %v2725, 0
  %v2758 = vsel %vm296, %v2726, 0
  %v2761 = vsel %vm296, %v2727, 0
  %v2764 = vsel %vm296, %v2728, 0
  %2766 = vmatprep.subr.mxu0 0.0
  %2767 = vmatpush1.msra.mxu0 0.0
  %2768 = vmatprep.subr.mxu0 0.0
  %2769 = vmatpush1.msra.mxu0 0.0
  %2770 = vmatprep.subr.mxu0 0.0
  %2771 = vmatpush1.msra.mxu0 0.0
  %2772 = vmatprep.subr.mxu0 0.0
  %2773 = vmatpush1.msra.mxu0 0.0
  %2774 = vmatprep.subr.mxu0 0.0
  %2775 = vmatpush1.msra.mxu0 0.0
  %2776 = vmatprep.subr.mxu0 0.0
  %2777 = vmatpush1.msra.mxu0 0.0
  %2778 = vmatprep.subr.mxu0 0.0
  %2779 = vmatpush1.msra.mxu0 0.0
  %2780 = vmatprep.subr.mxu0 0.0
  %2781 = vmatpush1.msra.mxu0 0.0
  %2782 = vmatprep.subr.mxu0 0.0
  %2783 = vmatpush1.msra.mxu0 %v2723
  %2784 = vmatprep.subr.mxu0 0.0
  %2785 = vmatpush1.msra.mxu0 %v2722
  %2786 = vmatprep.subr.mxu0 0.0
  %2787 = vmatpush1.msra.mxu0 %v2721
  %2788 = vmatprep.subr.mxu0 0.0
  %2789 = vmatpush1.msra.mxu0 %v2720
  %2790 = vmatprep.subr.mxu0 0.0
  %2791 = vmatpush1.msra.mxu0 %v2719
  %2792 = vmatprep.subr.mxu0 0.0
  %2793 = vmatpush1.msra.mxu0 %v2718
  %2794 = vmatprep.subr.mxu0 0.0
  %2795 = vmatpush1.msra.mxu0 %v2717
  %2796 = vmatprep.subr.mxu0 0.0
  %2797 = vmatpush1.msra.mxu0 %v2716
  %2798 = vmatprep.subr.mxu0 0.0
  %2799 = vmatpush2.msra.mxu0 0.0
  %2800 = vmatprep.subr.mxu0 0.0
  %2801 = vmatpush2.msra.mxu0 0.0
  %2802 = vmatprep.subr.mxu0 0.0
  %2803 = vmatpush2.msra.mxu0 0.0
  %2804 = vmatprep.subr.mxu0 0.0
  %2805 = vmatpush2.msra.mxu0 0.0
  %2806 = vmatprep.subr.mxu0 0.0
  %2807 = vmatpush2.msra.mxu0 0.0
  %2808 = vmatprep.subr.mxu0 0.0
  %2809 = vmatpush2.msra.mxu0 0.0
  %2810 = vmatprep.subr.mxu0 0.0
  %2811 = vmatpush2.msra.mxu0 0.0
  %2812 = vmatprep.subr.mxu0 0.0
  %2813 = vmatpush2.msra.mxu0 0.0
  %2814 = vmatprep.subr.mxu0 0.0
  %2815 = vmatpush2.msra.mxu0 0.0
  %2816 = vmatprep.subr.mxu0 0.0
  %2817 = vmatpush2.msra.mxu0 0.0
  %2818 = vmatprep.subr.mxu0 0.0
  %2819 = vmatpush2.msra.mxu0 0.0
  %2820 = vmatprep.subr.mxu0 0.0
  %2821 = vmatpush2.msra.mxu0 0.0
  %2822 = vmatprep.subr.mxu0 0.0
  %2823 = vmatpush2.msra.mxu0 0.0
  %2824 = vmatprep.subr.mxu0 0.0
  %2825 = vmatpush2.msra.mxu0 0.0
  %2826 = vmatprep.subr.mxu0 0.0
  %2827 = vmatpush2.msra.mxu0 0.0
  %2828 = vmatprep.subr.mxu0 0.0
  %2829 = vmatpush2.msra.mxu0 0.0
  %2830 = vmatprep.mubr.f32.mxu0 0.0
  %2831 = vmatmul.mubr.f32.gmra.mxu0 %v2755
  %v2832 = vpop.f32.mrf.mxu0
  %v2833 = vadd.f32 %v2737, %v2832
  %v2834 = vpop.f32.mrf.mxu0
  %2835 = vmatprep.mubr.f32.mxu0 0.0
  %2836 = vmatmul.mubr.f32.gmra.mxu0 %v2758
  %v2837 = vpop.f32.mrf.mxu0
  %v2838 = vadd.f32 %v2742, %v2837
  %v2839 = vpop.f32.mrf.mxu0
  %2840 = vmatprep.mubr.f32.mxu0 0.0
  %2841 = vmatmul.mubr.f32.gmra.mxu0 %v2761
  %v2842 = vpop.f32.mrf.mxu0
  %v2843 = vadd.f32 %v2747, %v2842
  %v2844 = vpop.f32.mrf.mxu0
  %2845 = vmatprep.mubr.f32.mxu0 0.0
  %2846 = vmatmul.mubr.f32.gmra.mxu0 %v2764
  %v2847 = vpop.f32.mrf.mxu0
  %v2848 = vadd.f32 %v2752, %v2847
  %v2849 = vpop.f32.mrf.mxu0
  %2850 = vdwg.mxu0
  %v2851 = vmax.f32 %v2843, -5.0
  %v2852 = vmax.f32 %v2848, -5.0
  %v2853 = vmin.f32 %v2851, 5.0
  %v2854 = vmin.f32 %v2852, 5.0
  %v2855 = vmul.f32 %v2853, 1.442695
  %v2856 = vpow.pop %v2855
  %v2857 = vmul.f32 %v2854, 1.442695
  %v2858 = vpow.pop %v2857
  %v2859 = vmul.f32 %v2856, %v2292
  %v2860 = vmul.f32 %v2858, %v2293
  %v2861 = vadd.f32 %v2859, %v2833
  %v2862 = vadd.f32 %v2860, %v2838
  %v2863 = vadd.f32 %v2853, %v2854
  %v2864 = vrot.slane %v2863, 4
  %v2865 = vadd.f32 %v2863, %v2864
  %v2866 = vrot.slane %v2865, 2
  %v2867 = vadd.f32 %v2865, %v2866
  %v2868 = vrot.slane %v2867, 1
  %v2869 = vadd.f32 %v2867, %v2868
  %v2870 = vadd.f32 %v2301, %v2869
  %s2871 = scalar_lea.vmem %s1, 320
  %v2872 = vld [vmem:[%s2871] sm:$0xff]
  %v2873 = vld [vmem:[%s2871 + $0x8] sm:$0xff]
  %v2874 = vld [vmem:[%s2871 + $0x10] sm:$0xff]
  %v2875 = vld [vmem:[%s2871 + $0x18] sm:$0xff]
  %v2876 = vld [vmem:[%s2871 + $0x20] sm:$0xff]
  %v2877 = vld [vmem:[%s2871 + $0x28] sm:$0xff]
  %v2878 = vld [vmem:[%s2871 + $0x30] sm:$0xff]
  %v2879 = vld [vmem:[%s2871 + $0x38] sm:$0xff]
  %s2880 = scalar_lea.vmem %s2, 320
  %v2881 = vld [vmem:[%s2880] sm:$0xff]
  %v2882 = vld [vmem:[%s2880 + $0x8] sm:$0xff]
  %v2883 = vld [vmem:[%s2880 + $0x10] sm:$0xff]
  %v2884 = vld [vmem:[%s2880 + $0x18] sm:$0xff]
  %v2885 = vld [vmem:[%s2880 + $0x20] sm:$0xff]
  %v2886 = vld [vmem:[%s2880 + $0x28] sm:$0xff]
  %v2887 = vld [vmem:[%s2880 + $0x30] sm:$0xff]
  %v2888 = vld [vmem:[%s2880 + $0x38] sm:$0xff]
  %2890 = vset.pattern.permute.xlu0 0
  %2891 = vperm.xlu0 %2890, %v2881
  %v2892 = vpop.permute.xlu0 %2891
  %2895 = vset.pattern.permute.xlu0 0
  %2896 = vperm.xlu0 %2895, %v2882
  %v2897 = vpop.permute.xlu0 %2896
  %2900 = vset.pattern.permute.xlu0 0
  %2901 = vperm.xlu0 %2900, %v2883
  %v2902 = vpop.permute.xlu0 %2901
  %2905 = vset.pattern.permute.xlu0 0
  %2906 = vperm.xlu0 %2905, %v2884
  %v2907 = vpop.permute.xlu0 %2906
  %2910 = vset.pattern.permute.xlu0 0
  %2911 = vperm.xlu0 %2910, %v2885
  %v2912 = vpop.permute.xlu0 %2911
  %2915 = vset.pattern.permute.xlu0 0
  %2916 = vperm.xlu0 %2915, %v2886
  %v2917 = vpop.permute.xlu0 %2916
  %2920 = vset.pattern.permute.xlu0 0
  %2921 = vperm.xlu0 %2920, %v2887
  %v2922 = vpop.permute.xlu0 %2921
  %2925 = vset.pattern.permute.xlu0 0
  %2926 = vperm.xlu0 %2925, %v2888
  %v2927 = vpop.permute.xlu0 %2926
  %v2930 = vsel %vm86, %v2872, 0
  %v2933 = vsel %vm86, %v2873, 0
  %v2936 = vsel %vm86, %v2874, 0
  %v2939 = vsel %vm86, %v2875, 0
  %v2942 = vsel %vm86, %v2876, 0
  %v2945 = vsel %vm86, %v2877, 0
  %v2948 = vsel %vm86, %v2878, 0
  %v2951 = vsel %vm86, %v2879, 0
  %2953 = vmatprep.subr.mxu0 0.0
  %2954 = vmatpush1.msra.mxu0 0.0
  %2955 = vmatprep.subr.mxu0 0.0
  %2956 = vmatpush1.msra.mxu0 0.0
  %2957 = vmatprep.subr.mxu0 0.0
  %2958 = vmatpush1.msra.mxu0 0.0
  %2959 = vmatprep.subr.mxu0 0.0
  %2960 = vmatpush1.msra.mxu0 0.0
  %2961 = vmatprep.subr.mxu0 0.0
  %2962 = vmatpush1.msra.mxu0 0.0
  %2963 = vmatprep.subr.mxu0 0.0
  %2964 = vmatpush1.msra.mxu0 0.0
  %2965 = vmatprep.subr.mxu0 0.0
  %2966 = vmatpush1.msra.mxu0 0.0
  %2967 = vmatprep.subr.mxu0 0.0
  %2968 = vmatpush1.msra.mxu0 0.0
  %2969 = vmatprep.subr.mxu0 0.0
  %2970 = vmatpush1.msra.mxu0 0.0
  %2971 = vmatprep.subr.mxu0 0.0
  %2972 = vmatpush1.msra.mxu0 0.0
  %2973 = vmatprep.subr.mxu0 0.0
  %2974 = vmatpush1.msra.mxu0 0.0
  %2975 = vmatprep.subr.mxu0 0.0
  %2976 = vmatpush1.msra.mxu0 0.0
  %2977 = vmatprep.subr.mxu0 0.0
  %2978 = vmatpush1.msra.mxu0 0.0
  %2979 = vmatprep.subr.mxu0 0.0
  %2980 = vmatpush1.msra.mxu0 0.0
  %2981 = vmatprep.subr.mxu0 0.0
  %2982 = vmatpush1.msra.mxu0 %v2862
  %2983 = vmatprep.subr.mxu0 0.0
  %2984 = vmatpush1.msra.mxu0 %v2861
  %2985 = vmatprep.subr.mxu0 0.0
  %2986 = vmatpush2.msra.mxu0 0.0
  %2987 = vmatprep.subr.mxu0 0.0
  %2988 = vmatpush2.msra.mxu0 0.0
  %2989 = vmatprep.subr.mxu0 0.0
  %2990 = vmatpush2.msra.mxu0 0.0
  %2991 = vmatprep.subr.mxu0 0.0
  %2992 = vmatpush2.msra.mxu0 0.0
  %2993 = vmatprep.subr.mxu0 0.0
  %2994 = vmatpush2.msra.mxu0 0.0
  %2995 = vmatprep.subr.mxu0 0.0
  %2996 = vmatpush2.msra.mxu0 0.0
  %2997 = vmatprep.subr.mxu0 0.0
  %2998 = vmatpush2.msra.mxu0 0.0
  %2999 = vmatprep.subr.mxu0 0.0
  %3000 = vmatpush2.msra.mxu0 0.0
  %3001 = vmatprep.subr.mxu0 0.0
  %3002 = vmatpush2.msra.mxu0 0.0
  %3003 = vmatprep.subr.mxu0 0.0
  %3004 = vmatpush2.msra.mxu0 0.0
  %3005 = vmatprep.subr.mxu0 0.0
  %3006 = vmatpush2.msra.mxu0 0.0
  %3007 = vmatprep.subr.mxu0 0.0
  %3008 = vmatpush2.msra.mxu0 0.0
  %3009 = vmatprep.subr.mxu0 0.0
  %3010 = vmatpush2.msra.mxu0 0.0
  %3011 = vmatprep.subr.mxu0 0.0
  %3012 = vmatpush2.msra.mxu0 0.0
  %3013 = vmatprep.subr.mxu0 0.0
  %3014 = vmatpush2.msra.mxu0 0.0
  %3015 = vmatprep.subr.mxu0 0.0
  %3016 = vmatpush2.msra.mxu0 0.0
  %3017 = vmatprep.mubr.f32.mxu0 0.0
  %3018 = vmatmul.mubr.f32.gmra.mxu0 %v2930
  %v3019 = vpop.f32.mrf.mxu0
  %v3020 = vadd.f32 %v2892, %v3019
  %v3021 = vpop.f32.mrf.mxu0
  %3022 = vmatprep.mubr.f32.mxu0 0.0
  %3023 = vmatmul.mubr.f32.gmra.mxu0 %v2933
  %v3024 = vpop.f32.mrf.mxu0
  %v3025 = vadd.f32 %v2897, %v3024
  %v3026 = vpop.f32.mrf.mxu0
  %3027 = vmatprep.mubr.f32.mxu0 0.0
  %3028 = vmatmul.mubr.f32.gmra.mxu0 %v2936
  %v3029 = vpop.f32.mrf.mxu0
  %v3030 = vadd.f32 %v2902, %v3029
  %v3031 = vpop.f32.mrf.mxu0
  %3032 = vmatprep.mubr.f32.mxu0 0.0
  %3033 = vmatmul.mubr.f32.gmra.mxu0 %v2939
  %v3034 = vpop.f32.mrf.mxu0
  %v3035 = vadd.f32 %v2907, %v3034
  %v3036 = vpop.f32.mrf.mxu0
  %3037 = vmatprep.mubr.f32.mxu0 0.0
  %3038 = vmatmul.mubr.f32.gmra.mxu0 %v2942
  %v3039 = vpop.f32.mrf.mxu0
  %v3040 = vadd.f32 %v2912, %v3039
  %v3041 = vpop.f32.mrf.mxu0
  %3042 = vmatprep.mubr.f32.mxu0 0.0
  %3043 = vmatmul.mubr.f32.gmra.mxu0 %v2945
  %v3044 = vpop.f32.mrf.mxu0
  %v3045 = vadd.f32 %v2917, %v3044
  %v3046 = vpop.f32.mrf.mxu0
  %3047 = vmatprep.mubr.f32.mxu0 0.0
  %3048 = vmatmul.mubr.f32.gmra.mxu0 %v2948
  %v3049 = vpop.f32.mrf.mxu0
  %v3050 = vadd.f32 %v2922, %v3049
  %v3051 = vpop.f32.mrf.mxu0
  %3052 = vmatprep.mubr.f32.mxu0 0.0
  %3053 = vmatmul.mubr.f32.gmra.mxu0 %v2951
  %v3054 = vpop.f32.mrf.mxu0
  %v3055 = vadd.f32 %v2927, %v3054
  %v3056 = vpop.f32.mrf.mxu0
  %3057 = vdwg.mxu0
  %vm3058 = vcmp.gt.f32.partialorder %v3020, 0.0
  %vm3059 = vcmp.gt.f32.partialorder %v3025, 0.0
  %vm3060 = vcmp.gt.f32.partialorder %v3030, 0.0
  %vm3061 = vcmp.gt.f32.partialorder %v3035, 0.0
  %vm3062 = vcmp.gt.f32.partialorder %v3040, 0.0
  %vm3063 = vcmp.gt.f32.partialorder %v3045, 0.0
  %vm3064 = vcmp.gt.f32.partialorder %v3050, 0.0
  %vm3065 = vcmp.gt.f32.partialorder %v3055, 0.0
  %v3066 = vmul.f32 %v3020, 0.01
  %v3067 = vmul.f32 %v3025, 0.01
  %v3068 = vmul.f32 %v3030, 0.01
  %v3069 = vmul.f32 %v3035, 0.01
  %v3070 = vmul.f32 %v3040, 0.01
  %v3071 = vmul.f32 %v3045, 0.01
  %v3072 = vmul.f32 %v3050, 0.01
  %v3073 = vmul.f32 %v3055, 0.01
  %v3074 = vsel %vm3058, %v3020, %v3066
  %v3075 = vsel %vm3059, %v3025, %v3067
  %v3076 = vsel %vm3060, %v3030, %v3068
  %v3077 = vsel %vm3061, %v3035, %v3069
  %v3078 = vsel %vm3062, %v3040, %v3070
  %v3079 = vsel %vm3063, %v3045, %v3071
  %v3080 = vsel %vm3064, %v3050, %v3072
  %v3081 = vsel %vm3065, %v3055, %v3073
  %s3082 = scalar_lea.vmem %s3, 320
  %v3083 = vld [vmem:[%s3082] sm:$0xff]
  %v3084 = vld [vmem:[%s3082 + $0x8] sm:$0xff]
  %v3085 = vld [vmem:[%s3082 + $0x10] sm:$0xff]
  %v3086 = vld [vmem:[%s3082 + $0x18] sm:$0xff]
  %v3087 = vld [vmem:[%s3082 + $0x20] sm:$0xff]
  %v3088 = vld [vmem:[%s3082 + $0x28] sm:$0xff]
  %v3089 = vld [vmem:[%s3082 + $0x30] sm:$0xff]
  %v3090 = vld [vmem:[%s3082 + $0x38] sm:$0xff]
  %s3091 = scalar_lea.vmem %s4, 320
  %v3092 = vld [vmem:[%s3091] sm:$0xff]
  %v3093 = vld [vmem:[%s3091 + $0x8] sm:$0xff]
  %v3094 = vld [vmem:[%s3091 + $0x10] sm:$0xff]
  %v3095 = vld [vmem:[%s3091 + $0x18] sm:$0xff]
  %v3096 = vld [vmem:[%s3091 + $0x20] sm:$0xff]
  %v3097 = vld [vmem:[%s3091 + $0x28] sm:$0xff]
  %v3098 = vld [vmem:[%s3091 + $0x30] sm:$0xff]
  %v3099 = vld [vmem:[%s3091 + $0x38] sm:$0xff]
  %3101 = vset.pattern.permute.xlu0 0
  %3102 = vperm.xlu0 %3101, %v3092
  %v3103 = vpop.permute.xlu0 %3102
  %3106 = vset.pattern.permute.xlu0 0
  %3107 = vperm.xlu0 %3106, %v3093
  %v3108 = vpop.permute.xlu0 %3107
  %3111 = vset.pattern.permute.xlu0 0
  %3112 = vperm.xlu0 %3111, %v3094
  %v3113 = vpop.permute.xlu0 %3112
  %3116 = vset.pattern.permute.xlu0 0
  %3117 = vperm.xlu0 %3116, %v3095
  %v3118 = vpop.permute.xlu0 %3117
  %3121 = vset.pattern.permute.xlu0 0
  %3122 = vperm.xlu0 %3121, %v3096
  %v3123 = vpop.permute.xlu0 %3122
  %3126 = vset.pattern.permute.xlu0 0
  %3127 = vperm.xlu0 %3126, %v3097
  %v3128 = vpop.permute.xlu0 %3127
  %3131 = vset.pattern.permute.xlu0 0
  %3132 = vperm.xlu0 %3131, %v3098
  %v3133 = vpop.permute.xlu0 %3132
  %3136 = vset.pattern.permute.xlu0 0
  %3137 = vperm.xlu0 %3136, %v3099
  %v3138 = vpop.permute.xlu0 %3137
  %v3141 = vsel %vm296, %v3083, 0
  %v3144 = vsel %vm296, %v3084, 0
  %v3147 = vsel %vm296, %v3085, 0
  %v3150 = vsel %vm296, %v3086, 0
  %v3153 = vsel %vm296, %v3087, 0
  %v3156 = vsel %vm296, %v3088, 0
  %v3159 = vsel %vm296, %v3089, 0
  %v3162 = vsel %vm296, %v3090, 0
  %3164 = vmatprep.subr.mxu0 0.0
  %3165 = vmatpush1.msra.mxu0 0.0
  %3166 = vmatprep.subr.mxu0 0.0
  %3167 = vmatpush1.msra.mxu0 0.0
  %3168 = vmatprep.subr.mxu0 0.0
  %3169 = vmatpush1.msra.mxu0 0.0
  %3170 = vmatprep.subr.mxu0 0.0
  %3171 = vmatpush1.msra.mxu0 0.0
  %3172 = vmatprep.subr.mxu0 0.0
  %3173 = vmatpush1.msra.mxu0 0.0
  %3174 = vmatprep.subr.mxu0 0.0
  %3175 = vmatpush1.msra.mxu0 0.0
  %3176 = vmatprep.subr.mxu0 0.0
  %3177 = vmatpush1.msra.mxu0 0.0
  %3178 = vmatprep.subr.mxu0 0.0
  %3179 = vmatpush1.msra.mxu0 0.0
  %3180 = vmatprep.subr.mxu0 0.0
  %3181 = vmatpush1.msra.mxu0 %v3081
  %3182 = vmatprep.subr.mxu0 0.0
  %3183 = vmatpush1.msra.mxu0 %v3080
  %3184 = vmatprep.subr.mxu0 0.0
  %3185 = vmatpush1.msra.mxu0 %v3079
  %3186 = vmatprep.subr.mxu0 0.0
  %3187 = vmatpush1.msra.mxu0 %v3078
  %3188 = vmatprep.subr.mxu0 0.0
  %3189 = vmatpush1.msra.mxu0 %v3077
  %3190 = vmatprep.subr.mxu0 0.0
  %3191 = vmatpush1.msra.mxu0 %v3076
  %3192 = vmatprep.subr.mxu0 0.0
  %3193 = vmatpush1.msra.mxu0 %v3075
  %3194 = vmatprep.subr.mxu0 0.0
  %3195 = vmatpush1.msra.mxu0 %v3074
  %3196 = vmatprep.subr.mxu0 0.0
  %3197 = vmatpush2.msra.mxu0 0.0
  %3198 = vmatprep.subr.mxu0 0.0
  %3199 = vmatpush2.msra.mxu0 0.0
  %3200 = vmatprep.subr.mxu0 0.0
  %3201 = vmatpush2.msra.mxu0 0.0
  %3202 = vmatprep.subr.mxu0 0.0
  %3203 = vmatpush2.msra.mxu0 0.0
  %3204 = vmatprep.subr.mxu0 0.0
  %3205 = vmatpush2.msra.mxu0 0.0
  %3206 = vmatprep.subr.mxu0 0.0
  %3207 = vmatpush2.msra.mxu0 0.0
  %3208 = vmatprep.subr.mxu0 0.0
  %3209 = vmatpush2.msra.mxu0 0.0
  %3210 = vmatprep.subr.mxu0 0.0
  %3211 = vmatpush2.msra.mxu0 0.0
  %3212 = vmatprep.subr.mxu0 0.0
  %3213 = vmatpush2.msra.mxu0 0.0
  %3214 = vmatprep.subr.mxu0 0.0
  %3215 = vmatpush2.msra.mxu0 0.0
  %3216 = vmatprep.subr.mxu0 0.0
  %3217 = vmatpush2.msra.mxu0 0.0
  %3218 = vmatprep.subr.mxu0 0.0
  %3219 = vmatpush2.msra.mxu0 0.0
  %3220 = vmatprep.subr.mxu0 0.0
  %3221 = vmatpush2.msra.mxu0 0.0
  %3222 = vmatprep.subr.mxu0 0.0
  %3223 = vmatpush2.msra.mxu0 0.0
  %3224 = vmatprep.subr.mxu0 0.0
  %3225 = vmatpush2.msra.mxu0 0.0
  %3226 = vmatprep.subr.mxu0 0.0
  %3227 = vmatpush2.msra.mxu0 0.0
  %3228 = vmatprep.mubr.f32.mxu0 0.0
  %3229 = vmatmul.mubr.f32.gmra.mxu0 %v3141
  %v3230 = vpop.f32.mrf.mxu0
  %v3231 = vadd.f32 %v3103, %v3230
  %v3232 = vpop.f32.mrf.mxu0
  %3233 = vmatprep.mubr.f32.mxu0 0.0
  %3234 = vmatmul.mubr.f32.gmra.mxu0 %v3144
  %v3235 = vpop.f32.mrf.mxu0
  %v3236 = vadd.f32 %v3108, %v3235
  %v3237 = vpop.f32.mrf.mxu0
  %3238 = vmatprep.mubr.f32.mxu0 0.0
  %3239 = vmatmul.mubr.f32.gmra.mxu0 %v3147
  %v3240 = vpop.f32.mrf.mxu0
  %v3241 = vadd.f32 %v3113, %v3240
  %v3242 = vpop.f32.mrf.mxu0
  %3243 = vmatprep.mubr.f32.mxu0 0.0
  %3244 = vmatmul.mubr.f32.gmra.mxu0 %v3150
  %v3245 = vpop.f32.mrf.mxu0
  %v3246 = vadd.f32 %v3118, %v3245
  %v3247 = vpop.f32.mrf.mxu0
  %3248 = vmatprep.mubr.f32.mxu0 0.0
  %3249 = vmatmul.mubr.f32.gmra.mxu0 %v3153
  %v3250 = vpop.f32.mrf.mxu0
  %v3251 = vadd.f32 %v3123, %v3250
  %v3252 = vpop.f32.mrf.mxu0
  %3253 = vmatprep.mubr.f32.mxu0 0.0
  %3254 = vmatmul.mubr.f32.gmra.mxu0 %v3156
  %v3255 = vpop.f32.mrf.mxu0
  %v3256 = vadd.f32 %v3128, %v3255
  %v3257 = vpop.f32.mrf.mxu0
  %3258 = vmatprep.mubr.f32.mxu0 0.0
  %3259 = vmatmul.mubr.f32.gmra.mxu0 %v3159
  %v3260 = vpop.f32.mrf.mxu0
  %v3261 = vadd.f32 %v3133, %v3260
  %v3262 = vpop.f32.mrf.mxu0
  %3263 = vmatprep.mubr.f32.mxu0 0.0
  %3264 = vmatmul.mubr.f32.gmra.mxu0 %v3162
  %v3265 = vpop.f32.mrf.mxu0
  %v3266 = vadd.f32 %v3138, %v3265
  %v3267 = vpop.f32.mrf.mxu0
  %3268 = vdwg.mxu0
  %vm3269 = vcmp.gt.f32.partialorder %v3231, 0.0
  %vm3270 = vcmp.gt.f32.partialorder %v3236, 0.0
  %vm3271 = vcmp.gt.f32.partialorder %v3241, 0.0
  %vm3272 = vcmp.gt.f32.partialorder %v3246, 0.0
  %vm3273 = vcmp.gt.f32.partialorder %v3251, 0.0
  %vm3274 = vcmp.gt.f32.partialorder %v3256, 0.0
  %vm3275 = vcmp.gt.f32.partialorder %v3261, 0.0
  %vm3276 = vcmp.gt.f32.partialorder %v3266, 0.0
  %v3277 = vmul.f32 %v3231, 0.01
  %v3278 = vmul.f32 %v3236, 0.01
  %v3279 = vmul.f32 %v3241, 0.01
  %v3280 = vmul.f32 %v3246, 0.01
  %v3281 = vmul.f32 %v3251, 0.01
  %v3282 = vmul.f32 %v3256, 0.01
  %v3283 = vmul.f32 %v3261, 0.01
  %v3284 = vmul.f32 %v3266, 0.01
  %v3285 = vsel %vm3269, %v3231, %v3277
  %v3286 = vsel %vm3270, %v3236, %v3278
  %v3287 = vsel %vm3271, %v3241, %v3279
  %v3288 = vsel %vm3272, %v3246, %v3280
  %v3289 = vsel %vm3273, %v3251, %v3281
  %v3290 = vsel %vm3274, %v3256, %v3282
  %v3291 = vsel %vm3275, %v3261, %v3283
  %v3292 = vsel %vm3276, %v3266, %v3284
  %s3293 = scalar_lea.vmem %s5, 160
  %v3294 = vld [vmem:[%s3293] sm:$0xff]
  %v3295 = vld [vmem:[%s3293 + $0x8] sm:$0xff]
  %v3296 = vld [vmem:[%s3293 + $0x10] sm:$0xff]
  %v3297 = vld [vmem:[%s3293 + $0x18] sm:$0xff]
  %s3298 = scalar_lea.vmem %s6, 160
  %v3299 = vld [vmem:[%s3298] sm:$0xff]
  %v3300 = vld [vmem:[%s3298 + $0x8] sm:$0xff]
  %v3301 = vld [vmem:[%s3298 + $0x10] sm:$0xff]
  %v3302 = vld [vmem:[%s3298 + $0x18] sm:$0xff]
  %3304 = vset.pattern.permute.xlu0 0
  %3305 = vperm.xlu0 %3304, %v3299
  %v3306 = vpop.permute.xlu0 %3305
  %3309 = vset.pattern.permute.xlu0 0
  %3310 = vperm.xlu0 %3309, %v3300
  %v3311 = vpop.permute.xlu0 %3310
  %3314 = vset.pattern.permute.xlu0 0
  %3315 = vperm.xlu0 %3314, %v3301
  %v3316 = vpop.permute.xlu0 %3315
  %3319 = vset.pattern.permute.xlu0 0
  %3320 = vperm.xlu0 %3319, %v3302
  %v3321 = vpop.permute.xlu0 %3320
  %v3324 = vsel %vm296, %v3294, 0
  %v3327 = vsel %vm296, %v3295, 0
  %v3330 = vsel %vm296, %v3296, 0
  %v3333 = vsel %vm296, %v3297, 0
  %3335 = vmatprep.subr.mxu0 0.0
  %3336 = vmatpush1.msra.mxu0 0.0
  %3337 = vmatprep.subr.mxu0 0.0
  %3338 = vmatpush1.msra.mxu0 0.0
  %3339 = vmatprep.subr.mxu0 0.0
  %3340 = vmatpush1.msra.mxu0 0.0
  %3341 = vmatprep.subr.mxu0 0.0
  %3342 = vmatpush1.msra.mxu0 0.0
  %3343 = vmatprep.subr.mxu0 0.0
  %3344 = vmatpush1.msra.mxu0 0.0
  %3345 = vmatprep.subr.mxu0 0.0
  %3346 = vmatpush1.msra.mxu0 0.0
  %3347 = vmatprep.subr.mxu0 0.0
  %3348 = vmatpush1.msra.mxu0 0.0
  %3349 = vmatprep.subr.mxu0 0.0
  %3350 = vmatpush1.msra.mxu0 0.0
  %3351 = vmatprep.subr.mxu0 0.0
  %3352 = vmatpush1.msra.mxu0 %v3292
  %3353 = vmatprep.subr.mxu0 0.0
  %3354 = vmatpush1.msra.mxu0 %v3291
  %3355 = vmatprep.subr.mxu0 0.0
  %3356 = vmatpush1.msra.mxu0 %v3290
  %3357 = vmatprep.subr.mxu0 0.0
  %3358 = vmatpush1.msra.mxu0 %v3289
  %3359 = vmatprep.subr.mxu0 0.0
  %3360 = vmatpush1.msra.mxu0 %v3288
  %3361 = vmatprep.subr.mxu0 0.0
  %3362 = vmatpush1.msra.mxu0 %v3287
  %3363 = vmatprep.subr.mxu0 0.0
  %3364 = vmatpush1.msra.mxu0 %v3286
  %3365 = vmatprep.subr.mxu0 0.0
  %3366 = vmatpush1.msra.mxu0 %v3285
  %3367 = vmatprep.subr.mxu0 0.0
  %3368 = vmatpush2.msra.mxu0 0.0
  %3369 = vmatprep.subr.mxu0 0.0
  %3370 = vmatpush2.msra.mxu0 0.0
  %3371 = vmatprep.subr.mxu0 0.0
  %3372 = vmatpush2.msra.mxu0 0.0
  %3373 = vmatprep.subr.mxu0 0.0
  %3374 = vmatpush2.msra.mxu0 0.0
  %3375 = vmatprep.subr.mxu0 0.0
  %3376 = vmatpush2.msra.mxu0 0.0
  %3377 = vmatprep.subr.mxu0 0.0
  %3378 = vmatpush2.msra.mxu0 0.0
  %3379 = vmatprep.subr.mxu0 0.0
  %3380 = vmatpush2.msra.mxu0 0.0
  %3381 = vmatprep.subr.mxu0 0.0
  %3382 = vmatpush2.msra.mxu0 0.0
  %3383 = vmatprep.subr.mxu0 0.0
  %3384 = vmatpush2.msra.mxu0 0.0
  %3385 = vmatprep.subr.mxu0 0.0
  %3386 = vmatpush2.msra.mxu0 0.0
  %3387 = vmatprep.subr.mxu0 0.0
  %3388 = vmatpush2.msra.mxu0 0.0
  %3389 = vmatprep.subr.mxu0 0.0
  %3390 = vmatpush2.msra.mxu0 0.0
  %3391 = vmatprep.subr.mxu0 0.0
  %3392 = vmatpush2.msra.mxu0 0.0
  %3393 = vmatprep.subr.mxu0 0.0
  %3394 = vmatpush2.msra.mxu0 0.0
  %3395 = vmatprep.subr.mxu0 0.0
  %3396 = vmatpush2.msra.mxu0 0.0
  %3397 = vmatprep.subr.mxu0 0.0
  %3398 = vmatpush2.msra.mxu0 0.0
  %3399 = vmatprep.mubr.f32.mxu0 0.0
  %3400 = vmatmul.mubr.f32.gmra.mxu0 %v3324
  %v3401 = vpop.f32.mrf.mxu0
  %v3402 = vadd.f32 %v3306, %v3401
  %v3403 = vpop.f32.mrf.mxu0
  %3404 = vmatprep.mubr.f32.mxu0 0.0
  %3405 = vmatmul.mubr.f32.gmra.mxu0 %v3327
  %v3406 = vpop.f32.mrf.mxu0
  %v3407 = vadd.f32 %v3311, %v3406
  %v3408 = vpop.f32.mrf.mxu0
  %3409 = vmatprep.mubr.f32.mxu0 0.0
  %3410 = vmatmul.mubr.f32.gmra.mxu0 %v3330
  %v3411 = vpop.f32.mrf.mxu0
  %v3412 = vadd.f32 %v3316, %v3411
  %v3413 = vpop.f32.mrf.mxu0
  %3414 = vmatprep.mubr.f32.mxu0 0.0
  %3415 = vmatmul.mubr.f32.gmra.mxu0 %v3333
  %v3416 = vpop.f32.mrf.mxu0
  %v3417 = vadd.f32 %v3321, %v3416
  %v3418 = vpop.f32.mrf.mxu0
  %3419 = vdwg.mxu0
  %v3420 = vmax.f32 %v3412, -5.0
  %v3421 = vmax.f32 %v3417, -5.0
  %v3422 = vmin.f32 %v3420, 5.0
  %v3423 = vmin.f32 %v3421, 5.0
  %v3424 = vmul.f32 %v3422, 1.442695
  %v3425 = vpow.pop %v3424
  %v3426 = vmul.f32 %v3423, 1.442695
  %v3427 = vpow.pop %v3426
  %v3428 = vmul.f32 %v3425, %v2861
  %v3429 = vmul.f32 %v3427, %v2862
  %v3430 = vadd.f32 %v3428, %v3402
  %v3431 = vadd.f32 %v3429, %v3407
  %v3432 = vadd.f32 %v3422, %v3423
  %v3433 = vrot.slane %v3432, 4
  %v3434 = vadd.f32 %v3432, %v3433
  %v3435 = vrot.slane %v3434, 2
  %v3436 = vadd.f32 %v3434, %v3435
  %v3437 = vrot.slane %v3436, 1
  %v3438 = vadd.f32 %v3436, %v3437
  %v3439 = vadd.f32 %v2870, %v3438
  %3440 = vst [vmem:[%s7] sm:$0xff] %v3430
  %3441 = vst [vmem:[%s7 + $0x8] sm:$0xff] %v3431
  %3442 = vst [vmem:[%s8] sm:$0x1] %v3439
  // Predicated region
  $region30: #{flow_iaf_f.1} parent=0 // pred_check
    _
  $region31: #{flow_iaf_f.1} parent=0 // pred_check_branch
    %3444 = sbr.rel (0) target = $region33
  $region32: #{flow_iaf_f.1} parent=0 // pred_region
    _
  $region33: #{flow_iaf_f.1} parent=0 // pred_fallthru
    _
  // Predicated region
  $region34: #{flow_iaf_f.1} parent=0 // pred_check
    _
  $region35: #{flow_iaf_f.1} parent=0 // pred_check_branch
    %3446 = sbr.rel (0) target = $region37
  $region36: #{flow_iaf_f.1} parent=0 // pred_region
    _
  $region37: #{flow_iaf_f.1} parent=0 // pred_fallthru
    _
  // Predicated region
  $region38: #{flow_iaf_f.1} parent=0 // pred_check
    _
  $region39: #{flow_iaf_f.1} parent=0 // pred_check_branch
    %3448 = sbr.rel (0) target = $region41
  $region40: #{flow_iaf_f.1} parent=0 // pred_region
    _
  $region41: #{flow_iaf_f.1} parent=0 // pred_fallthru
    _
  // Predicated region
  $region42: #{flow_iaf_f.1} parent=0 // pred_check
    _
  $region43: #{flow_iaf_f.1} parent=0 // pred_check_branch
    %3450 = sbr.rel (0) target = $region45
  $region44: #{flow_iaf_f.1} parent=0 // pred_region
    _
  $region45: #{flow_iaf_f.1} parent=0 // pred_fallthru
    _

</llo_original>
